<compile_context>
chip_gen: v7x
topology: tpu7x:2x2x1
jax: 0.10.0
libtpu: 0.0.40
codegen_flags: <defaults>
</compile_context>

<pallas_src>
import functools
import math

import jax
import jax.numpy as jnp
from jax import lax
from jax.experimental import pallas as pl
from jax.experimental.pallas import tpu as pltpu

_NN = (((1,), (0,)), ((), ()))  # plain A @ B: contract lhs last axis with rhs first axis


def _pick_q_tile(seq_len):
    """Largest query-row tile (multiple of 8) that divides seq_len, capped at 512."""
    for t in (512, 256, 128, 64, 32, 16, 8):
        if t <= seq_len and seq_len % t == 0:
            return t
    return seq_len  # full-extent block (satisfies the full-dim exception)


def _pick_vmem_limit():
    """Per-generation VMEM limit: leave headroom on v7x (64 MiB/TC), 64 MiB elsewhere."""
    try:
        cap = int(pltpu.get_tpu_info().vmem_capacity_bytes)
    except Exception:
        cap = 128 * 1024 * 1024
    if cap <= 0:
        cap = 128 * 1024 * 1024
    return max(32 * 1024 * 1024, min(64 * 1024 * 1024, cap - 16 * 1024 * 1024))


def _albert_attention_kernel(x_ref, wq_ref, bq_ref, wk_ref, bk_ref,
                             wv_ref, bv_ref, wo_ref, bo_ref,
                             ctx_ref, out_ref,
                             kt_scr, v_scr, ctx_scr,
                             *, num_heads, head_dim, tile_s, scale):
    i = pl.program_id(1)  # query-tile index (inner, "arbitrary")

    # ---- K/V projection: once per batch, cached bf16 in VMEM across all query tiles ----
    # K is stored pre-transposed & head-major so the per-tile QK^T is a pure NN matmul.
    @pl.when(i == 0)
    def _():
        x_all = x_ref[0]                                               # (S, H) bf16
        k = lax.dot_general(x_all, wk_ref[...], _NN,
                            preferred_element_type=jnp.float32) + bk_ref[...]
        v = lax.dot_general(x_all, wv_ref[...], _NN,
                            preferred_element_type=jnp.float32) + bv_ref[...]
        kt = jnp.transpose(k).astype(jnp.bfloat16)                     # (H, S): one transpose / batch
        v_bf = v.astype(jnp.bfloat16)
        for h in range(num_heads):                                     # once per batch, amortized
            lo = h * head_dim
            kt_scr[h] = kt[lo:lo + head_dim, :]                        # (head_dim, S)
            v_scr[h] = v_bf[:, lo:lo + head_dim]                       # (S, head_dim)

    # ---- Q projection for this query tile: one full-width NN GEMM, bf16 cast once ----
    q_start = pl.multiple_of(i * tile_s, tile_s)
    x_tile = x_ref[0, pl.ds(q_start, tile_s), :]                       # (tile_s, H) bf16
    q = lax.dot_general(x_tile, wq_ref[...], _NN,
                        preferred_element_type=jnp.float32) + bq_ref[...]
    q_bf = q.astype(jnp.bfloat16)                                      # (tile_s, H)

    # ---- per-head attention (full K/V of the sequence resident in VMEM) ----
    for h in range(num_heads):                                         # static unroll
        lo = h * head_dim
        q_h = q_bf[:, lo:lo + head_dim]                                # (tile_s, hd) bf16
        s = lax.dot_general(q_h, kt_scr[h], _NN,
                            preferred_element_type=jnp.float32) * scale  # (tile_s, S) lane-dense
        s = s - jnp.max(s, axis=-1, keepdims=True)
        p = jnp.exp(s)
        p = p * pl.reciprocal(jnp.sum(p, axis=-1, keepdims=True), approx=True)
        c_h = lax.dot_general(p.astype(jnp.bfloat16), v_scr[h], _NN,
                              preferred_element_type=jnp.float32)        # (tile_s, hd)
        ctx_scr[:, lo:lo + head_dim] = c_h                             # assemble context in VMEM

    ctx = ctx_scr[...]                                                 # (tile_s, H) f32
    ctx_ref[0] = ctx.astype(ctx_ref.dtype)                             # single lane-dense store
    # Kept f32 for parity with the torch module; could be emitted bf16 to halve writeback.

    # ---- AlbertSelfOutput.dense (dropout = identity in eval) ----
    out = lax.dot_general(ctx.astype(jnp.bfloat16), wo_ref[...], _NN,
                          preferred_element_type=jnp.float32) + bo_ref[...]
    out_ref[0] = out.astype(out_ref.dtype)


def albert_attention(hidden_states, params, *, num_heads):
    """hidden_states: [B, S, H]. Returns (attention_output, context_layer), both [B, S, H] f32."""
    B, S, H = hidden_states.shape
    assert H % num_heads == 0, "hidden_size must be a multiple of num_attention_heads"
    head_dim = H // num_heads
    tile_s = _pick_q_tile(S)
    n_q = S // tile_s

    # Wrapper-side layout/dtype prep (one-time XLA ops):
    x_bf = hidden_states.astype(jnp.bfloat16)
    wq = jnp.transpose(params["w_q"]).astype(jnp.bfloat16)   # torch (out,in) -> (in,out)
    wk = jnp.transpose(params["w_k"]).astype(jnp.bfloat16)
    wv = jnp.transpose(params["w_v"]).astype(jnp.bfloat16)
    wo = jnp.transpose(params["w_o"]).astype(jnp.bfloat16)
    bq = params["b_q"].reshape(1, H).astype(jnp.float32)
    bk = params["b_k"].reshape(1, H).astype(jnp.float32)
    bv = params["b_v"].reshape(1, H).astype(jnp.float32)
    bo = params["b_o"].reshape(1, H).astype(jnp.float32)

    kernel = functools.partial(_albert_attention_kernel,
                               num_heads=num_heads, head_dim=head_dim,
                               tile_s=tile_s, scale=1.0 / math.sqrt(head_dim))

    def _launch(single_buffer_weights):
        if single_buffer_weights and hasattr(pl, "Buffered"):
            # Grid-invariant weights/biases: single buffer instead of the default double buffer.
            w_spec = pl.BlockSpec((H, H), lambda b, i: (0, 0), pipeline_mode=pl.Buffered(1))
            b_spec = pl.BlockSpec((1, H), lambda b, i: (0, 0), pipeline_mode=pl.Buffered(1))
        else:
            w_spec = pl.BlockSpec((H, H), lambda b, i: (0, 0))
            b_spec = pl.BlockSpec((1, H), lambda b, i: (0, 0))

        return pl.pallas_call(
            kernel,
            out_shape=(jax.ShapeDtypeStruct((B, S, H), jnp.float32),   # context_layer
                       jax.ShapeDtypeStruct((B, S, H), jnp.float32)),  # attention_output
            grid=(B, n_q),
            in_specs=[
                # full sequence of this batch (block index independent of i -> DMA'd once / batch)
                pl.BlockSpec((1, S, H), lambda b, i: (b, 0, 0)),
                w_spec, b_spec,     # Q
                w_spec, b_spec,     # K
                w_spec, b_spec,     # V
                w_spec, b_spec,     # O (AlbertSelfOutput.dense)
            ],
            out_specs=(
                pl.BlockSpec((1, tile_s, H), lambda b, i: (b, i, 0)),
                pl.BlockSpec((1, tile_s, H), lambda b, i: (b, i, 0)),
            ),
            scratch_shapes=[
                pltpu.VMEM((num_heads, head_dim, S), jnp.bfloat16),  # K^T cache (per batch)
                pltpu.VMEM((num_heads, S, head_dim), jnp.bfloat16),  # V cache   (per batch)
                pltpu.VMEM((tile_s, H), jnp.float32),                # per-tile context assembly
            ],
            compiler_params=pltpu.CompilerParams(
                dimension_semantics=("parallel", "arbitrary"),
                vmem_limit_bytes=_pick_vmem_limit()),
        )(x_bf, wq, bq, wk, bk, wv, bv, wo, bo)

    try:
        ctx, attn_out = _launch(True)
    except Exception:
        # Fallback if this Pallas build rejects single-buffered (Buffered(1)) block specs.
        ctx, attn_out = _launch(False)
    return attn_out, ctx


def _reference(hidden_states, params, *, num_heads):
    """Pure-JAX (f32) reference mirroring the torch module, for correctness check."""
    B, S, H = hidden_states.shape
    hd = H // num_heads

    def lin(x, w, b):
        return jnp.einsum("bsh,oh->bso", x, w) + b

    q = lin(hidden_states, params["w_q"], params["b_q"])
    k = lin(hidden_states, params["w_k"], params["b_k"])
    v = lin(hidden_states, params["w_v"], params["b_v"])

    def split(x):
        return x.reshape(B, S, num_heads, hd).transpose(0, 2, 1, 3)

    qh, kh, vh = split(q), split(k), split(v)
    scores = jnp.einsum("bhqd,bhkd->bhqk", qh, kh) / math.sqrt(hd)
    probs = jax.nn.softmax(scores, axis=-1)
    ctx = jnp.einsum("bhqk,bhkd->bhqd", probs, vh)
    ctx = ctx.transpose(0, 2, 1, 3).reshape(B, S, H)
    out = jnp.einsum("bsh,oh->bso", ctx, params["w_o"]) + params["b_o"]
    return ctx, out


if __name__ == "__main__":
    # Small config consistent with the module's __init__
    batch, seq = 2, 8
    hidden_size = 32
    num_heads = 4            # head_dim = 8

    key = jax.random.PRNGKey(0)
    ks = jax.random.split(key, 9)

    x = jax.random.normal(ks[0], (batch, seq, hidden_size), jnp.float32)
    wscale = 0.1
    params = {
        "w_q": jax.random.normal(ks[1], (hidden_size, hidden_size), jnp.float32) * wscale,
        "b_q": jax.random.normal(ks[2], (hidden_size,), jnp.float32) * wscale,
        "w_k": jax.random.normal(ks[3], (hidden_size, hidden_size), jnp.float32) * wscale,
        "b_k": jax.random.normal(ks[4], (hidden_size,), jnp.float32) * wscale,
        "w_v": jax.random.normal(ks[5], (hidden_size, hidden_size), jnp.float32) * wscale,
        "b_v": jax.random.normal(ks[6], (hidden_size,), jnp.float32) * wscale,
        "w_o": jax.random.normal(ks[7], (hidden_size, hidden_size), jnp.float32) * wscale,
        "b_o": jax.random.normal(ks[8], (hidden_size,), jnp.float32) * wscale,
    }

    attn_out, ctx = albert_attention(x, params, num_heads=num_heads)
    attn_out = jax.block_until_ready(attn_out)
    ctx = jax.block_until_ready(ctx)

    ref_ctx, ref_out = _reference(x, params, num_heads=num_heads)
    assert attn_out.shape == (batch, seq, hidden_size)
    assert ctx.shape == (batch, seq, hidden_size)
    # bf16 matmuls with f32 accumulation -> compare at bf16-appropriate tolerance.
    assert jnp.allclose(attn_out, ref_out, atol=2e-2, rtol=2e-2), "attention_output mismatch"
    assert jnp.allclose(ctx, ref_ctx, atol=2e-2, rtol=2e-2), "context_layer mismatch"

    print("KERNEL_OK")
</pallas_src>

<mosaic_0001>
module attributes {stable_mosaic.version = 11 : i64} {
  func.func @_albert_attention_kernel(%arg0: i32, %arg1: i32, %arg2: memref<1x8x32xbf16, #tpu.memory_space<vmem>>, %arg3: memref<32x32xbf16, #tpu.memory_space<vmem>>, %arg4: memref<1x32xf32, #tpu.memory_space<vmem>>, %arg5: memref<32x32xbf16, #tpu.memory_space<vmem>>, %arg6: memref<1x32xf32, #tpu.memory_space<vmem>>, %arg7: memref<32x32xbf16, #tpu.memory_space<vmem>>, %arg8: memref<1x32xf32, #tpu.memory_space<vmem>>, %arg9: memref<32x32xbf16, #tpu.memory_space<vmem>>, %arg10: memref<1x32xf32, #tpu.memory_space<vmem>>, %arg11: memref<1x8x32xf32, #tpu.memory_space<vmem>>, %arg12: memref<1x8x32xf32, #tpu.memory_space<vmem>>, %arg13: memref<4x8x8xbf16, #tpu.memory_space<vmem>>, %arg14: memref<4x8x8xbf16, #tpu.memory_space<vmem>>, %arg15: memref<8x32xf32, #tpu.memory_space<vmem>>) attributes {dimension_semantics = [#tpu.dimension_semantics<parallel>, #tpu.dimension_semantics<arbitrary>], iteration_bounds = array<i64: 2, 1>, scalar_prefetch = 0 : i64, scratch_operands = 3 : i64, tpu.core_type = #tpu.core_type<tc>, window_params = [{transform_indices = @transform_0, window_bounds = array<i64: 1, 8, 32>}, {pipeline_mode = #tpu.pipeline_mode<synchronous>, transform_indices = @transform_1, window_bounds = array<i64: 32, 32>}, {pipeline_mode = #tpu.pipeline_mode<synchronous>, transform_indices = @transform_2, window_bounds = array<i64: 1, 32>}, {pipeline_mode = #tpu.pipeline_mode<synchronous>, transform_indices = @transform_3, window_bounds = array<i64: 32, 32>}, {pipeline_mode = #tpu.pipeline_mode<synchronous>, transform_indices = @transform_4, window_bounds = array<i64: 1, 32>}, {pipeline_mode = #tpu.pipeline_mode<synchronous>, transform_indices = @transform_5, window_bounds = array<i64: 32, 32>}, {pipeline_mode = #tpu.pipeline_mode<synchronous>, transform_indices = @transform_6, window_bounds = array<i64: 1, 32>}, {pipeline_mode = #tpu.pipeline_mode<synchronous>, transform_indices = @transform_7, window_bounds = array<i64: 32, 32>}, {pipeline_mode = #tpu.pipeline_mode<synchronous>, transform_indices = @transform_8, window_bounds = array<i64: 1, 32>}, {transform_indices = @transform_9, window_bounds = array<i64: 1, 8, 32>}, {transform_indices = @transform_10, window_bounds = array<i64: 1, 8, 32>}]} {
    %c0_i32 = arith.constant 0 : i32
    %0 = arith.cmpi eq, %arg1, %c0_i32 : i32
    %1 = arith.extui %0 : i1 to i32
    %c0_i32_0 = arith.constant 0 : i32
    %2 = arith.cmpi ne, %1, %c0_i32_0 : i32
    scf.if %2 {
      %c0_65 = arith.constant 0 : index
      %c0_66 = arith.constant 0 : index
      %c0_67 = arith.constant 0 : index
      %111 = vector.load %arg2[%c0_65, %c0_66, %c0_67] : memref<1x8x32xbf16, #tpu.memory_space<vmem>>, vector<1x8x32xbf16>
      %112 = vector.shape_cast %111 : vector<1x8x32xbf16> to vector<8x32xbf16>
      %c0_68 = arith.constant 0 : index
      %c0_69 = arith.constant 0 : index
      %113 = vector.load %arg5[%c0_68, %c0_69] : memref<32x32xbf16, #tpu.memory_space<vmem>>, vector<32x32xbf16>
      %cst_70 = arith.constant dense<0.000000e+00> : vector<8x32xf32>
      %114 = tpu.matmul %112, %113, %cst_70 {dimension_numbers = #tpu.dot_dimension_numbers<[1], [0], [0], [1], [0, 0, 1, 1], [], []>} : vector<8x32xbf16>, vector<32x32xbf16>, vector<8x32xf32> -> vector<8x32xf32>
      %c0_71 = arith.constant 0 : index
      %c0_72 = arith.constant 0 : index
      %115 = vector.load %arg6[%c0_71, %c0_72] : memref<1x32xf32, #tpu.memory_space<vmem>>, vector<1x32xf32>
      %116 = vector.broadcast %115 : vector<1x32xf32> to vector<8x32xf32>
      %117 = arith.addf %114, %116 : vector<8x32xf32>
      %c0_73 = arith.constant 0 : index
      %c0_74 = arith.constant 0 : index
      %118 = vector.load %arg7[%c0_73, %c0_74] : memref<32x32xbf16, #tpu.memory_space<vmem>>, vector<32x32xbf16>
      %cst_75 = arith.constant dense<0.000000e+00> : vector<8x32xf32>
      %119 = tpu.matmul %112, %118, %cst_75 {dimension_numbers = #tpu.dot_dimension_numbers<[1], [0], [0], [1], [0, 0, 1, 1], [], []>} : vector<8x32xbf16>, vector<32x32xbf16>, vector<8x32xf32> -> vector<8x32xf32>
      %c0_76 = arith.constant 0 : index
      %c0_77 = arith.constant 0 : index
      %120 = vector.load %arg8[%c0_76, %c0_77] : memref<1x32xf32, #tpu.memory_space<vmem>>, vector<1x32xf32>
      %121 = vector.broadcast %120 : vector<1x32xf32> to vector<8x32xf32>
      %122 = arith.addf %119, %121 : vector<8x32xf32>
      %123 = tpu.transpose %117, [1, 0] : vector<8x32xf32> -> vector<32x8xf32>
      %124 = arith.truncf %123 : vector<32x8xf32> to vector<32x8xbf16>
      %125 = arith.truncf %122 : vector<8x32xf32> to vector<8x32xbf16>
      %126 = vector.extract_strided_slice %124 {offsets = [0, 0], sizes = [8, 8], strides = [1, 1]} : vector<32x8xbf16> to vector<8x8xbf16>
      %c0_78 = arith.constant 0 : index
      %c0_79 = arith.constant 0 : index
      %c0_80 = arith.constant 0 : index
      %127 = vector.load %arg13[%c0_78, %c0_79, %c0_80] : memref<4x8x8xbf16, #tpu.memory_space<vmem>>, vector<1x8x8xbf16>
      %128 = vector.shape_cast %127 : vector<1x8x8xbf16> to vector<8x8xbf16>
      %129 = vector.shape_cast %126 : vector<8x8xbf16> to vector<1x8x8xbf16>
      tpu.vector_store %arg13[%c0_78, %c0_79, %c0_80], %129 {strides = array<i32>} : memref<4x8x8xbf16, #tpu.memory_space<vmem>>, vector<1x8x8xbf16>,
      %130 = vector.extract_strided_slice %125 {offsets = [0, 0], sizes = [8, 8], strides = [1, 1]} : vector<8x32xbf16> to vector<8x8xbf16>
      %c0_81 = arith.constant 0 : index
      %c0_82 = arith.constant 0 : index
      %c0_83 = arith.constant 0 : index
      %131 = vector.load %arg14[%c0_81, %c0_82, %c0_83] : memref<4x8x8xbf16, #tpu.memory_space<vmem>>, vector<1x8x8xbf16>
      %132 = vector.shape_cast %131 : vector<1x8x8xbf16> to vector<8x8xbf16>
      %133 = vector.shape_cast %130 : vector<8x8xbf16> to vector<1x8x8xbf16>
      tpu.vector_store %arg14[%c0_81, %c0_82, %c0_83], %133 {strides = array<i32>} : memref<4x8x8xbf16, #tpu.memory_space<vmem>>, vector<1x8x8xbf16>,
      %134 = vector.extract_strided_slice %124 {offsets = [8, 0], sizes = [8, 8], strides = [1, 1]} : vector<32x8xbf16> to vector<8x8xbf16>
      %c1_84 = arith.constant 1 : index
      %c0_85 = arith.constant 0 : index
      %c0_86 = arith.constant 0 : index
      %135 = vector.load %arg13[%c1_84, %c0_85, %c0_86] : memref<4x8x8xbf16, #tpu.memory_space<vmem>>, vector<1x8x8xbf16>
      %136 = vector.shape_cast %135 : vector<1x8x8xbf16> to vector<8x8xbf16>
      %137 = vector.shape_cast %134 : vector<8x8xbf16> to vector<1x8x8xbf16>
      tpu.vector_store %arg13[%c1_84, %c0_85, %c0_86], %137 {strides = array<i32>} : memref<4x8x8xbf16, #tpu.memory_space<vmem>>, vector<1x8x8xbf16>,
      %138 = vector.extract_strided_slice %125 {offsets = [0, 8], sizes = [8, 8], strides = [1, 1]} : vector<8x32xbf16> to vector<8x8xbf16>
      %c1_87 = arith.constant 1 : index
      %c0_88 = arith.constant 0 : index
      %c0_89 = arith.constant 0 : index
      %139 = vector.load %arg14[%c1_87, %c0_88, %c0_89] : memref<4x8x8xbf16, #tpu.memory_space<vmem>>, vector<1x8x8xbf16>
      %140 = vector.shape_cast %139 : vector<1x8x8xbf16> to vector<8x8xbf16>
      %141 = vector.shape_cast %138 : vector<8x8xbf16> to vector<1x8x8xbf16>
      tpu.vector_store %arg14[%c1_87, %c0_88, %c0_89], %141 {strides = array<i32>} : memref<4x8x8xbf16, #tpu.memory_space<vmem>>, vector<1x8x8xbf16>,
      %142 = vector.extract_strided_slice %124 {offsets = [16, 0], sizes = [8, 8], strides = [1, 1]} : vector<32x8xbf16> to vector<8x8xbf16>
      %c2_90 = arith.constant 2 : index
      %c0_91 = arith.constant 0 : index
      %c0_92 = arith.constant 0 : index
      %143 = vector.load %arg13[%c2_90, %c0_91, %c0_92] : memref<4x8x8xbf16, #tpu.memory_space<vmem>>, vector<1x8x8xbf16>
      %144 = vector.shape_cast %143 : vector<1x8x8xbf16> to vector<8x8xbf16>
      %145 = vector.shape_cast %142 : vector<8x8xbf16> to vector<1x8x8xbf16>
      tpu.vector_store %arg13[%c2_90, %c0_91, %c0_92], %145 {strides = array<i32>} : memref<4x8x8xbf16, #tpu.memory_space<vmem>>, vector<1x8x8xbf16>,
      %146 = vector.extract_strided_slice %125 {offsets = [0, 16], sizes = [8, 8], strides = [1, 1]} : vector<8x32xbf16> to vector<8x8xbf16>
      %c2_93 = arith.constant 2 : index
      %c0_94 = arith.constant 0 : index
      %c0_95 = arith.constant 0 : index
      %147 = vector.load %arg14[%c2_93, %c0_94, %c0_95] : memref<4x8x8xbf16, #tpu.memory_space<vmem>>, vector<1x8x8xbf16>
      %148 = vector.shape_cast %147 : vector<1x8x8xbf16> to vector<8x8xbf16>
      %149 = vector.shape_cast %146 : vector<8x8xbf16> to vector<1x8x8xbf16>
      tpu.vector_store %arg14[%c2_93, %c0_94, %c0_95], %149 {strides = array<i32>} : memref<4x8x8xbf16, #tpu.memory_space<vmem>>, vector<1x8x8xbf16>,
      %150 = vector.extract_strided_slice %124 {offsets = [24, 0], sizes = [8, 8], strides = [1, 1]} : vector<32x8xbf16> to vector<8x8xbf16>
      %c3_96 = arith.constant 3 : index
      %c0_97 = arith.constant 0 : index
      %c0_98 = arith.constant 0 : index
      %151 = vector.load %arg13[%c3_96, %c0_97, %c0_98] : memref<4x8x8xbf16, #tpu.memory_space<vmem>>, vector<1x8x8xbf16>
      %152 = vector.shape_cast %151 : vector<1x8x8xbf16> to vector<8x8xbf16>
      %153 = vector.shape_cast %150 : vector<8x8xbf16> to vector<1x8x8xbf16>
      tpu.vector_store %arg13[%c3_96, %c0_97, %c0_98], %153 {strides = array<i32>} : memref<4x8x8xbf16, #tpu.memory_space<vmem>>, vector<1x8x8xbf16>,
      %154 = vector.extract_strided_slice %125 {offsets = [0, 24], sizes = [8, 8], strides = [1, 1]} : vector<8x32xbf16> to vector<8x8xbf16>
      %c3_99 = arith.constant 3 : index
      %c0_100 = arith.constant 0 : index
      %c0_101 = arith.constant 0 : index
      %155 = vector.load %arg14[%c3_99, %c0_100, %c0_101] : memref<4x8x8xbf16, #tpu.memory_space<vmem>>, vector<1x8x8xbf16>
      %156 = vector.shape_cast %155 : vector<1x8x8xbf16> to vector<8x8xbf16>
      %157 = vector.shape_cast %154 : vector<8x8xbf16> to vector<1x8x8xbf16>
      tpu.vector_store %arg14[%c3_99, %c0_100, %c0_101], %157 {strides = array<i32>} : memref<4x8x8xbf16, #tpu.memory_space<vmem>>, vector<1x8x8xbf16>,
    } else {
    }
    %c8_i32 = arith.constant 8 : i32
    %3 = arith.muli %arg1, %c8_i32 : i32
    %4 = tpu.assume_multiple %3, 8 : i32
    %c0 = arith.constant 0 : index
    %5 = arith.index_cast %4 : i32 to index
    %c0_1 = arith.constant 0 : index
    %6 = vector.load %arg2[%c0, %5, %c0_1] : memref<1x8x32xbf16, #tpu.memory_space<vmem>>, vector<1x8x32xbf16>
    %7 = vector.shape_cast %6 : vector<1x8x32xbf16> to vector<8x32xbf16>
    %c0_2 = arith.constant 0 : index
    %c0_3 = arith.constant 0 : index
    %8 = vector.load %arg3[%c0_2, %c0_3] : memref<32x32xbf16, #tpu.memory_space<vmem>>, vector<32x32xbf16>
    %cst = arith.constant dense<0.000000e+00> : vector<8x32xf32>
    %9 = tpu.matmul %7, %8, %cst {dimension_numbers = #tpu.dot_dimension_numbers<[1], [0], [0], [1], [0, 0, 1, 1], [], []>} : vector<8x32xbf16>, vector<32x32xbf16>, vector<8x32xf32> -> vector<8x32xf32>
    %c0_4 = arith.constant 0 : index
    %c0_5 = arith.constant 0 : index
    %10 = vector.load %arg4[%c0_4, %c0_5] : memref<1x32xf32, #tpu.memory_space<vmem>>, vector<1x32xf32>
    %11 = vector.broadcast %10 : vector<1x32xf32> to vector<8x32xf32>
    %12 = arith.addf %9, %11 : vector<8x32xf32>
    %13 = arith.truncf %12 : vector<8x32xf32> to vector<8x32xbf16>
    %14 = vector.extract_strided_slice %13 {offsets = [0, 0], sizes = [8, 8], strides = [1, 1]} : vector<8x32xbf16> to vector<8x8xbf16>
    %c0_6 = arith.constant 0 : index
    %c0_7 = arith.constant 0 : index
    %c0_8 = arith.constant 0 : index
    %15 = vector.load %arg13[%c0_6, %c0_7, %c0_8] : memref<4x8x8xbf16, #tpu.memory_space<vmem>>, vector<1x8x8xbf16>
    %16 = vector.shape_cast %15 : vector<1x8x8xbf16> to vector<8x8xbf16>
    %cst_9 = arith.constant dense<0.000000e+00> : vector<8x8xf32>
    %17 = tpu.matmul %14, %16, %cst_9 {dimension_numbers = #tpu.dot_dimension_numbers<[1], [0], [0], [1], [0, 0, 1, 1], [], []>} : vector<8x8xbf16>, vector<8x8xbf16>, vector<8x8xf32> -> vector<8x8xf32>
    %cst_10 = arith.constant 0.353553385 : f32
    %18 = vector.broadcast %cst_10 : f32 to vector<8x8xf32>
    %19 = arith.mulf %17, %18 : vector<8x8xf32>
    %cst_11 = arith.constant dense<0xFF800000> : vector<8xf32>
    %20 = vector.multi_reduction <maximumf>, %19, %cst_11 [1] : vector<8x8xf32> to vector<8xf32>
    %21 = vector.shape_cast %20 : vector<8xf32> to vector<8x1xf32>
    %22 = vector.broadcast %21 : vector<8x1xf32> to vector<8x8xf32>
    %23 = arith.subf %19, %22 : vector<8x8xf32>
    %24 = math.exp %23 : vector<8x8xf32>
    %cst_12 = arith.constant dense<0.000000e+00> : vector<8xf32>
    %25 = vector.multi_reduction <add>, %24, %cst_12 [1] : vector<8x8xf32> to vector<8xf32>
    %26 = vector.shape_cast %25 : vector<8xf32> to vector<8x1xf32>
    %27 = tpu.reciprocal %26 {approx = true} : vector<8x1xf32> -> vector<8x1xf32>
    %28 = vector.broadcast %27 : vector<8x1xf32> to vector<8x8xf32>
    %29 = arith.mulf %24, %28 : vector<8x8xf32>
    %30 = arith.truncf %29 : vector<8x8xf32> to vector<8x8xbf16>
    %c0_13 = arith.constant 0 : index
    %c0_14 = arith.constant 0 : index
    %c0_15 = arith.constant 0 : index
    %31 = vector.load %arg14[%c0_13, %c0_14, %c0_15] : memref<4x8x8xbf16, #tpu.memory_space<vmem>>, vector<1x8x8xbf16>
    %32 = vector.shape_cast %31 : vector<1x8x8xbf16> to vector<8x8xbf16>
    %cst_16 = arith.constant dense<0.000000e+00> : vector<8x8xf32>
    %33 = tpu.matmul %30, %32, %cst_16 {dimension_numbers = #tpu.dot_dimension_numbers<[1], [0], [0], [1], [0, 0, 1, 1], [], []>} : vector<8x8xbf16>, vector<8x8xbf16>, vector<8x8xf32> -> vector<8x8xf32>
    %c0_17 = arith.constant 0 : index
    %c0_18 = arith.constant 0 : index
    %34 = vector.load %arg15[%c0_17, %c0_18] : memref<8x32xf32, #tpu.memory_space<vmem>>, vector<8x8xf32>
    tpu.vector_store %arg15[%c0_17, %c0_18], %33 {strides = array<i32>} : memref<8x32xf32, #tpu.memory_space<vmem>>, vector<8x8xf32>,
    %35 = vector.extract_strided_slice %13 {offsets = [0, 8], sizes = [8, 8], strides = [1, 1]} : vector<8x32xbf16> to vector<8x8xbf16>
    %c1 = arith.constant 1 : index
    %c0_19 = arith.constant 0 : index
    %c0_20 = arith.constant 0 : index
    %36 = vector.load %arg13[%c1, %c0_19, %c0_20] : memref<4x8x8xbf16, #tpu.memory_space<vmem>>, vector<1x8x8xbf16>
    %37 = vector.shape_cast %36 : vector<1x8x8xbf16> to vector<8x8xbf16>
    %cst_21 = arith.constant dense<0.000000e+00> : vector<8x8xf32>
    %38 = tpu.matmul %35, %37, %cst_21 {dimension_numbers = #tpu.dot_dimension_numbers<[1], [0], [0], [1], [0, 0, 1, 1], [], []>} : vector<8x8xbf16>, vector<8x8xbf16>, vector<8x8xf32> -> vector<8x8xf32>
    %cst_22 = arith.constant 0.353553385 : f32
    %39 = vector.broadcast %cst_22 : f32 to vector<8x8xf32>
    %40 = arith.mulf %38, %39 : vector<8x8xf32>
    %cst_23 = arith.constant dense<0xFF800000> : vector<8xf32>
    %41 = vector.multi_reduction <maximumf>, %40, %cst_23 [1] : vector<8x8xf32> to vector<8xf32>
    %42 = vector.shape_cast %41 : vector<8xf32> to vector<8x1xf32>
    %43 = vector.broadcast %42 : vector<8x1xf32> to vector<8x8xf32>
    %44 = arith.subf %40, %43 : vector<8x8xf32>
    %45 = math.exp %44 : vector<8x8xf32>
    %cst_24 = arith.constant dense<0.000000e+00> : vector<8xf32>
    %46 = vector.multi_reduction <add>, %45, %cst_24 [1] : vector<8x8xf32> to vector<8xf32>
    %47 = vector.shape_cast %46 : vector<8xf32> to vector<8x1xf32>
    %48 = tpu.reciprocal %47 {approx = true} : vector<8x1xf32> -> vector<8x1xf32>
    %49 = vector.broadcast %48 : vector<8x1xf32> to vector<8x8xf32>
    %50 = arith.mulf %45, %49 : vector<8x8xf32>
    %51 = arith.truncf %50 : vector<8x8xf32> to vector<8x8xbf16>
    %c1_25 = arith.constant 1 : index
    %c0_26 = arith.constant 0 : index
    %c0_27 = arith.constant 0 : index
    %52 = vector.load %arg14[%c1_25, %c0_26, %c0_27] : memref<4x8x8xbf16, #tpu.memory_space<vmem>>, vector<1x8x8xbf16>
    %53 = vector.shape_cast %52 : vector<1x8x8xbf16> to vector<8x8xbf16>
    %cst_28 = arith.constant dense<0.000000e+00> : vector<8x8xf32>
    %54 = tpu.matmul %51, %53, %cst_28 {dimension_numbers = #tpu.dot_dimension_numbers<[1], [0], [0], [1], [0, 0, 1, 1], [], []>} : vector<8x8xbf16>, vector<8x8xbf16>, vector<8x8xf32> -> vector<8x8xf32>
    %c0_29 = arith.constant 0 : index
    %c8 = arith.constant 8 : index
    %55 = vector.load %arg15[%c0_29, %c8] : memref<8x32xf32, #tpu.memory_space<vmem>>, vector<8x8xf32>
    tpu.vector_store %arg15[%c0_29, %c8], %54 {strides = array<i32>} : memref<8x32xf32, #tpu.memory_space<vmem>>, vector<8x8xf32>,
    %56 = vector.extract_strided_slice %13 {offsets = [0, 16], sizes = [8, 8], strides = [1, 1]} : vector<8x32xbf16> to vector<8x8xbf16>
    %c2 = arith.constant 2 : index
    %c0_30 = arith.constant 0 : index
    %c0_31 = arith.constant 0 : index
    %57 = vector.load %arg13[%c2, %c0_30, %c0_31] : memref<4x8x8xbf16, #tpu.memory_space<vmem>>, vector<1x8x8xbf16>
    %58 = vector.shape_cast %57 : vector<1x8x8xbf16> to vector<8x8xbf16>
    %cst_32 = arith.constant dense<0.000000e+00> : vector<8x8xf32>
    %59 = tpu.matmul %56, %58, %cst_32 {dimension_numbers = #tpu.dot_dimension_numbers<[1], [0], [0], [1], [0, 0, 1, 1], [], []>} : vector<8x8xbf16>, vector<8x8xbf16>, vector<8x8xf32> -> vector<8x8xf32>
    %cst_33 = arith.constant 0.353553385 : f32
    %60 = vector.broadcast %cst_33 : f32 to vector<8x8xf32>
    %61 = arith.mulf %59, %60 : vector<8x8xf32>
    %cst_34 = arith.constant dense<0xFF800000> : vector<8xf32>
    %62 = vector.multi_reduction <maximumf>, %61, %cst_34 [1] : vector<8x8xf32> to vector<8xf32>
    %63 = vector.shape_cast %62 : vector<8xf32> to vector<8x1xf32>
    %64 = vector.broadcast %63 : vector<8x1xf32> to vector<8x8xf32>
    %65 = arith.subf %61, %64 : vector<8x8xf32>
    %66 = math.exp %65 : vector<8x8xf32>
    %cst_35 = arith.constant dense<0.000000e+00> : vector<8xf32>
    %67 = vector.multi_reduction <add>, %66, %cst_35 [1] : vector<8x8xf32> to vector<8xf32>
    %68 = vector.shape_cast %67 : vector<8xf32> to vector<8x1xf32>
    %69 = tpu.reciprocal %68 {approx = true} : vector<8x1xf32> -> vector<8x1xf32>
    %70 = vector.broadcast %69 : vector<8x1xf32> to vector<8x8xf32>
    %71 = arith.mulf %66, %70 : vector<8x8xf32>
    %72 = arith.truncf %71 : vector<8x8xf32> to vector<8x8xbf16>
    %c2_36 = arith.constant 2 : index
    %c0_37 = arith.constant 0 : index
    %c0_38 = arith.constant 0 : index
    %73 = vector.load %arg14[%c2_36, %c0_37, %c0_38] : memref<4x8x8xbf16, #tpu.memory_space<vmem>>, vector<1x8x8xbf16>
    %74 = vector.shape_cast %73 : vector<1x8x8xbf16> to vector<8x8xbf16>
    %cst_39 = arith.constant dense<0.000000e+00> : vector<8x8xf32>
    %75 = tpu.matmul %72, %74, %cst_39 {dimension_numbers = #tpu.dot_dimension_numbers<[1], [0], [0], [1], [0, 0, 1, 1], [], []>} : vector<8x8xbf16>, vector<8x8xbf16>, vector<8x8xf32> -> vector<8x8xf32>
    %c0_40 = arith.constant 0 : index
    %c16 = arith.constant 16 : index
    %76 = vector.load %arg15[%c0_40, %c16] : memref<8x32xf32, #tpu.memory_space<vmem>>, vector<8x8xf32>
    tpu.vector_store %arg15[%c0_40, %c16], %75 {strides = array<i32>} : memref<8x32xf32, #tpu.memory_space<vmem>>, vector<8x8xf32>,
    %77 = vector.extract_strided_slice %13 {offsets = [0, 24], sizes = [8, 8], strides = [1, 1]} : vector<8x32xbf16> to vector<8x8xbf16>
    %c3 = arith.constant 3 : index
    %c0_41 = arith.constant 0 : index
    %c0_42 = arith.constant 0 : index
    %78 = vector.load %arg13[%c3, %c0_41, %c0_42] : memref<4x8x8xbf16, #tpu.memory_space<vmem>>, vector<1x8x8xbf16>
    %79 = vector.shape_cast %78 : vector<1x8x8xbf16> to vector<8x8xbf16>
    %cst_43 = arith.constant dense<0.000000e+00> : vector<8x8xf32>
    %80 = tpu.matmul %77, %79, %cst_43 {dimension_numbers = #tpu.dot_dimension_numbers<[1], [0], [0], [1], [0, 0, 1, 1], [], []>} : vector<8x8xbf16>, vector<8x8xbf16>, vector<8x8xf32> -> vector<8x8xf32>
    %cst_44 = arith.constant 0.353553385 : f32
    %81 = vector.broadcast %cst_44 : f32 to vector<8x8xf32>
    %82 = arith.mulf %80, %81 : vector<8x8xf32>
    %cst_45 = arith.constant dense<0xFF800000> : vector<8xf32>
    %83 = vector.multi_reduction <maximumf>, %82, %cst_45 [1] : vector<8x8xf32> to vector<8xf32>
    %84 = vector.shape_cast %83 : vector<8xf32> to vector<8x1xf32>
    %85 = vector.broadcast %84 : vector<8x1xf32> to vector<8x8xf32>
    %86 = arith.subf %82, %85 : vector<8x8xf32>
    %87 = math.exp %86 : vector<8x8xf32>
    %cst_46 = arith.constant dense<0.000000e+00> : vector<8xf32>
    %88 = vector.multi_reduction <add>, %87, %cst_46 [1] : vector<8x8xf32> to vector<8xf32>
    %89 = vector.shape_cast %88 : vector<8xf32> to vector<8x1xf32>
    %90 = tpu.reciprocal %89 {approx = true} : vector<8x1xf32> -> vector<8x1xf32>
    %91 = vector.broadcast %90 : vector<8x1xf32> to vector<8x8xf32>
    %92 = arith.mulf %87, %91 : vector<8x8xf32>
    %93 = arith.truncf %92 : vector<8x8xf32> to vector<8x8xbf16>
    %c3_47 = arith.constant 3 : index
    %c0_48 = arith.constant 0 : index
    %c0_49 = arith.constant 0 : index
    %94 = vector.load %arg14[%c3_47, %c0_48, %c0_49] : memref<4x8x8xbf16, #tpu.memory_space<vmem>>, vector<1x8x8xbf16>
    %95 = vector.shape_cast %94 : vector<1x8x8xbf16> to vector<8x8xbf16>
    %cst_50 = arith.constant dense<0.000000e+00> : vector<8x8xf32>
    %96 = tpu.matmul %93, %95, %cst_50 {dimension_numbers = #tpu.dot_dimension_numbers<[1], [0], [0], [1], [0, 0, 1, 1], [], []>} : vector<8x8xbf16>, vector<8x8xbf16>, vector<8x8xf32> -> vector<8x8xf32>
    %c0_51 = arith.constant 0 : index
    %c24 = arith.constant 24 : index
    %97 = vector.load %arg15[%c0_51, %c24] : memref<8x32xf32, #tpu.memory_space<vmem>>, vector<8x8xf32>
    tpu.vector_store %arg15[%c0_51, %c24], %96 {strides = array<i32>} : memref<8x32xf32, #tpu.memory_space<vmem>>, vector<8x8xf32>,
    %c0_52 = arith.constant 0 : index
    %c0_53 = arith.constant 0 : index
    %98 = vector.load %arg15[%c0_52, %c0_53] : memref<8x32xf32, #tpu.memory_space<vmem>>, vector<8x32xf32>
    %c0_54 = arith.constant 0 : index
    %c0_55 = arith.constant 0 : index
    %c0_56 = arith.constant 0 : index
    %99 = vector.load %arg11[%c0_54, %c0_55, %c0_56] : memref<1x8x32xf32, #tpu.memory_space<vmem>>, vector<1x8x32xf32>
    %100 = vector.shape_cast %99 : vector<1x8x32xf32> to vector<8x32xf32>
    %101 = vector.shape_cast %98 : vector<8x32xf32> to vector<1x8x32xf32>
    tpu.vector_store %arg11[%c0_54, %c0_55, %c0_56], %101 {strides = array<i32>} : memref<1x8x32xf32, #tpu.memory_space<vmem>>, vector<1x8x32xf32>,
    %102 = arith.truncf %98 : vector<8x32xf32> to vector<8x32xbf16>
    %c0_57 = arith.constant 0 : index
    %c0_58 = arith.constant 0 : index
    %103 = vector.load %arg9[%c0_57, %c0_58] : memref<32x32xbf16, #tpu.memory_space<vmem>>, vector<32x32xbf16>
    %cst_59 = arith.constant dense<0.000000e+00> : vector<8x32xf32>
    %104 = tpu.matmul %102, %103, %cst_59 {dimension_numbers = #tpu.dot_dimension_numbers<[1], [0], [0], [1], [0, 0, 1, 1], [], []>} : vector<8x32xbf16>, vector<32x32xbf16>, vector<8x32xf32> -> vector<8x32xf32>
    %c0_60 = arith.constant 0 : index
    %c0_61 = arith.constant 0 : index
    %105 = vector.load %arg10[%c0_60, %c0_61] : memref<1x32xf32, #tpu.memory_space<vmem>>, vector<1x32xf32>
    %106 = vector.broadcast %105 : vector<1x32xf32> to vector<8x32xf32>
    %107 = arith.addf %104, %106 : vector<8x32xf32>
    %c0_62 = arith.constant 0 : index
    %c0_63 = arith.constant 0 : index
    %c0_64 = arith.constant 0 : index
    %108 = vector.load %arg12[%c0_62, %c0_63, %c0_64] : memref<1x8x32xf32, #tpu.memory_space<vmem>>, vector<1x8x32xf32>
    %109 = vector.shape_cast %108 : vector<1x8x32xf32> to vector<8x32xf32>
    %110 = vector.shape_cast %107 : vector<8x32xf32> to vector<1x8x32xf32>
    tpu.vector_store %arg12[%c0_62, %c0_63, %c0_64], %110 {strides = array<i32>} : memref<1x8x32xf32, #tpu.memory_space<vmem>>, vector<1x8x32xf32>,
    return
  }
  func.func @transform_0(%arg0: i32, %arg1: i32) -> (i32, i32, i32) {
    %c0_i32 = arith.constant 0 : i32
    %c0_i32_0 = arith.constant 0 : i32
    %c0_i32_1 = arith.constant 0 : i32
    return %arg0, %c0_i32, %c0_i32_0 : i32, i32, i32
  }
  func.func @transform_1(%arg0: i32, %arg1: i32) -> (i32, i32) {
    %c0_i32 = arith.constant 0 : i32
    %c0_i32_0 = arith.constant 0 : i32
    %c0_i32_1 = arith.constant 0 : i32
    return %c0_i32, %c0_i32_0 : i32, i32
  }
  func.func @transform_2(%arg0: i32, %arg1: i32) -> (i32, i32) {
    %c0_i32 = arith.constant 0 : i32
    %c0_i32_0 = arith.constant 0 : i32
    %c0_i32_1 = arith.constant 0 : i32
    return %c0_i32, %c0_i32_0 : i32, i32
  }
  func.func @transform_3(%arg0: i32, %arg1: i32) -> (i32, i32) {
    %c0_i32 = arith.constant 0 : i32
    %c0_i32_0 = arith.constant 0 : i32
    %c0_i32_1 = arith.constant 0 : i32
    return %c0_i32, %c0_i32_0 : i32, i32
  }
  func.func @transform_4(%arg0: i32, %arg1: i32) -> (i32, i32) {
    %c0_i32 = arith.constant 0 : i32
    %c0_i32_0 = arith.constant 0 : i32
    %c0_i32_1 = arith.constant 0 : i32
    return %c0_i32, %c0_i32_0 : i32, i32
  }
  func.func @transform_5(%arg0: i32, %arg1: i32) -> (i32, i32) {
    %c0_i32 = arith.constant 0 : i32
    %c0_i32_0 = arith.constant 0 : i32
    %c0_i32_1 = arith.constant 0 : i32
    return %c0_i32, %c0_i32_0 : i32, i32
  }
  func.func @transform_6(%arg0: i32, %arg1: i32) -> (i32, i32) {
    %c0_i32 = arith.constant 0 : i32
    %c0_i32_0 = arith.constant 0 : i32
    %c0_i32_1 = arith.constant 0 : i32
    return %c0_i32, %c0_i32_0 : i32, i32
  }
  func.func @transform_7(%arg0: i32, %arg1: i32) -> (i32, i32) {
    %c0_i32 = arith.constant 0 : i32
    %c0_i32_0 = arith.constant 0 : i32
    %c0_i32_1 = arith.constant 0 : i32
    return %c0_i32, %c0_i32_0 : i32, i32
  }
  func.func @transform_8(%arg0: i32, %arg1: i32) -> (i32, i32) {
    %c0_i32 = arith.constant 0 : i32
    %c0_i32_0 = arith.constant 0 : i32
    %c0_i32_1 = arith.constant 0 : i32
    return %c0_i32, %c0_i32_0 : i32, i32
  }
  func.func @transform_9(%arg0: i32, %arg1: i32) -> (i32, i32, i32) {
    %c0_i32 = arith.constant 0 : i32
    %c0_i32_0 = arith.constant 0 : i32
    return %arg0, %arg1, %c0_i32 : i32, i32, i32
  }
  func.func @transform_10(%arg0: i32, %arg1: i32) -> (i32, i32, i32) {
    %c0_i32 = arith.constant 0 : i32
    %c0_i32_0 = arith.constant 0 : i32
    return %arg0, %arg1, %c0_i32 : i32, i32, i32
  }
}

module attributes {stable_mosaic.version = 11 : i64} {
  func.func @_albert_attention_kernel(%arg0: i32, %arg1: i32, %arg2: memref<1x8x32xbf16, #tpu.memory_space<vmem>>, %arg3: memref<32x32xbf16, #tpu.memory_space<vmem>>, %arg4: memref<1x32xf32, #tpu.memory_space<vmem>>, %arg5: memref<32x32xbf16, #tpu.memory_space<vmem>>, %arg6: memref<1x32xf32, #tpu.memory_space<vmem>>, %arg7: memref<32x32xbf16, #tpu.memory_space<vmem>>, %arg8: memref<1x32xf32, #tpu.memory_space<vmem>>, %arg9: memref<32x32xbf16, #tpu.memory_space<vmem>>, %arg10: memref<1x32xf32, #tpu.memory_space<vmem>>, %arg11: memref<1x8x32xf32, #tpu.memory_space<vmem>>, %arg12: memref<1x8x32xf32, #tpu.memory_space<vmem>>, %arg13: memref<4x8x8xbf16, #tpu.memory_space<vmem>>, %arg14: memref<4x8x8xbf16, #tpu.memory_space<vmem>>, %arg15: memref<8x32xf32, #tpu.memory_space<vmem>>) attributes {dimension_semantics = [#tpu.dimension_semantics<parallel>, #tpu.dimension_semantics<arbitrary>], iteration_bounds = array<i64: 2, 1>, scalar_prefetch = 0 : i64, scratch_operands = 3 : i64, tpu.core_type = #tpu.core_type<tc>, window_params = [{transform_indices = @transform_0, window_bounds = array<i64: 1, 8, 32>}, {pipeline_mode = #tpu.pipeline_mode<synchronous>, transform_indices = @transform_1, window_bounds = array<i64: 32, 32>}, {pipeline_mode = #tpu.pipeline_mode<synchronous>, transform_indices = @transform_2, window_bounds = array<i64: 1, 32>}, {pipeline_mode = #tpu.pipeline_mode<synchronous>, transform_indices = @transform_3, window_bounds = array<i64: 32, 32>}, {pipeline_mode = #tpu.pipeline_mode<synchronous>, transform_indices = @transform_4, window_bounds = array<i64: 1, 32>}, {pipeline_mode = #tpu.pipeline_mode<synchronous>, transform_indices = @transform_5, window_bounds = array<i64: 32, 32>}, {pipeline_mode = #tpu.pipeline_mode<synchronous>, transform_indices = @transform_6, window_bounds = array<i64: 1, 32>}, {pipeline_mode = #tpu.pipeline_mode<synchronous>, transform_indices = @transform_7, window_bounds = array<i64: 32, 32>}, {pipeline_mode = #tpu.pipeline_mode<synchronous>, transform_indices = @transform_8, window_bounds = array<i64: 1, 32>}, {transform_indices = @transform_9, window_bounds = array<i64: 1, 8, 32>}, {transform_indices = @transform_10, window_bounds = array<i64: 1, 8, 32>}]} {
    %c0_i32 = arith.constant 0 : i32
    %0 = arith.cmpi eq, %arg1, %c0_i32 : i32
    %1 = arith.extui %0 : i1 to i32
    %c0_i32_0 = arith.constant 0 : i32
    %2 = arith.cmpi ne, %1, %c0_i32_0 : i32
    scf.if %2 {
      %c0_65 = arith.constant 0 : index
      %c0_66 = arith.constant 0 : index
      %c0_67 = arith.constant 0 : index
      %111 = vector.load %arg2[%c0_65, %c0_66, %c0_67] : memref<1x8x32xbf16, #tpu.memory_space<vmem>>, vector<1x8x32xbf16>
      %112 = vector.shape_cast %111 : vector<1x8x32xbf16> to vector<8x32xbf16>
      %c0_68 = arith.constant 0 : index
      %c0_69 = arith.constant 0 : index
      %113 = vector.load %arg5[%c0_68, %c0_69] : memref<32x32xbf16, #tpu.memory_space<vmem>>, vector<32x32xbf16>
      %cst_70 = arith.constant dense<0.000000e+00> : vector<8x32xf32>
      %114 = tpu.matmul %112, %113, %cst_70 {dimension_numbers = #tpu.dot_dimension_numbers<[1], [0], [0], [1], [0, 0, 1, 1], [], []>} : vector<8x32xbf16>, vector<32x32xbf16>, vector<8x32xf32> -> vector<8x32xf32>
      %c0_71 = arith.constant 0 : index
      %c0_72 = arith.constant 0 : index
      %115 = vector.load %arg6[%c0_71, %c0_72] : memref<1x32xf32, #tpu.memory_space<vmem>>, vector<1x32xf32>
      %116 = vector.broadcast %115 : vector<1x32xf32> to vector<8x32xf32>
      %117 = arith.addf %114, %116 : vector<8x32xf32>
      %c0_73 = arith.constant 0 : index
      %c0_74 = arith.constant 0 : index
      %118 = vector.load %arg7[%c0_73, %c0_74] : memref<32x32xbf16, #tpu.memory_space<vmem>>, vector<32x32xbf16>
      %cst_75 = arith.constant dense<0.000000e+00> : vector<8x32xf32>
      %119 = tpu.matmul %112, %118, %cst_75 {dimension_numbers = #tpu.dot_dimension_numbers<[1], [0], [0], [1], [0, 0, 1, 1], [], []>} : vector<8x32xbf16>, vector<32x32xbf16>, vector<8x32xf32> -> vector<8x32xf32>
      %c0_76 = arith.constant 0 : index
      %c0_77 = arith.constant 0 : index
      %120 = vector.load %arg8[%c0_76, %c0_77] : memref<1x32xf32, #tpu.memory_space<vmem>>, vector<1x32xf32>
      %121 = vector.broadcast %120 : vector<1x32xf32> to vector<8x32xf32>
      %122 = arith.addf %119, %121 : vector<8x32xf32>
      %123 = tpu.transpose %117, [1, 0] : vector<8x32xf32> -> vector<32x8xf32>
      %124 = arith.truncf %123 : vector<32x8xf32> to vector<32x8xbf16>
      %125 = arith.truncf %122 : vector<8x32xf32> to vector<8x32xbf16>
      %126 = vector.extract_strided_slice %124 {offsets = [0, 0], sizes = [8, 8], strides = [1, 1]} : vector<32x8xbf16> to vector<8x8xbf16>
      %c0_78 = arith.constant 0 : index
      %c0_79 = arith.constant 0 : index
      %c0_80 = arith.constant 0 : index
      %127 = vector.load %arg13[%c0_78, %c0_79, %c0_80] : memref<4x8x8xbf16, #tpu.memory_space<vmem>>, vector<1x8x8xbf16>
      %128 = vector.shape_cast %127 : vector<1x8x8xbf16> to vector<8x8xbf16>
      %129 = vector.shape_cast %126 : vector<8x8xbf16> to vector<1x8x8xbf16>
      tpu.vector_store %arg13[%c0_78, %c0_79, %c0_80], %129 {strides = array<i32>} : memref<4x8x8xbf16, #tpu.memory_space<vmem>>, vector<1x8x8xbf16>,
      %130 = vector.extract_strided_slice %125 {offsets = [0, 0], sizes = [8, 8], strides = [1, 1]} : vector<8x32xbf16> to vector<8x8xbf16>
      %c0_81 = arith.constant 0 : index
      %c0_82 = arith.constant 0 : index
      %c0_83 = arith.constant 0 : index
      %131 = vector.load %arg14[%c0_81, %c0_82, %c0_83] : memref<4x8x8xbf16, #tpu.memory_space<vmem>>, vector<1x8x8xbf16>
      %132 = vector.shape_cast %131 : vector<1x8x8xbf16> to vector<8x8xbf16>
      %133 = vector.shape_cast %130 : vector<8x8xbf16> to vector<1x8x8xbf16>
      tpu.vector_store %arg14[%c0_81, %c0_82, %c0_83], %133 {strides = array<i32>} : memref<4x8x8xbf16, #tpu.memory_space<vmem>>, vector<1x8x8xbf16>,
      %134 = vector.extract_strided_slice %124 {offsets = [8, 0], sizes = [8, 8], strides = [1, 1]} : vector<32x8xbf16> to vector<8x8xbf16>
      %c1_84 = arith.constant 1 : index
      %c0_85 = arith.constant 0 : index
      %c0_86 = arith.constant 0 : index
      %135 = vector.load %arg13[%c1_84, %c0_85, %c0_86] : memref<4x8x8xbf16, #tpu.memory_space<vmem>>, vector<1x8x8xbf16>
      %136 = vector.shape_cast %135 : vector<1x8x8xbf16> to vector<8x8xbf16>
      %137 = vector.shape_cast %134 : vector<8x8xbf16> to vector<1x8x8xbf16>
      tpu.vector_store %arg13[%c1_84, %c0_85, %c0_86], %137 {strides = array<i32>} : memref<4x8x8xbf16, #tpu.memory_space<vmem>>, vector<1x8x8xbf16>,
      %138 = vector.extract_strided_slice %125 {offsets = [0, 8], sizes = [8, 8], strides = [1, 1]} : vector<8x32xbf16> to vector<8x8xbf16>
      %c1_87 = arith.constant 1 : index
      %c0_88 = arith.constant 0 : index
      %c0_89 = arith.constant 0 : index
      %139 = vector.load %arg14[%c1_87, %c0_88, %c0_89] : memref<4x8x8xbf16, #tpu.memory_space<vmem>>, vector<1x8x8xbf16>
      %140 = vector.shape_cast %139 : vector<1x8x8xbf16> to vector<8x8xbf16>
      %141 = vector.shape_cast %138 : vector<8x8xbf16> to vector<1x8x8xbf16>
      tpu.vector_store %arg14[%c1_87, %c0_88, %c0_89], %141 {strides = array<i32>} : memref<4x8x8xbf16, #tpu.memory_space<vmem>>, vector<1x8x8xbf16>,
      %142 = vector.extract_strided_slice %124 {offsets = [16, 0], sizes = [8, 8], strides = [1, 1]} : vector<32x8xbf16> to vector<8x8xbf16>
      %c2_90 = arith.constant 2 : index
      %c0_91 = arith.constant 0 : index
      %c0_92 = arith.constant 0 : index
      %143 = vector.load %arg13[%c2_90, %c0_91, %c0_92] : memref<4x8x8xbf16, #tpu.memory_space<vmem>>, vector<1x8x8xbf16>
      %144 = vector.shape_cast %143 : vector<1x8x8xbf16> to vector<8x8xbf16>
      %145 = vector.shape_cast %142 : vector<8x8xbf16> to vector<1x8x8xbf16>
      tpu.vector_store %arg13[%c2_90, %c0_91, %c0_92], %145 {strides = array<i32>} : memref<4x8x8xbf16, #tpu.memory_space<vmem>>, vector<1x8x8xbf16>,
      %146 = vector.extract_strided_slice %125 {offsets = [0, 16], sizes = [8, 8], strides = [1, 1]} : vector<8x32xbf16> to vector<8x8xbf16>
      %c2_93 = arith.constant 2 : index
      %c0_94 = arith.constant 0 : index
      %c0_95 = arith.constant 0 : index
      %147 = vector.load %arg14[%c2_93, %c0_94, %c0_95] : memref<4x8x8xbf16, #tpu.memory_space<vmem>>, vector<1x8x8xbf16>
      %148 = vector.shape_cast %147 : vector<1x8x8xbf16> to vector<8x8xbf16>
      %149 = vector.shape_cast %146 : vector<8x8xbf16> to vector<1x8x8xbf16>
      tpu.vector_store %arg14[%c2_93, %c0_94, %c0_95], %149 {strides = array<i32>} : memref<4x8x8xbf16, #tpu.memory_space<vmem>>, vector<1x8x8xbf16>,
      %150 = vector.extract_strided_slice %124 {offsets = [24, 0], sizes = [8, 8], strides = [1, 1]} : vector<32x8xbf16> to vector<8x8xbf16>
      %c3_96 = arith.constant 3 : index
      %c0_97 = arith.constant 0 : index
      %c0_98 = arith.constant 0 : index
      %151 = vector.load %arg13[%c3_96, %c0_97, %c0_98] : memref<4x8x8xbf16, #tpu.memory_space<vmem>>, vector<1x8x8xbf16>
      %152 = vector.shape_cast %151 : vector<1x8x8xbf16> to vector<8x8xbf16>
      %153 = vector.shape_cast %150 : vector<8x8xbf16> to vector<1x8x8xbf16>
      tpu.vector_store %arg13[%c3_96, %c0_97, %c0_98], %153 {strides = array<i32>} : memref<4x8x8xbf16, #tpu.memory_space<vmem>>, vector<1x8x8xbf16>,
      %154 = vector.extract_strided_slice %125 {offsets = [0, 24], sizes = [8, 8], strides = [1, 1]} : vector<8x32xbf16> to vector<8x8xbf16>
      %c3_99 = arith.constant 3 : index
      %c0_100 = arith.constant 0 : index
      %c0_101 = arith.constant 0 : index
      %155 = vector.load %arg14[%c3_99, %c0_100, %c0_101] : memref<4x8x8xbf16, #tpu.memory_space<vmem>>, vector<1x8x8xbf16>
      %156 = vector.shape_cast %155 : vector<1x8x8xbf16> to vector<8x8xbf16>
      %157 = vector.shape_cast %154 : vector<8x8xbf16> to vector<1x8x8xbf16>
      tpu.vector_store %arg14[%c3_99, %c0_100, %c0_101], %157 {strides = array<i32>} : memref<4x8x8xbf16, #tpu.memory_space<vmem>>, vector<1x8x8xbf16>,
    } else {
    }
    %c8_i32 = arith.constant 8 : i32
    %3 = arith.muli %arg1, %c8_i32 : i32
    %4 = tpu.assume_multiple %3, 8 : i32
    %c0 = arith.constant 0 : index
    %5 = arith.index_cast %4 : i32 to index
    %c0_1 = arith.constant 0 : index
    %6 = vector.load %arg2[%c0, %5, %c0_1] : memref<1x8x32xbf16, #tpu.memory_space<vmem>>, vector<1x8x32xbf16>
    %7 = vector.shape_cast %6 : vector<1x8x32xbf16> to vector<8x32xbf16>
    %c0_2 = arith.constant 0 : index
    %c0_3 = arith.constant 0 : index
    %8 = vector.load %arg3[%c0_2, %c0_3] : memref<32x32xbf16, #tpu.memory_space<vmem>>, vector<32x32xbf16>
    %cst = arith.constant dense<0.000000e+00> : vector<8x32xf32>
    %9 = tpu.matmul %7, %8, %cst {dimension_numbers = #tpu.dot_dimension_numbers<[1], [0], [0], [1], [0, 0, 1, 1], [], []>} : vector<8x32xbf16>, vector<32x32xbf16>, vector<8x32xf32> -> vector<8x32xf32>
    %c0_4 = arith.constant 0 : index
    %c0_5 = arith.constant 0 : index
    %10 = vector.load %arg4[%c0_4, %c0_5] : memref<1x32xf32, #tpu.memory_space<vmem>>, vector<1x32xf32>
    %11 = vector.broadcast %10 : vector<1x32xf32> to vector<8x32xf32>
    %12 = arith.addf %9, %11 : vector<8x32xf32>
    %13 = arith.truncf %12 : vector<8x32xf32> to vector<8x32xbf16>
    %14 = vector.extract_strided_slice %13 {offsets = [0, 0], sizes = [8, 8], strides = [1, 1]} : vector<8x32xbf16> to vector<8x8xbf16>
    %c0_6 = arith.constant 0 : index
    %c0_7 = arith.constant 0 : index
    %c0_8 = arith.constant 0 : index
    %15 = vector.load %arg13[%c0_6, %c0_7, %c0_8] : memref<4x8x8xbf16, #tpu.memory_space<vmem>>, vector<1x8x8xbf16>
    %16 = vector.shape_cast %15 : vector<1x8x8xbf16> to vector<8x8xbf16>
    %cst_9 = arith.constant dense<0.000000e+00> : vector<8x8xf32>
    %17 = tpu.matmul %14, %16, %cst_9 {dimension_numbers = #tpu.dot_dimension_numbers<[1], [0], [0], [1], [0, 0, 1, 1], [], []>} : vector<8x8xbf16>, vector<8x8xbf16>, vector<8x8xf32> -> vector<8x8xf32>
    %cst_10 = arith.constant 0.353553385 : f32
    %18 = vector.broadcast %cst_10 : f32 to vector<8x8xf32>
    %19 = arith.mulf %17, %18 : vector<8x8xf32>
    %cst_11 = arith.constant dense<0xFF800000> : vector<8xf32>
    %20 = vector.multi_reduction <maximumf>, %19, %cst_11 [1] : vector<8x8xf32> to vector<8xf32>
    %21 = vector.shape_cast %20 : vector<8xf32> to vector<8x1xf32>
    %22 = vector.broadcast %21 : vector<8x1xf32> to vector<8x8xf32>
    %23 = arith.subf %19, %22 : vector<8x8xf32>
    %24 = math.exp %23 : vector<8x8xf32>
    %cst_12 = arith.constant dense<0.000000e+00> : vector<8xf32>
    %25 = vector.multi_reduction <add>, %24, %cst_12 [1] : vector<8x8xf32> to vector<8xf32>
    %26 = vector.shape_cast %25 : vector<8xf32> to vector<8x1xf32>
    %27 = tpu.reciprocal %26 {approx = true} : vector<8x1xf32> -> vector<8x1xf32>
    %28 = vector.broadcast %27 : vector<8x1xf32> to vector<8x8xf32>
    %29 = arith.mulf %24, %28 : vector<8x8xf32>
    %30 = arith.truncf %29 : vector<8x8xf32> to vector<8x8xbf16>
    %c0_13 = arith.constant 0 : index
    %c0_14 = arith.constant 0 : index
    %c0_15 = arith.constant 0 : index
    %31 = vector.load %arg14[%c0_13, %c0_14, %c0_15] : memref<4x8x8xbf16, #tpu.memory_space<vmem>>, vector<1x8x8xbf16>
    %32 = vector.shape_cast %31 : vector<1x8x8xbf16> to vector<8x8xbf16>
    %cst_16 = arith.constant dense<0.000000e+00> : vector<8x8xf32>
    %33 = tpu.matmul %30, %32, %cst_16 {dimension_numbers = #tpu.dot_dimension_numbers<[1], [0], [0], [1], [0, 0, 1, 1], [], []>} : vector<8x8xbf16>, vector<8x8xbf16>, vector<8x8xf32> -> vector<8x8xf32>
    %c0_17 = arith.constant 0 : index
    %c0_18 = arith.constant 0 : index
    %34 = vector.load %arg15[%c0_17, %c0_18] : memref<8x32xf32, #tpu.memory_space<vmem>>, vector<8x8xf32>
    tpu.vector_store %arg15[%c0_17, %c0_18], %33 {strides = array<i32>} : memref<8x32xf32, #tpu.memory_space<vmem>>, vector<8x8xf32>,
    %35 = vector.extract_strided_slice %13 {offsets = [0, 8], sizes = [8, 8], strides = [1, 1]} : vector<8x32xbf16> to vector<8x8xbf16>
    %c1 = arith.constant 1 : index
    %c0_19 = arith.constant 0 : index
    %c0_20 = arith.constant 0 : index
    %36 = vector.load %arg13[%c1, %c0_19, %c0_20] : memref<4x8x8xbf16, #tpu.memory_space<vmem>>, vector<1x8x8xbf16>
    %37 = vector.shape_cast %36 : vector<1x8x8xbf16> to vector<8x8xbf16>
    %cst_21 = arith.constant dense<0.000000e+00> : vector<8x8xf32>
    %38 = tpu.matmul %35, %37, %cst_21 {dimension_numbers = #tpu.dot_dimension_numbers<[1], [0], [0], [1], [0, 0, 1, 1], [], []>} : vector<8x8xbf16>, vector<8x8xbf16>, vector<8x8xf32> -> vector<8x8xf32>
    %cst_22 = arith.constant 0.353553385 : f32
    %39 = vector.broadcast %cst_22 : f32 to vector<8x8xf32>
    %40 = arith.mulf %38, %39 : vector<8x8xf32>
    %cst_23 = arith.constant dense<0xFF800000> : vector<8xf32>
    %41 = vector.multi_reduction <maximumf>, %40, %cst_23 [1] : vector<8x8xf32> to vector<8xf32>
    %42 = vector.shape_cast %41 : vector<8xf32> to vector<8x1xf32>
    %43 = vector.broadcast %42 : vector<8x1xf32> to vector<8x8xf32>
    %44 = arith.subf %40, %43 : vector<8x8xf32>
    %45 = math.exp %44 : vector<8x8xf32>
    %cst_24 = arith.constant dense<0.000000e+00> : vector<8xf32>
    %46 = vector.multi_reduction <add>, %45, %cst_24 [1] : vector<8x8xf32> to vector<8xf32>
    %47 = vector.shape_cast %46 : vector<8xf32> to vector<8x1xf32>
    %48 = tpu.reciprocal %47 {approx = true} : vector<8x1xf32> -> vector<8x1xf32>
    %49 = vector.broadcast %48 : vector<8x1xf32> to vector<8x8xf32>
    %50 = arith.mulf %45, %49 : vector<8x8xf32>
    %51 = arith.truncf %50 : vector<8x8xf32> to vector<8x8xbf16>
    %c1_25 = arith.constant 1 : index
    %c0_26 = arith.constant 0 : index
    %c0_27 = arith.constant 0 : index
    %52 = vector.load %arg14[%c1_25, %c0_26, %c0_27] : memref<4x8x8xbf16, #tpu.memory_space<vmem>>, vector<1x8x8xbf16>
    %53 = vector.shape_cast %52 : vector<1x8x8xbf16> to vector<8x8xbf16>
    %cst_28 = arith.constant dense<0.000000e+00> : vector<8x8xf32>
    %54 = tpu.matmul %51, %53, %cst_28 {dimension_numbers = #tpu.dot_dimension_numbers<[1], [0], [0], [1], [0, 0, 1, 1], [], []>} : vector<8x8xbf16>, vector<8x8xbf16>, vector<8x8xf32> -> vector<8x8xf32>
    %c0_29 = arith.constant 0 : index
    %c8 = arith.constant 8 : index
    %55 = vector.load %arg15[%c0_29, %c8] : memref<8x32xf32, #tpu.memory_space<vmem>>, vector<8x8xf32>
    tpu.vector_store %arg15[%c0_29, %c8], %54 {strides = array<i32>} : memref<8x32xf32, #tpu.memory_space<vmem>>, vector<8x8xf32>,
    %56 = vector.extract_strided_slice %13 {offsets = [0, 16], sizes = [8, 8], strides = [1, 1]} : vector<8x32xbf16> to vector<8x8xbf16>
    %c2 = arith.constant 2 : index
    %c0_30 = arith.constant 0 : index
    %c0_31 = arith.constant 0 : index
    %57 = vector.load %arg13[%c2, %c0_30, %c0_31] : memref<4x8x8xbf16, #tpu.memory_space<vmem>>, vector<1x8x8xbf16>
    %58 = vector.shape_cast %57 : vector<1x8x8xbf16> to vector<8x8xbf16>
    %cst_32 = arith.constant dense<0.000000e+00> : vector<8x8xf32>
    %59 = tpu.matmul %56, %58, %cst_32 {dimension_numbers = #tpu.dot_dimension_numbers<[1], [0], [0], [1], [0, 0, 1, 1], [], []>} : vector<8x8xbf16>, vector<8x8xbf16>, vector<8x8xf32> -> vector<8x8xf32>
    %cst_33 = arith.constant 0.353553385 : f32
    %60 = vector.broadcast %cst_33 : f32 to vector<8x8xf32>
    %61 = arith.mulf %59, %60 : vector<8x8xf32>
    %cst_34 = arith.constant dense<0xFF800000> : vector<8xf32>
    %62 = vector.multi_reduction <maximumf>, %61, %cst_34 [1] : vector<8x8xf32> to vector<8xf32>
    %63 = vector.shape_cast %62 : vector<8xf32> to vector<8x1xf32>
    %64 = vector.broadcast %63 : vector<8x1xf32> to vector<8x8xf32>
    %65 = arith.subf %61, %64 : vector<8x8xf32>
    %66 = math.exp %65 : vector<8x8xf32>
    %cst_35 = arith.constant dense<0.000000e+00> : vector<8xf32>
    %67 = vector.multi_reduction <add>, %66, %cst_35 [1] : vector<8x8xf32> to vector<8xf32>
    %68 = vector.shape_cast %67 : vector<8xf32> to vector<8x1xf32>
    %69 = tpu.reciprocal %68 {approx = true} : vector<8x1xf32> -> vector<8x1xf32>
    %70 = vector.broadcast %69 : vector<8x1xf32> to vector<8x8xf32>
    %71 = arith.mulf %66, %70 : vector<8x8xf32>
    %72 = arith.truncf %71 : vector<8x8xf32> to vector<8x8xbf16>
    %c2_36 = arith.constant 2 : index
    %c0_37 = arith.constant 0 : index
    %c0_38 = arith.constant 0 : index
    %73 = vector.load %arg14[%c2_36, %c0_37, %c0_38] : memref<4x8x8xbf16, #tpu.memory_space<vmem>>, vector<1x8x8xbf16>
    %74 = vector.shape_cast %73 : vector<1x8x8xbf16> to vector<8x8xbf16>
    %cst_39 = arith.constant dense<0.000000e+00> : vector<8x8xf32>
    %75 = tpu.matmul %72, %74, %cst_39 {dimension_numbers = #tpu.dot_dimension_numbers<[1], [0], [0], [1], [0, 0, 1, 1], [], []>} : vector<8x8xbf16>, vector<8x8xbf16>, vector<8x8xf32> -> vector<8x8xf32>
    %c0_40 = arith.constant 0 : index
    %c16 = arith.constant 16 : index
    %76 = vector.load %arg15[%c0_40, %c16] : memref<8x32xf32, #tpu.memory_space<vmem>>, vector<8x8xf32>
    tpu.vector_store %arg15[%c0_40, %c16], %75 {strides = array<i32>} : memref<8x32xf32, #tpu.memory_space<vmem>>, vector<8x8xf32>,
    %77 = vector.extract_strided_slice %13 {offsets = [0, 24], sizes = [8, 8], strides = [1, 1]} : vector<8x32xbf16> to vector<8x8xbf16>
    %c3 = arith.constant 3 : index
    %c0_41 = arith.constant 0 : index
    %c0_42 = arith.constant 0 : index
    %78 = vector.load %arg13[%c3, %c0_41, %c0_42] : memref<4x8x8xbf16, #tpu.memory_space<vmem>>, vector<1x8x8xbf16>
    %79 = vector.shape_cast %78 : vector<1x8x8xbf16> to vector<8x8xbf16>
    %cst_43 = arith.constant dense<0.000000e+00> : vector<8x8xf32>
    %80 = tpu.matmul %77, %79, %cst_43 {dimension_numbers = #tpu.dot_dimension_numbers<[1], [0], [0], [1], [0, 0, 1, 1], [], []>} : vector<8x8xbf16>, vector<8x8xbf16>, vector<8x8xf32> -> vector<8x8xf32>
    %cst_44 = arith.constant 0.353553385 : f32
    %81 = vector.broadcast %cst_44 : f32 to vector<8x8xf32>
    %82 = arith.mulf %80, %81 : vector<8x8xf32>
    %cst_45 = arith.constant dense<0xFF800000> : vector<8xf32>
    %83 = vector.multi_reduction <maximumf>, %82, %cst_45 [1] : vector<8x8xf32> to vector<8xf32>
    %84 = vector.shape_cast %83 : vector<8xf32> to vector<8x1xf32>
    %85 = vector.broadcast %84 : vector<8x1xf32> to vector<8x8xf32>
    %86 = arith.subf %82, %85 : vector<8x8xf32>
    %87 = math.exp %86 : vector<8x8xf32>
    %cst_46 = arith.constant dense<0.000000e+00> : vector<8xf32>
    %88 = vector.multi_reduction <add>, %87, %cst_46 [1] : vector<8x8xf32> to vector<8xf32>
    %89 = vector.shape_cast %88 : vector<8xf32> to vector<8x1xf32>
    %90 = tpu.reciprocal %89 {approx = true} : vector<8x1xf32> -> vector<8x1xf32>
    %91 = vector.broadcast %90 : vector<8x1xf32> to vector<8x8xf32>
    %92 = arith.mulf %87, %91 : vector<8x8xf32>
    %93 = arith.truncf %92 : vector<8x8xf32> to vector<8x8xbf16>
    %c3_47 = arith.constant 3 : index
    %c0_48 = arith.constant 0 : index
    %c0_49 = arith.constant 0 : index
    %94 = vector.load %arg14[%c3_47, %c0_48, %c0_49] : memref<4x8x8xbf16, #tpu.memory_space<vmem>>, vector<1x8x8xbf16>
    %95 = vector.shape_cast %94 : vector<1x8x8xbf16> to vector<8x8xbf16>
    %cst_50 = arith.constant dense<0.000000e+00> : vector<8x8xf32>
    %96 = tpu.matmul %93, %95, %cst_50 {dimension_numbers = #tpu.dot_dimension_numbers<[1], [0], [0], [1], [0, 0, 1, 1], [], []>} : vector<8x8xbf16>, vector<8x8xbf16>, vector<8x8xf32> -> vector<8x8xf32>
    %c0_51 = arith.constant 0 : index
    %c24 = arith.constant 24 : index
    %97 = vector.load %arg15[%c0_51, %c24] : memref<8x32xf32, #tpu.memory_space<vmem>>, vector<8x8xf32>
    tpu.vector_store %arg15[%c0_51, %c24], %96 {strides = array<i32>} : memref<8x32xf32, #tpu.memory_space<vmem>>, vector<8x8xf32>,
    %c0_52 = arith.constant 0 : index
    %c0_53 = arith.constant 0 : index
    %98 = vector.load %arg15[%c0_52, %c0_53] : memref<8x32xf32, #tpu.memory_space<vmem>>, vector<8x32xf32>
    %c0_54 = arith.constant 0 : index
    %c0_55 = arith.constant 0 : index
    %c0_56 = arith.constant 0 : index
    %99 = vector.load %arg11[%c0_54, %c0_55, %c0_56] : memref<1x8x32xf32, #tpu.memory_space<vmem>>, vector<1x8x32xf32>
    %100 = vector.shape_cast %99 : vector<1x8x32xf32> to vector<8x32xf32>
    %101 = vector.shape_cast %98 : vector<8x32xf32> to vector<1x8x32xf32>
    tpu.vector_store %arg11[%c0_54, %c0_55, %c0_56], %101 {strides = array<i32>} : memref<1x8x32xf32, #tpu.memory_space<vmem>>, vector<1x8x32xf32>,
    %102 = arith.truncf %98 : vector<8x32xf32> to vector<8x32xbf16>
    %c0_57 = arith.constant 0 : index
    %c0_58 = arith.constant 0 : index
    %103 = vector.load %arg9[%c0_57, %c0_58] : memref<32x32xbf16, #tpu.memory_space<vmem>>, vector<32x32xbf16>
    %cst_59 = arith.constant dense<0.000000e+00> : vector<8x32xf32>
    %104 = tpu.matmul %102, %103, %cst_59 {dimension_numbers = #tpu.dot_dimension_numbers<[1], [0], [0], [1], [0, 0, 1, 1], [], []>} : vector<8x32xbf16>, vector<32x32xbf16>, vector<8x32xf32> -> vector<8x32xf32>
    %c0_60 = arith.constant 0 : index
    %c0_61 = arith.constant 0 : index
    %105 = vector.load %arg10[%c0_60, %c0_61] : memref<1x32xf32, #tpu.memory_space<vmem>>, vector<1x32xf32>
    %106 = vector.broadcast %105 : vector<1x32xf32> to vector<8x32xf32>
    %107 = arith.addf %104, %106 : vector<8x32xf32>
    %c0_62 = arith.constant 0 : index
    %c0_63 = arith.constant 0 : index
    %c0_64 = arith.constant 0 : index
    %108 = vector.load %arg12[%c0_62, %c0_63, %c0_64] : memref<1x8x32xf32, #tpu.memory_space<vmem>>, vector<1x8x32xf32>
    %109 = vector.shape_cast %108 : vector<1x8x32xf32> to vector<8x32xf32>
    %110 = vector.shape_cast %107 : vector<8x32xf32> to vector<1x8x32xf32>
    tpu.vector_store %arg12[%c0_62, %c0_63, %c0_64], %110 {strides = array<i32>} : memref<1x8x32xf32, #tpu.memory_space<vmem>>, vector<1x8x32xf32>,
    return
  }
  func.func @transform_0(%arg0: i32, %arg1: i32) -> (i32, i32, i32) {
    %c0_i32 = arith.constant 0 : i32
    %c0_i32_0 = arith.constant 0 : i32
    %c0_i32_1 = arith.constant 0 : i32
    return %arg0, %c0_i32, %c0_i32_0 : i32, i32, i32
  }
  func.func @transform_1(%arg0: i32, %arg1: i32) -> (i32, i32) {
    %c0_i32 = arith.constant 0 : i32
    %c0_i32_0 = arith.constant 0 : i32
    %c0_i32_1 = arith.constant 0 : i32
    return %c0_i32, %c0_i32_0 : i32, i32
  }
  func.func @transform_2(%arg0: i32, %arg1: i32) -> (i32, i32) {
    %c0_i32 = arith.constant 0 : i32
    %c0_i32_0 = arith.constant 0 : i32
    %c0_i32_1 = arith.constant 0 : i32
    return %c0_i32, %c0_i32_0 : i32, i32
  }
  func.func @transform_3(%arg0: i32, %arg1: i32) -> (i32, i32) {
    %c0_i32 = arith.constant 0 : i32
    %c0_i32_0 = arith.constant 0 : i32
    %c0_i32_1 = arith.constant 0 : i32
    return %c0_i32, %c0_i32_0 : i32, i32
  }
  func.func @transform_4(%arg0: i32, %arg1: i32) -> (i32, i32) {
    %c0_i32 = arith.constant 0 : i32
    %c0_i32_0 = arith.constant 0 : i32
    %c0_i32_1 = arith.constant 0 : i32
    return %c0_i32, %c0_i32_0 : i32, i32
  }
  func.func @transform_5(%arg0: i32, %arg1: i32) -> (i32, i32) {
    %c0_i32 = arith.constant 0 : i32
    %c0_i32_0 = arith.constant 0 : i32
    %c0_i32_1 = arith.constant 0 : i32
    return %c0_i32, %c0_i32_0 : i32, i32
  }
  func.func @transform_6(%arg0: i32, %arg1: i32) -> (i32, i32) {
    %c0_i32 = arith.constant 0 : i32
    %c0_i32_0 = arith.constant 0 : i32
    %c0_i32_1 = arith.constant 0 : i32
    return %c0_i32, %c0_i32_0 : i32, i32
  }
  func.func @transform_7(%arg0: i32, %arg1: i32) -> (i32, i32) {
    %c0_i32 = arith.constant 0 : i32
    %c0_i32_0 = arith.constant 0 : i32
    %c0_i32_1 = arith.constant 0 : i32
    return %c0_i32, %c0_i32_0 : i32, i32
  }
  func.func @transform_8(%arg0: i32, %arg1: i32) -> (i32, i32) {
    %c0_i32 = arith.constant 0 : i32
    %c0_i32_0 = arith.constant 0 : i32
    %c0_i32_1 = arith.constant 0 : i32
    return %c0_i32, %c0_i32_0 : i32, i32
  }
  func.func @transform_9(%arg0: i32, %arg1: i32) -> (i32, i32, i32) {
    %c0_i32 = arith.constant 0 : i32
    %c0_i32_0 = arith.constant 0 : i32
    return %arg0, %arg1, %c0_i32 : i32, i32, i32
  }
  func.func @transform_10(%arg0: i32, %arg1: i32) -> (i32, i32, i32) {
    %c0_i32 = arith.constant 0 : i32
    %c0_i32_0 = arith.constant 0 : i32
    return %arg0, %arg1, %c0_i32 : i32, i32, i32
  }
}

</mosaic_0001>

<llo_original>
// kernel: tpu_custom_call.1
$region0: #{tpu_custom_call.1}
  #allocation0 [shape = 'u32[]', space=smem, size = 0x4, offset = 0x4, fixed_abs, tag = 'smem constant byte address 0x4 - core index']
  #allocation1 [shape = 'u32[144,128]{1,0:T(1,128)}', space=vmem, size = 0x12000, scoped, tag = 'internal scratch']
  #allocation2 [shape = 'bf16[4,8,8]{2,1,0:T(8,128)(2,1)}', space=vmem, size = 0x2000, scoped, tag = 'scratch operand']
  #allocation3 [shape = 'bf16[4,8,8]{2,1,0:T(8,128)(2,1)}', space=vmem, size = 0x2000, scoped, tag = 'scratch operand']
  #allocation4 [shape = 'f32[8,32]{1,0:T(8,128)}', space=vmem, size = 0x1000, scoped, tag = 'scratch operand']
  %s0 = inlined_call_operand.hbm [shape: bf16[2,8,32], index: 0, kind: input, shape index: {}]
  %s1 = inlined_call_operand.hbm [shape: bf16[32,32], index: 1, kind: input, shape index: {}]
  %s2 = inlined_call_operand.hbm [shape: f32[1,32], index: 2, kind: input, shape index: {}]
  %s3 = inlined_call_operand.hbm [shape: bf16[32,32], index: 3, kind: input, shape index: {}]
  %s4 = inlined_call_operand.hbm [shape: f32[1,32], index: 4, kind: input, shape index: {}]
  %s5 = inlined_call_operand.hbm [shape: bf16[32,32], index: 5, kind: input, shape index: {}]
  %s6 = inlined_call_operand.hbm [shape: f32[1,32], index: 6, kind: input, shape index: {}]
  %s7 = inlined_call_operand.hbm [shape: bf16[32,32], index: 7, kind: input, shape index: {}]
  %s8 = inlined_call_operand.hbm [shape: f32[1,32], index: 8, kind: input, shape index: {}]
  %s9 = inlined_call_operand.hbm [shape: f32[2,8,32], index: 9, kind: output, shape index: {0}]
  %s10 = inlined_call_operand.hbm [shape: f32[2,8,32], index: 10, kind: output, shape index: {1}]
  %11 = xla_tuple %s9, %s10
  %s12 = sld [smem:[#allocation0]]
  $region117: #{tpu_custom_call.1} parent=0
    _
  %s14 = ssub.s32 1, %s12
  %s15 = scalar_select 0, %s14, %s12
  $region1: #{tpu_custom_call.1} parent=0
    #allocation5 [shape = 'u8[4096]{0}', space=vmem, size = 0x1000, scoped, tag = 'input window, operand 0']
    #allocation6 [shape = 's32[2]{0}', space=sflag, size = 0x8, scoped, tag = 'scoped memory for tpu_custom_call.1']
    #allocation7 [shape = 's32[2]{0}', space=sflag, size = 0x8, scoped, tag = 'scoped memory for tpu_custom_call.1']
    #allocation8 [shape = 'u8[8192]{0}', space=vmem, size = 0x2000, scoped, tag = 'input window, operand 1, single buffered']
    #allocation9 [shape = 's32[1]{0}', space=sflag, size = 0x4, scoped, tag = 'scoped memory for tpu_custom_call.1']
    #allocation10 [shape = 'u8[512]{0}', space=vmem, size = 0x400, scoped, tag = 'input window, operand 2, single buffered']
    #allocation11 [shape = 'u8[8192]{0}', space=vmem, size = 0x2000, scoped, tag = 'input window, operand 3, single buffered']
    #allocation12 [shape = 's32[1]{0}', space=sflag, size = 0x4, scoped, tag = 'scoped memory for tpu_custom_call.1']
    #allocation13 [shape = 'u8[512]{0}', space=vmem, size = 0x400, scoped, tag = 'input window, operand 4, single buffered']
    #allocation14 [shape = 'u8[8192]{0}', space=vmem, size = 0x2000, scoped, tag = 'input window, operand 5, single buffered']
    #allocation15 [shape = 's32[1]{0}', space=sflag, size = 0x4, scoped, tag = 'scoped memory for tpu_custom_call.1']
    #allocation16 [shape = 'u8[512]{0}', space=vmem, size = 0x400, scoped, tag = 'input window, operand 6, single buffered']
    #allocation17 [shape = 'u8[8192]{0}', space=vmem, size = 0x2000, scoped, tag = 'input window, operand 7, single buffered']
    #allocation18 [shape = 's32[1]{0}', space=sflag, size = 0x4, scoped, tag = 'scoped memory for tpu_custom_call.1']
    #allocation19 [shape = 'u8[512]{0}', space=vmem, size = 0x400, scoped, tag = 'input window, operand 8, single buffered']
    #allocation20 [shape = 'u8[8192]{0}', space=vmem, size = 0x2000, scoped, tag = 'output window, operand 0']
    #allocation21 [shape = 'u8[8192]{0}', space=vmem, size = 0x2000, scoped, tag = 'output window, operand 1']
    #allocation22 [shape = 's32[2]{0}', space=sflag, size = 0x8, scoped, tag = 'scoped memory for tpu_custom_call.1']
    %16 = vsyncpa [#allocation6], 0
    %s17 = scalar_lea.sflag [#allocation6], 1
    %18 = vsyncpa %s17, 0
    %19 = vsyncpa [#allocation9], 0
    %20 = vsyncpa [#allocation12], 0
    %21 = vsyncpa [#allocation15], 0
    %22 = vsyncpa [#allocation18], 0
    %23 = vsyncpa [#allocation7], 0
    %s24 = scalar_lea.sflag [#allocation7], 1
    %25 = vsyncpa %s24, 0
    %26 = vsyncpa [#allocation22], 0
    %s27 = scalar_lea.sflag [#allocation22], 1
    %28 = vsyncpa %s27, 0
    loop: start=0, step=1, limit=4
    $region2: #{tpu_custom_call.1} parent=1 // loop_pre_header
      _
    $region3: #{tpu_custom_call.1} parent=1 // loop_header
      %s30 = sphi 0, %s34
      %p31 = scmp.ge.s32.totalorder %s30, 4
      %s37 = sphi 0, %s49
      %s38 = sphi 0, %s45
      %s39 = sphi 0, %s37
      %s40 = sphi 0, %s38
      %s41 = sphi 0, %s39
      %s42 = sphi 0, %s40
      %s52 = sphi 0, %s54
      %s55 = sphi 0, %s52
      %s56 = sphi 0, %s55
      %s72 = sphi 0, %s56
      %s76 = sphi 0, %s76
      %s78 = sphi 0, %s76
      %s79 = sphi 0, %s78
      %s93 = sphi 0, %s79
      %s97 = sphi 0, %s97
      %s99 = sphi 0, %s97
      %s100 = sphi 0, %s99
      %s114 = sphi 0, %s100
      %s118 = sphi 0, %s118
      %s120 = sphi 0, %s118
      %s121 = sphi 0, %s120
      %s135 = sphi 0, %s121
      %s139 = sphi 0, %s139
      %s141 = sphi 0, %s139
      %s142 = sphi 0, %s141
      %s156 = sphi 0, %s142
      %s160 = sphi 0, %s160
      %s162 = sphi 0, %s160
      %s163 = sphi 0, %s162
      %s177 = sphi 0, %s163
      %s181 = sphi 0, %s181
      %s183 = sphi 0, %s181
      %s184 = sphi 0, %s183
      %s198 = sphi 0, %s184
      %s202 = sphi 0, %s202
      %s204 = sphi 0, %s202
      %s205 = sphi 0, %s204
      %s219 = sphi 0, %s205
      %s223 = sphi 0, %s223
      %s225 = sphi 0, %s223
      %s226 = sphi 0, %s225
      %s240 = sphi 0, %s226
      %s248 = sphi 0, %s250
      %s251 = sphi 0, %s248
      %s252 = sphi 0, %s251
      %s268 = sphi 0, %s252
      %s276 = sphi 0, %s278
      %s279 = sphi 0, %s276
      %s280 = sphi 0, %s279
      %s296 = sphi 0, %s280
    $region4: #{tpu_custom_call.1} parent=1 // loop_header_branch
      %33 = sbr.rel (%p31) target = $region8
    $region5: #{tpu_custom_call.1} parent=1 // loop_body
      %s35 = ssub.s32 %s30, 1
      %s36 = ssub.s32 %s30, 2
      %s43 = sadd.s32 1, %s38
      %p44 = scmp.ge.s32.totalorder %s43, 1
      %s45 = scalar_select %p44, 0, %s43
      %s46 = sadd.s32 1, %s37
      %s47 = scalar_select %p44, %s46, %s37
      %p48 = scmp.ge.s32.totalorder %s47, 2
      %s49 = scalar_select %p48, 0, %s47
      %s50 = ssub.s32 %s37, %s49
      %p51 = scmp.eq.s32.totalorder %s50, 0
      %s53 = sadd.s32 %s52, 1
      %s54 = scalar_select %p51, %s52, %s53
      %p57 = pneg %p51
      %p58 = scmp.eq.s32.totalorder %s30, 1
      %p59 = por %p57, %p58
      %p60 = scmp.ne.s32.totalorder %s52, %s55
      %p61 = scmp.eq.s32.totalorder %s30, 0
      %p62 = por %p60, %p61
      %p63 = scmp.ne.s32.totalorder %s52, %s55
      %p64 = scmp.eq.s32.totalorder %s35, 1
      %p65 = por %p63, %p64
      %p66 = scmp.ne.s32.totalorder %s55, %s56
      %p67 = scmp.eq.s32.totalorder %s35, 0
      %p68 = por %p66, %p67
      %p69 = scmp.ne.s32.totalorder %s55, %s56
      %p70 = scmp.eq.s32.totalorder %s36, 1
      %p71 = por %p69, %p70
      %p73 = scmp.ne.s32.totalorder %s56, %s72
      %p74 = scmp.eq.s32.totalorder %s36, 0
      %p75 = por %p73, %p74
      %s77 = sadd.s32 %s76, 1
      %p80 = scmp.eq.s32.totalorder %s30, 1
      %p81 = scmp.ne.s32.totalorder %s76, %s78
      %p82 = scmp.eq.s32.totalorder %s30, 0
      %p83 = por %p81, %p82
      %p84 = scmp.ne.s32.totalorder %s76, %s78
      %p85 = scmp.eq.s32.totalorder %s35, 1
      %p86 = por %p84, %p85
      %p87 = scmp.ne.s32.totalorder %s78, %s79
      %p88 = scmp.eq.s32.totalorder %s35, 0
      %p89 = por %p87, %p88
      %p90 = scmp.ne.s32.totalorder %s78, %s79
      %p91 = scmp.eq.s32.totalorder %s36, 1
      %p92 = por %p90, %p91
      %p94 = scmp.ne.s32.totalorder %s79, %s93
      %p95 = scmp.eq.s32.totalorder %s36, 0
      %p96 = por %p94, %p95
      %s98 = sadd.s32 %s97, 1
      %p101 = scmp.eq.s32.totalorder %s30, 1
      %p102 = scmp.ne.s32.totalorder %s97, %s99
      %p103 = scmp.eq.s32.totalorder %s30, 0
      %p104 = por %p102, %p103
      %p105 = scmp.ne.s32.totalorder %s97, %s99
      %p106 = scmp.eq.s32.totalorder %s35, 1
      %p107 = por %p105, %p106
      %p108 = scmp.ne.s32.totalorder %s99, %s100
      %p109 = scmp.eq.s32.totalorder %s35, 0
      %p110 = por %p108, %p109
      %p111 = scmp.ne.s32.totalorder %s99, %s100
      %p112 = scmp.eq.s32.totalorder %s36, 1
      %p113 = por %p111, %p112
      %p115 = scmp.ne.s32.totalorder %s100, %s114
      %p116 = scmp.eq.s32.totalorder %s36, 0
      %p117 = por %p115, %p116
      %s119 = sadd.s32 %s118, 1
      %p122 = scmp.eq.s32.totalorder %s30, 1
      %p123 = scmp.ne.s32.totalorder %s118, %s120
      %p124 = scmp.eq.s32.totalorder %s30, 0
      %p125 = por %p123, %p124
      %p126 = scmp.ne.s32.totalorder %s118, %s120
      %p127 = scmp.eq.s32.totalorder %s35, 1
      %p128 = por %p126, %p127
      %p129 = scmp.ne.s32.totalorder %s120, %s121
      %p130 = scmp.eq.s32.totalorder %s35, 0
      %p131 = por %p129, %p130
      %p132 = scmp.ne.s32.totalorder %s120, %s121
      %p133 = scmp.eq.s32.totalorder %s36, 1
      %p134 = por %p132, %p133
      %p136 = scmp.ne.s32.totalorder %s121, %s135
      %p137 = scmp.eq.s32.totalorder %s36, 0
      %p138 = por %p136, %p137
      %s140 = sadd.s32 %s139, 1
      %p143 = scmp.eq.s32.totalorder %s30, 1
      %p144 = scmp.ne.s32.totalorder %s139, %s141
      %p145 = scmp.eq.s32.totalorder %s30, 0
      %p146 = por %p144, %p145
      %p147 = scmp.ne.s32.totalorder %s139, %s141
      %p148 = scmp.eq.s32.totalorder %s35, 1
      %p149 = por %p147, %p148
      %p150 = scmp.ne.s32.totalorder %s141, %s142
      %p151 = scmp.eq.s32.totalorder %s35, 0
      %p152 = por %p150, %p151
      %p153 = scmp.ne.s32.totalorder %s141, %s142
      %p154 = scmp.eq.s32.totalorder %s36, 1
      %p155 = por %p153, %p154
      %p157 = scmp.ne.s32.totalorder %s142, %s156
      %p158 = scmp.eq.s32.totalorder %s36, 0
      %p159 = por %p157, %p158
      %s161 = sadd.s32 %s160, 1
      %p164 = scmp.eq.s32.totalorder %s30, 1
      %p165 = scmp.ne.s32.totalorder %s160, %s162
      %p166 = scmp.eq.s32.totalorder %s30, 0
      %p167 = por %p165, %p166
      %p168 = scmp.ne.s32.totalorder %s160, %s162
      %p169 = scmp.eq.s32.totalorder %s35, 1
      %p170 = por %p168, %p169
      %p171 = scmp.ne.s32.totalorder %s162, %s163
      %p172 = scmp.eq.s32.totalorder %s35, 0
      %p173 = por %p171, %p172
      %p174 = scmp.ne.s32.totalorder %s162, %s163
      %p175 = scmp.eq.s32.totalorder %s36, 1
      %p176 = por %p174, %p175
      %p178 = scmp.ne.s32.totalorder %s163, %s177
      %p179 = scmp.eq.s32.totalorder %s36, 0
      %p180 = por %p178, %p179
      %s182 = sadd.s32 %s181, 1
      %p185 = scmp.eq.s32.totalorder %s30, 1
      %p186 = scmp.ne.s32.totalorder %s181, %s183
      %p187 = scmp.eq.s32.totalorder %s30, 0
      %p188 = por %p186, %p187
      %p189 = scmp.ne.s32.totalorder %s181, %s183
      %p190 = scmp.eq.s32.totalorder %s35, 1
      %p191 = por %p189, %p190
      %p192 = scmp.ne.s32.totalorder %s183, %s184
      %p193 = scmp.eq.s32.totalorder %s35, 0
      %p194 = por %p192, %p193
      %p195 = scmp.ne.s32.totalorder %s183, %s184
      %p196 = scmp.eq.s32.totalorder %s36, 1
      %p197 = por %p195, %p196
      %p199 = scmp.ne.s32.totalorder %s184, %s198
      %p200 = scmp.eq.s32.totalorder %s36, 0
      %p201 = por %p199, %p200
      %s203 = sadd.s32 %s202, 1
      %p206 = scmp.eq.s32.totalorder %s30, 1
      %p207 = scmp.ne.s32.totalorder %s202, %s204
      %p208 = scmp.eq.s32.totalorder %s30, 0
      %p209 = por %p207, %p208
      %p210 = scmp.ne.s32.totalorder %s202, %s204
      %p211 = scmp.eq.s32.totalorder %s35, 1
      %p212 = por %p210, %p211
      %p213 = scmp.ne.s32.totalorder %s204, %s205
      %p214 = scmp.eq.s32.totalorder %s35, 0
      %p215 = por %p213, %p214
      %p216 = scmp.ne.s32.totalorder %s204, %s205
      %p217 = scmp.eq.s32.totalorder %s36, 1
      %p218 = por %p216, %p217
      %p220 = scmp.ne.s32.totalorder %s205, %s219
      %p221 = scmp.eq.s32.totalorder %s36, 0
      %p222 = por %p220, %p221
      %s224 = sadd.s32 %s223, 1
      %p227 = scmp.eq.s32.totalorder %s30, 1
      %p228 = scmp.ne.s32.totalorder %s223, %s225
      %p229 = scmp.eq.s32.totalorder %s30, 0
      %p230 = por %p228, %p229
      %p231 = scmp.ne.s32.totalorder %s223, %s225
      %p232 = scmp.eq.s32.totalorder %s35, 1
      %p233 = por %p231, %p232
      %p234 = scmp.ne.s32.totalorder %s225, %s226
      %p235 = scmp.eq.s32.totalorder %s35, 0
      %p236 = por %p234, %p235
      %p237 = scmp.ne.s32.totalorder %s225, %s226
      %p238 = scmp.eq.s32.totalorder %s36, 1
      %p239 = por %p237, %p238
      %p241 = scmp.ne.s32.totalorder %s226, %s240
      %p242 = scmp.eq.s32.totalorder %s36, 0
      %p243 = por %p241, %p242
      %s244 = ssub.s32 %s37, %s49
      %s245 = ssub.s32 %s38, %s45
      %s246 = sor.u32 %s244, %s245
      %p247 = scmp.eq.s32.totalorder %s246, 0
      %s249 = sadd.s32 %s248, 1
      %s250 = scalar_select %p247, %s248, %s249
      %p253 = pneg %p247
      %p254 = scmp.eq.s32.totalorder %s30, 1
      %p255 = por %p253, %p254
      %p256 = scmp.ne.s32.totalorder %s248, %s251
      %p257 = scmp.eq.s32.totalorder %s30, 0
      %p258 = por %p256, %p257
      %p259 = scmp.ne.s32.totalorder %s248, %s251
      %p260 = scmp.eq.s32.totalorder %s35, 1
      %p261 = por %p259, %p260
      %p262 = scmp.ne.s32.totalorder %s251, %s252
      %p263 = scmp.eq.s32.totalorder %s35, 0
      %p264 = por %p262, %p263
      %p265 = scmp.ne.s32.totalorder %s251, %s252
      %p266 = scmp.eq.s32.totalorder %s36, 1
      %p267 = por %p265, %p266
      %p269 = scmp.ne.s32.totalorder %s252, %s268
      %p270 = scmp.eq.s32.totalorder %s36, 0
      %p271 = por %p269, %p270
      %s272 = ssub.s32 %s37, %s49
      %s273 = ssub.s32 %s38, %s45
      %s274 = sor.u32 %s272, %s273
      %p275 = scmp.eq.s32.totalorder %s274, 0
      %s277 = sadd.s32 %s276, 1
      %s278 = scalar_select %p275, %s276, %s277
      %p281 = pneg %p275
      %p282 = scmp.eq.s32.totalorder %s30, 1
      %p283 = por %p281, %p282
      %p284 = scmp.ne.s32.totalorder %s276, %s279
      %p285 = scmp.eq.s32.totalorder %s30, 0
      %p286 = por %p284, %p285
      %p287 = scmp.ne.s32.totalorder %s276, %s279
      %p288 = scmp.eq.s32.totalorder %s35, 1
      %p289 = por %p287, %p288
      %p290 = scmp.ne.s32.totalorder %s279, %s280
      %p291 = scmp.eq.s32.totalorder %s35, 0
      %p292 = por %p290, %p291
      %p293 = scmp.ne.s32.totalorder %s279, %s280
      %p294 = scmp.eq.s32.totalorder %s36, 1
      %p295 = por %p293, %p294
      %p297 = scmp.ne.s32.totalorder %s280, %s296
      %p298 = scmp.eq.s32.totalorder %s36, 0
      %p299 = por %p297, %p298
      %p300 = scmp.le.s32.totalorder 1, %s30
      %p301 = scmp.lt.s32.totalorder %s30, 3
      %p302 = pnand %p300, %p301
      %p303 = pneg %p302
      // Predicated region
      $region9: #{tpu_custom_call.1} parent=5 // pred_check
        _
      $region10: #{tpu_custom_call.1} parent=5 // pred_check_branch
        %305 = sbr.rel (%p302) target = $region12
      $region11: #{tpu_custom_call.1} parent=5 // pred_region
        %s306 = ssub.s32 %s30, 1
        // Predicated region
        $region13: #{tpu_custom_call.1} parent=11 // pred_check
          %p307 = pneg %p89
        $region14: #{tpu_custom_call.1} parent=11 // pred_check_branch
          %309 = sbr.rel (%p307) target = $region16
        $region15: #{tpu_custom_call.1} parent=11 // pred_region
          %s311 = ssub.s32 256, 256
          %312 = vsyncadd [#allocation9], %s311
          %s313 = sshll.u32 [#allocation8], 4
          %s314 = int_to_ptr.vmem [resolvable:$true] %s313
          %319 = dma.hbm_to_vmem [thread:$0]  %s1, 256, %s314, [#allocation9], 64, 64, 4
        $region16: #{tpu_custom_call.1} parent=11 // pred_fallthru
          _
        // Predicated region
        $region17: #{tpu_custom_call.1} parent=11 // pred_check
          %p320 = pneg %p110
        $region18: #{tpu_custom_call.1} parent=11 // pred_check_branch
          %322 = sbr.rel (%p320) target = $region20
        $region19: #{tpu_custom_call.1} parent=11 // pred_region
          %s324 = ssub.s32 16, 16
          %325 = vsyncadd [#allocation9], %s324
          %s327 = sshll.u32 [#allocation10], 4
          %s328 = int_to_ptr.vmem [resolvable:$true] %s327
          %330 = dma.hbm_to_vmem [thread:$0]  %s2, 16, %s328, [#allocation9]
        $region20: #{tpu_custom_call.1} parent=11 // pred_fallthru
          _
        // Predicated region
        $region21: #{tpu_custom_call.1} parent=11 // pred_check
          %p331 = pneg %p131
        $region22: #{tpu_custom_call.1} parent=11 // pred_check_branch
          %333 = sbr.rel (%p331) target = $region24
        $region23: #{tpu_custom_call.1} parent=11 // pred_region
          %s335 = ssub.s32 256, 256
          %336 = vsyncadd [#allocation12], %s335
          %s337 = sshll.u32 [#allocation11], 4
          %s338 = int_to_ptr.vmem [resolvable:$true] %s337
          %343 = dma.hbm_to_vmem [thread:$0]  %s3, 256, %s338, [#allocation12], 64, 64, 4
        $region24: #{tpu_custom_call.1} parent=11 // pred_fallthru
          _
        // Predicated region
        $region25: #{tpu_custom_call.1} parent=11 // pred_check
          %p344 = pneg %p152
        $region26: #{tpu_custom_call.1} parent=11 // pred_check_branch
          %346 = sbr.rel (%p344) target = $region28
        $region27: #{tpu_custom_call.1} parent=11 // pred_region
          %s348 = ssub.s32 16, 16
          %349 = vsyncadd [#allocation12], %s348
          %s351 = sshll.u32 [#allocation13], 4
          %s352 = int_to_ptr.vmem [resolvable:$true] %s351
          %354 = dma.hbm_to_vmem [thread:$0]  %s4, 16, %s352, [#allocation12]
        $region28: #{tpu_custom_call.1} parent=11 // pred_fallthru
          _
        // Predicated region
        $region29: #{tpu_custom_call.1} parent=11 // pred_check
          %p355 = pneg %p173
        $region30: #{tpu_custom_call.1} parent=11 // pred_check_branch
          %357 = sbr.rel (%p355) target = $region32
        $region31: #{tpu_custom_call.1} parent=11 // pred_region
          %s359 = ssub.s32 256, 256
          %360 = vsyncadd [#allocation15], %s359
          %s361 = sshll.u32 [#allocation14], 4
          %s362 = int_to_ptr.vmem [resolvable:$true] %s361
          %367 = dma.hbm_to_vmem [thread:$0]  %s5, 256, %s362, [#allocation15], 64, 64, 4
        $region32: #{tpu_custom_call.1} parent=11 // pred_fallthru
          _
        // Predicated region
        $region33: #{tpu_custom_call.1} parent=11 // pred_check
          %p368 = pneg %p194
        $region34: #{tpu_custom_call.1} parent=11 // pred_check_branch
          %370 = sbr.rel (%p368) target = $region36
        $region35: #{tpu_custom_call.1} parent=11 // pred_region
          %s372 = ssub.s32 16, 16
          %373 = vsyncadd [#allocation15], %s372
          %s375 = sshll.u32 [#allocation16], 4
          %s376 = int_to_ptr.vmem [resolvable:$true] %s375
          %378 = dma.hbm_to_vmem [thread:$0]  %s6, 16, %s376, [#allocation15]
        $region36: #{tpu_custom_call.1} parent=11 // pred_fallthru
          _
        // Predicated region
        $region37: #{tpu_custom_call.1} parent=11 // pred_check
          %p379 = pneg %p215
        $region38: #{tpu_custom_call.1} parent=11 // pred_check_branch
          %381 = sbr.rel (%p379) target = $region40
        $region39: #{tpu_custom_call.1} parent=11 // pred_region
          %s383 = ssub.s32 256, 256
          %384 = vsyncadd [#allocation18], %s383
          %s385 = sshll.u32 [#allocation17], 4
          %s386 = int_to_ptr.vmem [resolvable:$true] %s385
          %391 = dma.hbm_to_vmem [thread:$0]  %s7, 256, %s386, [#allocation18], 64, 64, 4
        $region40: #{tpu_custom_call.1} parent=11 // pred_fallthru
          _
        // Predicated region
        $region41: #{tpu_custom_call.1} parent=11 // pred_check
          %p392 = pneg %p236
        $region42: #{tpu_custom_call.1} parent=11 // pred_check_branch
          %394 = sbr.rel (%p392) target = $region44
        $region43: #{tpu_custom_call.1} parent=11 // pred_region
          %s396 = ssub.s32 16, 16
          %397 = vsyncadd [#allocation18], %s396
          %s399 = sshll.u32 [#allocation19], 4
          %s400 = int_to_ptr.vmem [resolvable:$true] %s399
          %402 = dma.hbm_to_vmem [thread:$0]  %s8, 16, %s400, [#allocation18]
        $region44: #{tpu_custom_call.1} parent=11 // pred_fallthru
          _
      $region12: #{tpu_custom_call.1} parent=5 // pred_fallthru
        _
      %p403 = scmp.lt.s32.totalorder %s30, 2
      // Predicated region
      $region45: #{tpu_custom_call.1} parent=5 // pred_check
        %p404 = pneg %p403
      $region46: #{tpu_custom_call.1} parent=5 // pred_check_branch
        %406 = sbr.rel (%p404) target = $region48
      $region47: #{tpu_custom_call.1} parent=5 // pred_region
        // Predicated region
        $region49: #{tpu_custom_call.1} parent=47 // pred_check
          %p407 = pneg %p62
        $region50: #{tpu_custom_call.1} parent=47 // pred_check_branch
          %409 = sbr.rel (%p407) target = $region52
        $region51: #{tpu_custom_call.1} parent=47 // pred_region
          %s410 = sand.u32 %s52, 1
          %s411 = scalar_lea.sflag [#allocation6], %s410
          %s412 = sand.u32 %s52, 1
          %s413 = smul.addr %s412, 4
          %s414 = scalar_lea.vmem [#allocation5], %s413
          %s416 = ssub.s32 64, 64
          %417 = vsyncadd %s411, %s416
          %s418 = smul.addr %s37, 64
          %s419 = scalar_lea.hbm %s0, %s418
          %s421 = sshll.u32 %s414, 4
          %s422 = int_to_ptr.vmem [resolvable:$true] %s421
          %424 = dma.hbm_to_vmem [thread:$0]  %s419, 64, %s422, %s411
        $region52: #{tpu_custom_call.1} parent=47 // pred_fallthru
          _
      $region48: #{tpu_custom_call.1} parent=5 // pred_fallthru
        _
      %p425 = scmp.le.s32.totalorder 1, %s30
      %p426 = scmp.lt.s32.totalorder %s30, 3
      %p427 = pnand %p425, %p426
      %p428 = pneg %p427
      // Predicated region
      $region53: #{tpu_custom_call.1} parent=5 // pred_check
        _
      $region54: #{tpu_custom_call.1} parent=5 // pred_check_branch
        %430 = sbr.rel (%p427) target = $region56
      $region55: #{tpu_custom_call.1} parent=5 // pred_region
        %s431 = ssub.s32 %s30, 1
        %s432 = sand.u32 %s55, 1
        %s433 = scalar_lea.sflag [#allocation6], %s432
        %s434 = sand.u32 %s55, 1
        %s435 = smul.addr %s434, 4
        %s436 = scalar_lea.vmem [#allocation5], %s435
        // Predicated region
        $region57: #{tpu_custom_call.1} parent=55 // pred_check
          %p437 = pneg %p68
        $region58: #{tpu_custom_call.1} parent=55 // pred_check_branch
          %439 = sbr.rel (%p437) target = $region60
        $region59: #{tpu_custom_call.1} parent=55 // pred_region
          %440 = dma.done %s433, 64
        $region60: #{tpu_custom_call.1} parent=55 // pred_fallthru
          _
        // Predicated region
        $region61: #{tpu_custom_call.1} parent=55 // pred_check
          %p441 = pneg %p89
        $region62: #{tpu_custom_call.1} parent=55 // pred_check_branch
          %443 = sbr.rel (%p441) target = $region64
        $region63: #{tpu_custom_call.1} parent=55 // pred_region
          %444 = dma.done [#allocation9], 256
        $region64: #{tpu_custom_call.1} parent=55 // pred_fallthru
          _
        // Predicated region
        $region65: #{tpu_custom_call.1} parent=55 // pred_check
          %p445 = pneg %p110
        $region66: #{tpu_custom_call.1} parent=55 // pred_check_branch
          %447 = sbr.rel (%p445) target = $region68
        $region67: #{tpu_custom_call.1} parent=55 // pred_region
          %448 = dma.done [#allocation9], 16
        $region68: #{tpu_custom_call.1} parent=55 // pred_fallthru
          _
        // Predicated region
        $region69: #{tpu_custom_call.1} parent=55 // pred_check
          %p449 = pneg %p131
        $region70: #{tpu_custom_call.1} parent=55 // pred_check_branch
          %451 = sbr.rel (%p449) target = $region72
        $region71: #{tpu_custom_call.1} parent=55 // pred_region
          %452 = dma.done [#allocation12], 256
        $region72: #{tpu_custom_call.1} parent=55 // pred_fallthru
          _
        // Predicated region
        $region73: #{tpu_custom_call.1} parent=55 // pred_check
          %p453 = pneg %p152
        $region74: #{tpu_custom_call.1} parent=55 // pred_check_branch
          %455 = sbr.rel (%p453) target = $region76
        $region75: #{tpu_custom_call.1} parent=55 // pred_region
          %456 = dma.done [#allocation12], 16
        $region76: #{tpu_custom_call.1} parent=55 // pred_fallthru
          _
        // Predicated region
        $region77: #{tpu_custom_call.1} parent=55 // pred_check
          %p457 = pneg %p173
        $region78: #{tpu_custom_call.1} parent=55 // pred_check_branch
          %459 = sbr.rel (%p457) target = $region80
        $region79: #{tpu_custom_call.1} parent=55 // pred_region
          %460 = dma.done [#allocation15], 256
        $region80: #{tpu_custom_call.1} parent=55 // pred_fallthru
          _
        // Predicated region
        $region81: #{tpu_custom_call.1} parent=55 // pred_check
          %p461 = pneg %p194
        $region82: #{tpu_custom_call.1} parent=55 // pred_check_branch
          %463 = sbr.rel (%p461) target = $region84
        $region83: #{tpu_custom_call.1} parent=55 // pred_region
          %464 = dma.done [#allocation15], 16
        $region84: #{tpu_custom_call.1} parent=55 // pred_fallthru
          _
        // Predicated region
        $region85: #{tpu_custom_call.1} parent=55 // pred_check
          %p465 = pneg %p215
        $region86: #{tpu_custom_call.1} parent=55 // pred_check_branch
          %467 = sbr.rel (%p465) target = $region88
        $region87: #{tpu_custom_call.1} parent=55 // pred_region
          %468 = dma.done [#allocation18], 256
        $region88: #{tpu_custom_call.1} parent=55 // pred_fallthru
          _
        // Predicated region
        $region89: #{tpu_custom_call.1} parent=55 // pred_check
          %p469 = pneg %p236
        $region90: #{tpu_custom_call.1} parent=55 // pred_check_branch
          %471 = sbr.rel (%p469) target = $region92
        $region91: #{tpu_custom_call.1} parent=55 // pred_region
          %472 = dma.done [#allocation18], 16
        $region92: #{tpu_custom_call.1} parent=55 // pred_fallthru
          _
        %s473 = sand.u32 %s55, 1
        %s474 = scalar_lea.sflag [#allocation6], %s473
        %s475 = sand.u32 %s55, 1
        %s476 = smul.addr %s475, 4
        %s477 = scalar_lea.vmem [#allocation5], %s476
        %p478 = pneg %p68
        %p479 = pneg %p65
        %p480 = pneg %p89
        %p481 = pneg %p86
        %p482 = pneg %p110
        %p483 = pneg %p107
        %p484 = pneg %p131
        %p485 = pneg %p128
        %p486 = pneg %p152
        %p487 = pneg %p149
        %p488 = pneg %p173
        %p489 = pneg %p170
        %p490 = pneg %p194
        %p491 = pneg %p191
        %p492 = pneg %p215
        %p493 = pneg %p212
        %p494 = pneg %p236
        %p495 = pneg %p233
        %p496 = pneg %p264
        %p497 = pneg %p261
        %s498 = sand.u32 %s251, 1
        %s499 = scalar_lea.sflag [#allocation7], %s498
        %s500 = sand.u32 %s251, 1
        %s501 = smul.addr %s500, 8
        %s502 = scalar_lea.vmem [#allocation20], %s501
        %p503 = pneg %p292
        %p504 = pneg %p289
        %s505 = sand.u32 %s279, 1
        %s506 = scalar_lea.sflag [#allocation22], %s505
        %s507 = sand.u32 %s279, 1
        %s508 = smul.addr %s507, 8
        %s509 = scalar_lea.vmem [#allocation21], %s508
        %p511 = scmp.eq.s32.totalorder %s40, 0
        // Predicated region
        $region93: #{tpu_custom_call.1} parent=55 // pred_check
          %p512 = pneg %p511
        $region94: #{tpu_custom_call.1} parent=55 // pred_check_branch
          %514 = sbr.rel (%p512) target = $region96
        $region95: #{tpu_custom_call.1} parent=55 // pred_region
          %v515 = vld [vmem:[%s436] sm:$0xf]
          %v516 = vld [vmem:[#allocation11] sm:$0xf]
          %v517 = vld [vmem:[#allocation11 + $0x4] sm:$0xf]
          %v518 = vld [vmem:[#allocation11 + $0x8] sm:$0xf]
          %v519 = vld [vmem:[#allocation11 + $0xc] sm:$0xf]
          %v520 = vld [vmem:[#allocation13] sm:$0x1]
          %v522 = vlaneseq
          %v523 = vshrl.u32 %v522, 7
          %v524 = vsub.s32 0, %v523
          %v525 = vrot.slane %v520, %v524
          %v531 = vunpack.c.l.b16 %v516
          %v532 = vunpack.c.l.b16 %v517
          %v533 = vunpack.c.l.b16 %v518
          %v534 = vunpack.c.l.b16 %v519
          %v535 = vpack.c.b16 %v532, %v531
          %v536 = vpack.c.b16 %v534, %v533
          %vm539 = vcmask 261120
          %v541 = vsel %vm539, %v515, 0
          %543 = vmatprep.subr.bf16.mxu0 0
          %544 = vmatpush1.bf16.msra.mxu0 %v535
          %545 = vmatprep.subr.bf16.mxu0 0
          %546 = vmatpush1.bf16.msra.mxu0 %v536
          %547 = vmatprep.subr.bf16.mxu0 0
          %548 = vmatpush1.bf16.msra.mxu0 0
          %549 = vmatprep.subr.bf16.mxu0 0
          %550 = vmatpush1.bf16.msra.mxu0 0
          %551 = vmatprep.subr.bf16.mxu0 0
          %552 = vmatpush1.bf16.msra.mxu0 0
          %553 = vmatprep.subr.bf16.mxu0 0
          %554 = vmatpush1.bf16.msra.mxu0 0
          %555 = vmatprep.subr.bf16.mxu0 0
          %556 = vmatpush1.bf16.msra.mxu0 0
          %557 = vmatprep.subr.bf16.mxu0 0
          %558 = vmatpush1.bf16.msra.mxu0 0
          %559 = vmatprep.subr.bf16.mxu0 0
          %560 = vmatpush1.bf16.msra.mxu0 0
          %561 = vmatprep.subr.bf16.mxu0 0
          %562 = vmatpush1.bf16.msra.mxu0 0
          %563 = vmatprep.subr.bf16.mxu0 0
          %564 = vmatpush1.bf16.msra.mxu0 0
          %565 = vmatprep.subr.bf16.mxu0 0
          %566 = vmatpush1.bf16.msra.mxu0 0
          %567 = vmatprep.subr.bf16.mxu0 0
          %568 = vmatpush1.bf16.msra.mxu0 0
          %569 = vmatprep.subr.bf16.mxu0 0
          %570 = vmatpush1.bf16.msra.mxu0 0
          %571 = vmatprep.subr.bf16.mxu0 0
          %572 = vmatpush1.bf16.msra.mxu0 0
          %573 = vmatprep.subr.bf16.mxu0 0
          %574 = vmatpush1.bf16.msra.mxu0 0
          %575 = vmatprep.mubr.bf16.mxu0 0
          %576 = vmatmul.mubr.bf16.gmra.mrb[0].mxu0 %v541
          %v577 = vpop.f32.mrb[0].mxu0
          %v578 = vadd.f32 %v525, %v577
          %v579 = vpop.f32.mrb[0].mxu0
          %v580 = vpop.f32.mrb[0].mxu0
          %v581 = vpop.f32.mrb[0].mxu0
          %582 = vdwg.mxu0
          %v583 = vld [vmem:[#allocation14] sm:$0xf]
          %v584 = vld [vmem:[#allocation14 + $0x4] sm:$0xf]
          %v585 = vld [vmem:[#allocation14 + $0x8] sm:$0xf]
          %v586 = vld [vmem:[#allocation14 + $0xc] sm:$0xf]
          %v587 = vld [vmem:[#allocation16] sm:$0x1]
          %v589 = vlaneseq
          %v590 = vshrl.u32 %v589, 7
          %v591 = vsub.s32 0, %v590
          %v592 = vrot.slane %v587, %v591
          %v598 = vunpack.c.l.b16 %v583
          %v599 = vunpack.c.l.b16 %v584
          %v600 = vunpack.c.l.b16 %v585
          %v601 = vunpack.c.l.b16 %v586
          %v602 = vpack.c.b16 %v599, %v598
          %v603 = vpack.c.b16 %v601, %v600
          %606 = vmatprep.subr.bf16.mxu0 0
          %607 = vmatpush1.bf16.msra.mxu0 %v602
          %608 = vmatprep.subr.bf16.mxu0 0
          %609 = vmatpush1.bf16.msra.mxu0 %v603
          %610 = vmatprep.subr.bf16.mxu0 0
          %611 = vmatpush1.bf16.msra.mxu0 0
          %612 = vmatprep.subr.bf16.mxu0 0
          %613 = vmatpush1.bf16.msra.mxu0 0
          %614 = vmatprep.subr.bf16.mxu0 0
          %615 = vmatpush1.bf16.msra.mxu0 0
          %616 = vmatprep.subr.bf16.mxu0 0
          %617 = vmatpush1.bf16.msra.mxu0 0
          %618 = vmatprep.subr.bf16.mxu0 0
          %619 = vmatpush1.bf16.msra.mxu0 0
          %620 = vmatprep.subr.bf16.mxu0 0
          %621 = vmatpush1.bf16.msra.mxu0 0
          %622 = vmatprep.subr.bf16.mxu0 0
          %623 = vmatpush1.bf16.msra.mxu0 0
          %624 = vmatprep.subr.bf16.mxu0 0
          %625 = vmatpush1.bf16.msra.mxu0 0
          %626 = vmatprep.subr.bf16.mxu0 0
          %627 = vmatpush1.bf16.msra.mxu0 0
          %628 = vmatprep.subr.bf16.mxu0 0
          %629 = vmatpush1.bf16.msra.mxu0 0
          %630 = vmatprep.subr.bf16.mxu0 0
          %631 = vmatpush1.bf16.msra.mxu0 0
          %632 = vmatprep.subr.bf16.mxu0 0
          %633 = vmatpush1.bf16.msra.mxu0 0
          %634 = vmatprep.subr.bf16.mxu0 0
          %635 = vmatpush1.bf16.msra.mxu0 0
          %636 = vmatprep.subr.bf16.mxu0 0
          %637 = vmatpush1.bf16.msra.mxu0 0
          %638 = vmatprep.mubr.bf16.mxu0 0
          %639 = vmatmul.mubr.bf16.gmra.mrb[0].mxu0 %v541
          %v640 = vpop.f32.mrb[0].mxu0
          %v641 = vadd.f32 %v592, %v640
          %v642 = vpop.f32.mrb[0].mxu0
          %v643 = vpop.f32.mrb[0].mxu0
          %v644 = vpop.f32.mrb[0].mxu0
          %645 = vdwg.mxu0
          %646 = vxpose.xlu0.b32.start [1/16] %v578, 128
          %647 = vxpose.xlu0.b32.cont [2/16] 0.0, 128
          %648 = vxpose.xlu0.b32.cont [3/16] 0.0, 128
          %649 = vxpose.xlu0.b32.cont [4/16] 0.0, 128
          %650 = vxpose.xlu0.b32.cont [5/16] 0.0, 128
          %651 = vxpose.xlu0.b32.cont [6/16] 0.0, 128
          %652 = vxpose.xlu0.b32.cont [7/16] 0.0, 128
          %653 = vxpose.xlu0.b32.cont [8/16] 0.0, 128
          %654 = vxpose.xlu0.b32.cont [9/16] 0.0, 128
          %655 = vxpose.xlu0.b32.cont [10/16] 0.0, 128
          %656 = vxpose.xlu0.b32.cont [11/16] 0.0, 128
          %657 = vxpose.xlu0.b32.cont [12/16] 0.0, 128
          %658 = vxpose.xlu0.b32.cont [13/16] 0.0, 128
          %659 = vxpose.xlu0.b32.cont [14/16] 0.0, 128
          %660 = vxpose.xlu0.b32.cont [15/16] 0.0, 128
          %661 = vxpose.xlu0.b32.end [16/16] 0.0, 128
          %v662 = vpop.trf.xlu0
          %v663 = vpop.trf.xlu0
          %v664 = vpop.trf.xlu0
          %v665 = vpop.trf.xlu0
          %v666 = vpop.trf.xlu0
          %v667 = vpop.trf.xlu0
          %v668 = vpop.trf.xlu0
          %v669 = vpop.trf.xlu0
          %v670 = vpop.trf.xlu0
          %v671 = vpop.trf.xlu0
          %v672 = vpop.trf.xlu0
          %v673 = vpop.trf.xlu0
          %v674 = vpop.trf.xlu0
          %v675 = vpop.trf.xlu0
          %v676 = vpop.trf.xlu0
          %v677 = vpop.trf.xlu0
          %v678 = vpack.c.bf16 %v663, %v662
          %v679 = vpack.c.bf16 %v665, %v664
          %v680 = vpack.c.bf16 %v641, %v641
          %vm681 = vcmask 60416
          %682 = vst.msk [vmem:[#allocation2] sm:$0xf] %vm681, %v678
          %683 = vst.msk [vmem:[#allocation3] sm:$0xf] %vm681, %v680
          %v685 = vunpack.c.h.b16 %v678
          %v686 = vpack.c.b16 %v685, %v685
          %s688 = scalar_lea.vmem [#allocation2], 4
          %689 = vst.msk [vmem:[%s688] sm:$0xf] %vm681, %v686
          %v691 = vunpack.c.l.b16 %v680
          %v692 = vpack.c.b16 %v691, %v691
          %693 = vrot.lane.b32.xlu0 %v692, 120
          %v694 = vpop.permute.xlu0 %693
          %s696 = scalar_lea.vmem [#allocation3], 4
          %697 = vst.msk [vmem:[%s696] sm:$0xf] %vm681, %v694
          %s698 = scalar_lea.vmem [#allocation2], 8
          %699 = vst.msk [vmem:[%s698] sm:$0xf] %vm681, %v679
          %700 = vrot.lane.b32.xlu0 %v692, 112
          %v701 = vpop.permute.xlu0 %700
          %s703 = scalar_lea.vmem [#allocation3], 8
          %704 = vst.msk [vmem:[%s703] sm:$0xf] %vm681, %v701
          %v706 = vunpack.c.h.b16 %v679
          %v707 = vpack.c.b16 %v706, %v706
          %s709 = scalar_lea.vmem [#allocation2], 12
          %710 = vst.msk [vmem:[%s709] sm:$0xf] %vm681, %v707
          %711 = vrot.lane.b32.xlu0 %v692, 104
          %v712 = vpop.permute.xlu0 %711
          %s714 = scalar_lea.vmem [#allocation3], 12
          %715 = vst.msk [vmem:[%s714] sm:$0xf] %vm681, %v712
        $region96: #{tpu_custom_call.1} parent=55 // pred_fallthru
          _
        %s716 = smul.u32 %s40, 8
        %s717 = sshra.s32 %s716, 3
        %s718 = sand.u32 %s716, 7
        %s719 = smul.addr %s717, 4
        %s720 = scalar_lea.vmem %s436, %s719 [#allocation5]
        %v721 = vld [vmem:[%s720] sm:$0xf]
        %v722 = vld [vmem:[#allocation8] sm:$0xf]
        %v723 = vld [vmem:[#allocation8 + $0x4] sm:$0xf]
        %v724 = vld [vmem:[#allocation8 + $0x8] sm:$0xf]
        %v725 = vld [vmem:[#allocation8 + $0xc] sm:$0xf]
        %v726 = vld [vmem:[#allocation10] sm:$0x1]
        %v728 = vlaneseq
        %v729 = vshrl.u32 %v728, 7
        %v730 = vsub.s32 0, %v729
        %v731 = vrot.slane %v726, %v730
        %v737 = vunpack.c.l.b16 %v722
        %v738 = vunpack.c.l.b16 %v723
        %v739 = vunpack.c.l.b16 %v724
        %v740 = vunpack.c.l.b16 %v725
        %v741 = vpack.c.b16 %v738, %v737
        %v742 = vpack.c.b16 %v740, %v739
        %vm745 = vcmask 261120
        %v747 = vsel %vm745, %v721, 0
        %749 = vmatprep.subr.bf16.mxu0 0
        %750 = vmatpush1.bf16.msra.mxu0 %v741
        %751 = vmatprep.subr.bf16.mxu0 0
        %752 = vmatpush1.bf16.msra.mxu0 %v742
        %753 = vmatprep.subr.bf16.mxu0 0
        %754 = vmatpush1.bf16.msra.mxu0 0
        %755 = vmatprep.subr.bf16.mxu0 0
        %756 = vmatpush1.bf16.msra.mxu0 0
        %757 = vmatprep.subr.bf16.mxu0 0
        %758 = vmatpush1.bf16.msra.mxu0 0
        %759 = vmatprep.subr.bf16.mxu0 0
        %760 = vmatpush1.bf16.msra.mxu0 0
        %761 = vmatprep.subr.bf16.mxu0 0
        %762 = vmatpush1.bf16.msra.mxu0 0
        %763 = vmatprep.subr.bf16.mxu0 0
        %764 = vmatpush1.bf16.msra.mxu0 0
        %765 = vmatprep.subr.bf16.mxu0 0
        %766 = vmatpush1.bf16.msra.mxu0 0
        %767 = vmatprep.subr.bf16.mxu0 0
        %768 = vmatpush1.bf16.msra.mxu0 0
        %769 = vmatprep.subr.bf16.mxu0 0
        %770 = vmatpush1.bf16.msra.mxu0 0
        %771 = vmatprep.subr.bf16.mxu0 0
        %772 = vmatpush1.bf16.msra.mxu0 0
        %773 = vmatprep.subr.bf16.mxu0 0
        %774 = vmatpush1.bf16.msra.mxu0 0
        %775 = vmatprep.subr.bf16.mxu0 0
        %776 = vmatpush1.bf16.msra.mxu0 0
        %777 = vmatprep.subr.bf16.mxu0 0
        %778 = vmatpush1.bf16.msra.mxu0 0
        %779 = vmatprep.subr.bf16.mxu0 0
        %780 = vmatpush1.bf16.msra.mxu0 0
        %781 = vmatprep.mubr.bf16.mxu0 0
        %782 = vmatmul.mubr.bf16.gmra.mrb[0].mxu0 %v747
        %v783 = vpop.f32.mrb[0].mxu0
        %v784 = vadd.f32 %v731, %v783
        %v785 = vpop.f32.mrb[0].mxu0
        %v786 = vpop.f32.mrb[0].mxu0
        %v787 = vpop.f32.mrb[0].mxu0
        %788 = vdwg.mxu0
        %v789 = vpack.c.bf16 %v784, %v784
        %v790 = vld [vmem:[#allocation2] sm:$0xf]
        %vm791 = vcmask 64512
        %v793 = vsel %vm791, %v789, 0
        %vm795 = vcmask 1043456
        %v797 = vsel %vm795, %v790, 0
        %799 = vmatprep.subr.bf16.mxu0 0
        %800 = vmatpush1.bf16.msra.mxu0 %v797
        %801 = vmatprep.subr.bf16.mxu0 0
        %802 = vmatpush1.bf16.msra.mxu0 0
        %803 = vmatprep.subr.bf16.mxu0 0
        %804 = vmatpush1.bf16.msra.mxu0 0
        %805 = vmatprep.subr.bf16.mxu0 0
        %806 = vmatpush1.bf16.msra.mxu0 0
        %807 = vmatprep.subr.bf16.mxu0 0
        %808 = vmatpush1.bf16.msra.mxu0 0
        %809 = vmatprep.subr.bf16.mxu0 0
        %810 = vmatpush1.bf16.msra.mxu0 0
        %811 = vmatprep.subr.bf16.mxu0 0
        %812 = vmatpush1.bf16.msra.mxu0 0
        %813 = vmatprep.subr.bf16.mxu0 0
        %814 = vmatpush1.bf16.msra.mxu0 0
        %815 = vmatprep.subr.bf16.mxu0 0
        %816 = vmatpush1.bf16.msra.mxu0 0
        %817 = vmatprep.subr.bf16.mxu0 0
        %818 = vmatpush1.bf16.msra.mxu0 0
        %819 = vmatprep.subr.bf16.mxu0 0
        %820 = vmatpush1.bf16.msra.mxu0 0
        %821 = vmatprep.subr.bf16.mxu0 0
        %822 = vmatpush1.bf16.msra.mxu0 0
        %823 = vmatprep.subr.bf16.mxu0 0
        %824 = vmatpush1.bf16.msra.mxu0 0
        %825 = vmatprep.subr.bf16.mxu0 0
        %826 = vmatpush1.bf16.msra.mxu0 0
        %827 = vmatprep.subr.bf16.mxu0 0
        %828 = vmatpush1.bf16.msra.mxu0 0
        %829 = vmatprep.subr.bf16.mxu0 0
        %830 = vmatpush1.bf16.msra.mxu0 0
        %831 = vmatprep.mubr.bf16.mxu0 0
        %832 = vmatmul.mubr.bf16.gmra.mrb[0].mxu0 %v793
        %v833 = vpop.f32.mrb[0].mxu0
        %v834 = vadd.f32 0.0, %v833
        %v835 = vpop.f32.mrb[0].mxu0
        %v836 = vpop.f32.mrb[0].mxu0
        %v837 = vpop.f32.mrb[0].mxu0
        %838 = vdwg.mxu0
        %v839 = vmul.f32 %v834, 0.35355338
        %v840 = vsel %vm791, %v839, -inf
        %841 = vmax.xlane.f32.xlu0 %v840
        %v842 = vpop.xlane.xlu0 %841
        %v843 = vsub.f32 %v839, %v842
        %v844 = vmul.f32 %v843, 1.442695
        %v845 = vpow.pop %v844
        %v846 = vsel %vm791, %v845, 0.0
        %847 = vadd.xlane.f32.xlu0 %v846
        %v848 = vpop.xlane.xlu0 %847
        %v849 = vrcp.pop %v848
        %v850 = vmul.f32 %v845, %v849
        %v851 = vpack.c.bf16 %v850, %v850
        %v852 = vld [vmem:[#allocation3] sm:$0xf]
        %v854 = vsel %vm791, %v851, 0
        %v857 = vsel %vm795, %v852, 0
        %859 = vmatprep.subr.bf16.mxu0 0
        %860 = vmatpush1.bf16.msra.mxu0 %v857
        %861 = vmatprep.subr.bf16.mxu0 0
        %862 = vmatpush1.bf16.msra.mxu0 0
        %863 = vmatprep.subr.bf16.mxu0 0
        %864 = vmatpush1.bf16.msra.mxu0 0
        %865 = vmatprep.subr.bf16.mxu0 0
        %866 = vmatpush1.bf16.msra.mxu0 0
        %867 = vmatprep.subr.bf16.mxu0 0
        %868 = vmatpush1.bf16.msra.mxu0 0
        %869 = vmatprep.subr.bf16.mxu0 0
        %870 = vmatpush1.bf16.msra.mxu0 0
        %871 = vmatprep.subr.bf16.mxu0 0
        %872 = vmatpush1.bf16.msra.mxu0 0
        %873 = vmatprep.subr.bf16.mxu0 0
        %874 = vmatpush1.bf16.msra.mxu0 0
        %875 = vmatprep.subr.bf16.mxu0 0
        %876 = vmatpush1.bf16.msra.mxu0 0
        %877 = vmatprep.subr.bf16.mxu0 0
        %878 = vmatpush1.bf16.msra.mxu0 0
        %879 = vmatprep.subr.bf16.mxu0 0
        %880 = vmatpush1.bf16.msra.mxu0 0
        %881 = vmatprep.subr.bf16.mxu0 0
        %882 = vmatpush1.bf16.msra.mxu0 0
        %883 = vmatprep.subr.bf16.mxu0 0
        %884 = vmatpush1.bf16.msra.mxu0 0
        %885 = vmatprep.subr.bf16.mxu0 0
        %886 = vmatpush1.bf16.msra.mxu0 0
        %887 = vmatprep.subr.bf16.mxu0 0
        %888 = vmatpush1.bf16.msra.mxu0 0
        %889 = vmatprep.subr.bf16.mxu0 0
        %890 = vmatpush1.bf16.msra.mxu0 0
        %891 = vmatprep.mubr.bf16.mxu0 0
        %892 = vmatmul.mubr.bf16.gmra.mrb[0].mxu0 %v854
        %v893 = vpop.f32.mrb[0].mxu0
        %v894 = vadd.f32 0.0, %v893
        %v895 = vpop.f32.mrb[0].mxu0
        %v896 = vpop.f32.mrb[0].mxu0
        %v897 = vpop.f32.mrb[0].mxu0
        %898 = vdwg.mxu0
        %899 = vst.msk [vmem:[#allocation4] sm:$0xff] %vm791, %v894
        %s900 = scalar_lea.vmem [#allocation2], 4
        %v901 = vld [vmem:[%s900] sm:$0xf]
        %903 = vrot.lane.b32.xlu0 %v789, 120
        %v904 = vpop.permute.xlu0 %903
        %v906 = vsel %vm791, %v904, 0
        %v909 = vsel %vm795, %v901, 0
        %911 = vmatprep.subr.bf16.mxu0 0
        %912 = vmatpush1.bf16.msra.mxu0 %v909
        %913 = vmatprep.subr.bf16.mxu0 0
        %914 = vmatpush1.bf16.msra.mxu0 0
        %915 = vmatprep.subr.bf16.mxu0 0
        %916 = vmatpush1.bf16.msra.mxu0 0
        %917 = vmatprep.subr.bf16.mxu0 0
        %918 = vmatpush1.bf16.msra.mxu0 0
        %919 = vmatprep.subr.bf16.mxu0 0
        %920 = vmatpush1.bf16.msra.mxu0 0
        %921 = vmatprep.subr.bf16.mxu0 0
        %922 = vmatpush1.bf16.msra.mxu0 0
        %923 = vmatprep.subr.bf16.mxu0 0
        %924 = vmatpush1.bf16.msra.mxu0 0
        %925 = vmatprep.subr.bf16.mxu0 0
        %926 = vmatpush1.bf16.msra.mxu0 0
        %927 = vmatprep.subr.bf16.mxu0 0
        %928 = vmatpush1.bf16.msra.mxu0 0
        %929 = vmatprep.subr.bf16.mxu0 0
        %930 = vmatpush1.bf16.msra.mxu0 0
        %931 = vmatprep.subr.bf16.mxu0 0
        %932 = vmatpush1.bf16.msra.mxu0 0
        %933 = vmatprep.subr.bf16.mxu0 0
        %934 = vmatpush1.bf16.msra.mxu0 0
        %935 = vmatprep.subr.bf16.mxu0 0
        %936 = vmatpush1.bf16.msra.mxu0 0
        %937 = vmatprep.subr.bf16.mxu0 0
        %938 = vmatpush1.bf16.msra.mxu0 0
        %939 = vmatprep.subr.bf16.mxu0 0
        %940 = vmatpush1.bf16.msra.mxu0 0
        %941 = vmatprep.subr.bf16.mxu0 0
        %942 = vmatpush1.bf16.msra.mxu0 0
        %943 = vmatprep.mubr.bf16.mxu0 0
        %944 = vmatmul.mubr.bf16.gmra.mrb[0].mxu0 %v906
        %v945 = vpop.f32.mrb[0].mxu0
        %v946 = vadd.f32 0.0, %v945
        %v947 = vpop.f32.mrb[0].mxu0
        %v948 = vpop.f32.mrb[0].mxu0
        %v949 = vpop.f32.mrb[0].mxu0
        %950 = vdwg.mxu0
        %v951 = vmul.f32 %v946, 0.35355338
        %v952 = vsel %vm791, %v951, -inf
        %953 = vmax.xlane.f32.xlu0 %v952
        %v954 = vpop.xlane.xlu0 %953
        %v955 = vsub.f32 %v951, %v954
        %v956 = vmul.f32 %v955, 1.442695
        %v957 = vpow.pop %v956
        %v958 = vsel %vm791, %v957, 0.0
        %959 = vadd.xlane.f32.xlu0 %v958
        %v960 = vpop.xlane.xlu0 %959
        %v961 = vrcp.pop %v960
        %v962 = vmul.f32 %v957, %v961
        %v963 = vpack.c.bf16 %v962, %v962
        %s964 = scalar_lea.vmem [#allocation3], 4
        %v965 = vld [vmem:[%s964] sm:$0xf]
        %v967 = vsel %vm791, %v963, 0
        %v970 = vsel %vm795, %v965, 0
        %972 = vmatprep.subr.bf16.mxu0 0
        %973 = vmatpush1.bf16.msra.mxu0 %v970
        %974 = vmatprep.subr.bf16.mxu0 0
        %975 = vmatpush1.bf16.msra.mxu0 0
        %976 = vmatprep.subr.bf16.mxu0 0
        %977 = vmatpush1.bf16.msra.mxu0 0
        %978 = vmatprep.subr.bf16.mxu0 0
        %979 = vmatpush1.bf16.msra.mxu0 0
        %980 = vmatprep.subr.bf16.mxu0 0
        %981 = vmatpush1.bf16.msra.mxu0 0
        %982 = vmatprep.subr.bf16.mxu0 0
        %983 = vmatpush1.bf16.msra.mxu0 0
        %984 = vmatprep.subr.bf16.mxu0 0
        %985 = vmatpush1.bf16.msra.mxu0 0
        %986 = vmatprep.subr.bf16.mxu0 0
        %987 = vmatpush1.bf16.msra.mxu0 0
        %988 = vmatprep.subr.bf16.mxu0 0
        %989 = vmatpush1.bf16.msra.mxu0 0
        %990 = vmatprep.subr.bf16.mxu0 0
        %991 = vmatpush1.bf16.msra.mxu0 0
        %992 = vmatprep.subr.bf16.mxu0 0
        %993 = vmatpush1.bf16.msra.mxu0 0
        %994 = vmatprep.subr.bf16.mxu0 0
        %995 = vmatpush1.bf16.msra.mxu0 0
        %996 = vmatprep.subr.bf16.mxu0 0
        %997 = vmatpush1.bf16.msra.mxu0 0
        %998 = vmatprep.subr.bf16.mxu0 0
        %999 = vmatpush1.bf16.msra.mxu0 0
        %1000 = vmatprep.subr.bf16.mxu0 0
        %1001 = vmatpush1.bf16.msra.mxu0 0
        %1002 = vmatprep.subr.bf16.mxu0 0
        %1003 = vmatpush1.bf16.msra.mxu0 0
        %1004 = vmatprep.mubr.bf16.mxu0 0
        %1005 = vmatmul.mubr.bf16.gmra.mrb[0].mxu0 %v967
        %v1006 = vpop.f32.mrb[0].mxu0
        %v1007 = vadd.f32 0.0, %v1006
        %v1008 = vpop.f32.mrb[0].mxu0
        %v1009 = vpop.f32.mrb[0].mxu0
        %v1010 = vpop.f32.mrb[0].mxu0
        %1011 = vdwg.mxu0
        %1013 = vrot.lane.b32.xlu0 %v1007, 8
        %v1014 = vpop.permute.xlu0 %1013
        %vm1016 = vcmask 130112
        %1017 = vst.msk [vmem:[#allocation4] sm:$0xff] %vm1016, %v1014
        %s1018 = scalar_lea.vmem [#allocation2], 8
        %v1019 = vld [vmem:[%s1018] sm:$0xf]
        %1020 = vrot.lane.b32.xlu0 %v789, 112
        %v1021 = vpop.permute.xlu0 %1020
        %v1023 = vsel %vm791, %v1021, 0
        %v1026 = vsel %vm795, %v1019, 0
        %1028 = vmatprep.subr.bf16.mxu0 0
        %1029 = vmatpush1.bf16.msra.mxu0 %v1026
        %1030 = vmatprep.subr.bf16.mxu0 0
        %1031 = vmatpush1.bf16.msra.mxu0 0
        %1032 = vmatprep.subr.bf16.mxu0 0
        %1033 = vmatpush1.bf16.msra.mxu0 0
        %1034 = vmatprep.subr.bf16.mxu0 0
        %1035 = vmatpush1.bf16.msra.mxu0 0
        %1036 = vmatprep.subr.bf16.mxu0 0
        %1037 = vmatpush1.bf16.msra.mxu0 0
        %1038 = vmatprep.subr.bf16.mxu0 0
        %1039 = vmatpush1.bf16.msra.mxu0 0
        %1040 = vmatprep.subr.bf16.mxu0 0
        %1041 = vmatpush1.bf16.msra.mxu0 0
        %1042 = vmatprep.subr.bf16.mxu0 0
        %1043 = vmatpush1.bf16.msra.mxu0 0
        %1044 = vmatprep.subr.bf16.mxu0 0
        %1045 = vmatpush1.bf16.msra.mxu0 0
        %1046 = vmatprep.subr.bf16.mxu0 0
        %1047 = vmatpush1.bf16.msra.mxu0 0
        %1048 = vmatprep.subr.bf16.mxu0 0
        %1049 = vmatpush1.bf16.msra.mxu0 0
        %1050 = vmatprep.subr.bf16.mxu0 0
        %1051 = vmatpush1.bf16.msra.mxu0 0
        %1052 = vmatprep.subr.bf16.mxu0 0
        %1053 = vmatpush1.bf16.msra.mxu0 0
        %1054 = vmatprep.subr.bf16.mxu0 0
        %1055 = vmatpush1.bf16.msra.mxu0 0
        %1056 = vmatprep.subr.bf16.mxu0 0
        %1057 = vmatpush1.bf16.msra.mxu0 0
        %1058 = vmatprep.subr.bf16.mxu0 0
        %1059 = vmatpush1.bf16.msra.mxu0 0
        %1060 = vmatprep.mubr.bf16.mxu0 0
        %1061 = vmatmul.mubr.bf16.gmra.mrb[0].mxu0 %v1023
        %v1062 = vpop.f32.mrb[0].mxu0
        %v1063 = vadd.f32 0.0, %v1062
        %v1064 = vpop.f32.mrb[0].mxu0
        %v1065 = vpop.f32.mrb[0].mxu0
        %v1066 = vpop.f32.mrb[0].mxu0
        %1067 = vdwg.mxu0
        %v1068 = vmul.f32 %v1063, 0.35355338
        %v1069 = vsel %vm791, %v1068, -inf
        %1070 = vmax.xlane.f32.xlu0 %v1069
        %v1071 = vpop.xlane.xlu0 %1070
        %v1072 = vsub.f32 %v1068, %v1071
        %v1073 = vmul.f32 %v1072, 1.442695
        %v1074 = vpow.pop %v1073
        %v1075 = vsel %vm791, %v1074, 0.0
        %1076 = vadd.xlane.f32.xlu0 %v1075
        %v1077 = vpop.xlane.xlu0 %1076
        %v1078 = vrcp.pop %v1077
        %v1079 = vmul.f32 %v1074, %v1078
        %v1080 = vpack.c.bf16 %v1079, %v1079
        %s1081 = scalar_lea.vmem [#allocation3], 8
        %v1082 = vld [vmem:[%s1081] sm:$0xf]
        %v1084 = vsel %vm791, %v1080, 0
        %v1087 = vsel %vm795, %v1082, 0
        %1089 = vmatprep.subr.bf16.mxu0 0
        %1090 = vmatpush1.bf16.msra.mxu0 %v1087
        %1091 = vmatprep.subr.bf16.mxu0 0
        %1092 = vmatpush1.bf16.msra.mxu0 0
        %1093 = vmatprep.subr.bf16.mxu0 0
        %1094 = vmatpush1.bf16.msra.mxu0 0
        %1095 = vmatprep.subr.bf16.mxu0 0
        %1096 = vmatpush1.bf16.msra.mxu0 0
        %1097 = vmatprep.subr.bf16.mxu0 0
        %1098 = vmatpush1.bf16.msra.mxu0 0
        %1099 = vmatprep.subr.bf16.mxu0 0
        %1100 = vmatpush1.bf16.msra.mxu0 0
        %1101 = vmatprep.subr.bf16.mxu0 0
        %1102 = vmatpush1.bf16.msra.mxu0 0
        %1103 = vmatprep.subr.bf16.mxu0 0
        %1104 = vmatpush1.bf16.msra.mxu0 0
        %1105 = vmatprep.subr.bf16.mxu0 0
        %1106 = vmatpush1.bf16.msra.mxu0 0
        %1107 = vmatprep.subr.bf16.mxu0 0
        %1108 = vmatpush1.bf16.msra.mxu0 0
        %1109 = vmatprep.subr.bf16.mxu0 0
        %1110 = vmatpush1.bf16.msra.mxu0 0
        %1111 = vmatprep.subr.bf16.mxu0 0
        %1112 = vmatpush1.bf16.msra.mxu0 0
        %1113 = vmatprep.subr.bf16.mxu0 0
        %1114 = vmatpush1.bf16.msra.mxu0 0
        %1115 = vmatprep.subr.bf16.mxu0 0
        %1116 = vmatpush1.bf16.msra.mxu0 0
        %1117 = vmatprep.subr.bf16.mxu0 0
        %1118 = vmatpush1.bf16.msra.mxu0 0
        %1119 = vmatprep.subr.bf16.mxu0 0
        %1120 = vmatpush1.bf16.msra.mxu0 0
        %1121 = vmatprep.mubr.bf16.mxu0 0
        %1122 = vmatmul.mubr.bf16.gmra.mrb[0].mxu0 %v1084
        %v1123 = vpop.f32.mrb[0].mxu0
        %v1124 = vadd.f32 0.0, %v1123
        %v1125 = vpop.f32.mrb[0].mxu0
        %v1126 = vpop.f32.mrb[0].mxu0
        %v1127 = vpop.f32.mrb[0].mxu0
        %1128 = vdwg.mxu0
        %1130 = vrot.lane.b32.xlu0 %v1124, 16
        %v1131 = vpop.permute.xlu0 %1130
        %vm1133 = vcmask 195712
        %1134 = vst.msk [vmem:[#allocation4] sm:$0xff] %vm1133, %v1131
        %s1135 = scalar_lea.vmem [#allocation2], 12
        %v1136 = vld [vmem:[%s1135] sm:$0xf]
        %1137 = vrot.lane.b32.xlu0 %v789, 104
        %v1138 = vpop.permute.xlu0 %1137
        %v1140 = vsel %vm791, %v1138, 0
        %v1143 = vsel %vm795, %v1136, 0
        %1145 = vmatprep.subr.bf16.mxu0 0
        %1146 = vmatpush1.bf16.msra.mxu0 %v1143
        %1147 = vmatprep.subr.bf16.mxu0 0
        %1148 = vmatpush1.bf16.msra.mxu0 0
        %1149 = vmatprep.subr.bf16.mxu0 0
        %1150 = vmatpush1.bf16.msra.mxu0 0
        %1151 = vmatprep.subr.bf16.mxu0 0
        %1152 = vmatpush1.bf16.msra.mxu0 0
        %1153 = vmatprep.subr.bf16.mxu0 0
        %1154 = vmatpush1.bf16.msra.mxu0 0
        %1155 = vmatprep.subr.bf16.mxu0 0
        %1156 = vmatpush1.bf16.msra.mxu0 0
        %1157 = vmatprep.subr.bf16.mxu0 0
        %1158 = vmatpush1.bf16.msra.mxu0 0
        %1159 = vmatprep.subr.bf16.mxu0 0
        %1160 = vmatpush1.bf16.msra.mxu0 0
        %1161 = vmatprep.subr.bf16.mxu0 0
        %1162 = vmatpush1.bf16.msra.mxu0 0
        %1163 = vmatprep.subr.bf16.mxu0 0
        %1164 = vmatpush1.bf16.msra.mxu0 0
        %1165 = vmatprep.subr.bf16.mxu0 0
        %1166 = vmatpush1.bf16.msra.mxu0 0
        %1167 = vmatprep.subr.bf16.mxu0 0
        %1168 = vmatpush1.bf16.msra.mxu0 0
        %1169 = vmatprep.subr.bf16.mxu0 0
        %1170 = vmatpush1.bf16.msra.mxu0 0
        %1171 = vmatprep.subr.bf16.mxu0 0
        %1172 = vmatpush1.bf16.msra.mxu0 0
        %1173 = vmatprep.subr.bf16.mxu0 0
        %1174 = vmatpush1.bf16.msra.mxu0 0
        %1175 = vmatprep.subr.bf16.mxu0 0
        %1176 = vmatpush1.bf16.msra.mxu0 0
        %1177 = vmatprep.mubr.bf16.mxu0 0
        %1178 = vmatmul.mubr.bf16.gmra.mrb[0].mxu0 %v1140
        %v1179 = vpop.f32.mrb[0].mxu0
        %v1180 = vadd.f32 0.0, %v1179
        %v1181 = vpop.f32.mrb[0].mxu0
        %v1182 = vpop.f32.mrb[0].mxu0
        %v1183 = vpop.f32.mrb[0].mxu0
        %1184 = vdwg.mxu0
        %v1185 = vmul.f32 %v1180, 0.35355338
        %v1186 = vsel %vm791, %v1185, -inf
        %1187 = vmax.xlane.f32.xlu0 %v1186
        %v1188 = vpop.xlane.xlu0 %1187
        %v1189 = vsub.f32 %v1185, %v1188
        %v1190 = vmul.f32 %v1189, 1.442695
        %v1191 = vpow.pop %v1190
        %v1192 = vsel %vm791, %v1191, 0.0
        %1193 = vadd.xlane.f32.xlu0 %v1192
        %v1194 = vpop.xlane.xlu0 %1193
        %v1195 = vrcp.pop %v1194
        %v1196 = vmul.f32 %v1191, %v1195
        %v1197 = vpack.c.bf16 %v1196, %v1196
        %s1198 = scalar_lea.vmem [#allocation3], 12
        %v1199 = vld [vmem:[%s1198] sm:$0xf]
        %v1201 = vsel %vm791, %v1197, 0
        %v1204 = vsel %vm795, %v1199, 0
        %1206 = vmatprep.subr.bf16.mxu0 0
        %1207 = vmatpush1.bf16.msra.mxu0 %v1204
        %1208 = vmatprep.subr.bf16.mxu0 0
        %1209 = vmatpush1.bf16.msra.mxu0 0
        %1210 = vmatprep.subr.bf16.mxu0 0
        %1211 = vmatpush1.bf16.msra.mxu0 0
        %1212 = vmatprep.subr.bf16.mxu0 0
        %1213 = vmatpush1.bf16.msra.mxu0 0
        %1214 = vmatprep.subr.bf16.mxu0 0
        %1215 = vmatpush1.bf16.msra.mxu0 0
        %1216 = vmatprep.subr.bf16.mxu0 0
        %1217 = vmatpush1.bf16.msra.mxu0 0
        %1218 = vmatprep.subr.bf16.mxu0 0
        %1219 = vmatpush1.bf16.msra.mxu0 0
        %1220 = vmatprep.subr.bf16.mxu0 0
        %1221 = vmatpush1.bf16.msra.mxu0 0
        %1222 = vmatprep.subr.bf16.mxu0 0
        %1223 = vmatpush1.bf16.msra.mxu0 0
        %1224 = vmatprep.subr.bf16.mxu0 0
        %1225 = vmatpush1.bf16.msra.mxu0 0
        %1226 = vmatprep.subr.bf16.mxu0 0
        %1227 = vmatpush1.bf16.msra.mxu0 0
        %1228 = vmatprep.subr.bf16.mxu0 0
        %1229 = vmatpush1.bf16.msra.mxu0 0
        %1230 = vmatprep.subr.bf16.mxu0 0
        %1231 = vmatpush1.bf16.msra.mxu0 0
        %1232 = vmatprep.subr.bf16.mxu0 0
        %1233 = vmatpush1.bf16.msra.mxu0 0
        %1234 = vmatprep.subr.bf16.mxu0 0
        %1235 = vmatpush1.bf16.msra.mxu0 0
        %1236 = vmatprep.subr.bf16.mxu0 0
        %1237 = vmatpush1.bf16.msra.mxu0 0
        %1238 = vmatprep.mubr.bf16.mxu0 0
        %1239 = vmatmul.mubr.bf16.gmra.mrb[0].mxu0 %v1201
        %v1240 = vpop.f32.mrb[0].mxu0
        %v1241 = vadd.f32 0.0, %v1240
        %v1242 = vpop.f32.mrb[0].mxu0
        %v1243 = vpop.f32.mrb[0].mxu0
        %v1244 = vpop.f32.mrb[0].mxu0
        %1245 = vdwg.mxu0
        %1247 = vrot.lane.b32.xlu0 %v1241, 24
        %v1248 = vpop.permute.xlu0 %1247
        %vm1250 = vcmask 261312
        %1251 = vst.msk [vmem:[#allocation4] sm:$0xff] %vm1250, %v1248
        %v1252 = vld [vmem:[#allocation4] sm:$0xff]
        %1253 = vst.msk [vmem:[%s502] sm:$0xff] %vm745, %v1252
        %v1254 = vpack.c.bf16 %v1252, %v1252
        %v1255 = vld [vmem:[#allocation17] sm:$0xf]
        %v1256 = vld [vmem:[#allocation17 + $0x4] sm:$0xf]
        %v1257 = vld [vmem:[#allocation17 + $0x8] sm:$0xf]
        %v1258 = vld [vmem:[#allocation17 + $0xc] sm:$0xf]
        %v1259 = vld [vmem:[#allocation19] sm:$0x1]
        %v1261 = vlaneseq
        %v1262 = vshrl.u32 %v1261, 7
        %v1263 = vsub.s32 0, %v1262
        %v1264 = vrot.slane %v1259, %v1263
        %v1270 = vunpack.c.l.b16 %v1255
        %v1271 = vunpack.c.l.b16 %v1256
        %v1272 = vunpack.c.l.b16 %v1257
        %v1273 = vunpack.c.l.b16 %v1258
        %v1274 = vpack.c.b16 %v1271, %v1270
        %v1275 = vpack.c.b16 %v1273, %v1272
        %v1279 = vsel %vm745, %v1254, 0
        %1281 = vmatprep.subr.bf16.mxu0 0
        %1282 = vmatpush1.bf16.msra.mxu0 %v1274
        %1283 = vmatprep.subr.bf16.mxu0 0
        %1284 = vmatpush1.bf16.msra.mxu0 %v1275
        %1285 = vmatprep.subr.bf16.mxu0 0
        %1286 = vmatpush1.bf16.msra.mxu0 0
        %1287 = vmatprep.subr.bf16.mxu0 0
        %1288 = vmatpush1.bf16.msra.mxu0 0
        %1289 = vmatprep.subr.bf16.mxu0 0
        %1290 = vmatpush1.bf16.msra.mxu0 0
        %1291 = vmatprep.subr.bf16.mxu0 0
        %1292 = vmatpush1.bf16.msra.mxu0 0
        %1293 = vmatprep.subr.bf16.mxu0 0
        %1294 = vmatpush1.bf16.msra.mxu0 0
        %1295 = vmatprep.subr.bf16.mxu0 0
        %1296 = vmatpush1.bf16.msra.mxu0 0
        %1297 = vmatprep.subr.bf16.mxu0 0
        %1298 = vmatpush1.bf16.msra.mxu0 0
        %1299 = vmatprep.subr.bf16.mxu0 0
        %1300 = vmatpush1.bf16.msra.mxu0 0
        %1301 = vmatprep.subr.bf16.mxu0 0
        %1302 = vmatpush1.bf16.msra.mxu0 0
        %1303 = vmatprep.subr.bf16.mxu0 0
        %1304 = vmatpush1.bf16.msra.mxu0 0
        %1305 = vmatprep.subr.bf16.mxu0 0
        %1306 = vmatpush1.bf16.msra.mxu0 0
        %1307 = vmatprep.subr.bf16.mxu0 0
        %1308 = vmatpush1.bf16.msra.mxu0 0
        %1309 = vmatprep.subr.bf16.mxu0 0
        %1310 = vmatpush1.bf16.msra.mxu0 0
        %1311 = vmatprep.subr.bf16.mxu0 0
        %1312 = vmatpush1.bf16.msra.mxu0 0
        %1313 = vmatprep.mubr.bf16.mxu0 0
        %1314 = vmatmul.mubr.bf16.gmra.mrb[0].mxu0 %v1279
        %v1315 = vpop.f32.mrb[0].mxu0
        %v1316 = vadd.f32 %v1264, %v1315
        %v1317 = vpop.f32.mrb[0].mxu0
        %v1318 = vpop.f32.mrb[0].mxu0
        %v1319 = vpop.f32.mrb[0].mxu0
        %1320 = vdwg.mxu0
        %1321 = vst.msk [vmem:[%s509] sm:$0xff] %vm745, %v1316
        %s1322 = sand.u32 %s251, 1
        %s1323 = scalar_lea.sflag [#allocation7], %s1322
        %s1324 = sand.u32 %s251, 1
        %s1325 = smul.addr %s1324, 8
        %s1326 = scalar_lea.vmem [#allocation20], %s1325
        %s1327 = sand.u32 %s279, 1
        %s1328 = scalar_lea.sflag [#allocation22], %s1327
        %s1329 = sand.u32 %s279, 1
        %s1330 = smul.addr %s1329, 8
        %s1331 = scalar_lea.vmem [#allocation21], %s1330
        // Predicated region
        $region97: #{tpu_custom_call.1} parent=55 // pred_check
          %p1332 = pneg %p261
        $region98: #{tpu_custom_call.1} parent=55 // pred_check_branch
          %1334 = sbr.rel (%p1332) target = $region100
        $region99: #{tpu_custom_call.1} parent=55 // pred_region
          %s1336 = ssub.s32 128, 128
          %1337 = vsyncadd %s1323, %s1336
          %s1338 = sadd.s32 %s40, %s39
          %s1339 = smul.addr %s1338, 128
          %s1340 = scalar_lea.hbm %s9, %s1339
          %s1342 = sshll.u32 %s1326, 4
          %s1343 = int_to_ptr.vmem [resolvable:$true] %s1342
          %1345 = dma.vmem_to_hbm [thread:$0]  %s1343, 128, %s1340, %s1323
        $region100: #{tpu_custom_call.1} parent=55 // pred_fallthru
          _
        // Predicated region
        $region101: #{tpu_custom_call.1} parent=55 // pred_check
          %p1346 = pneg %p289
        $region102: #{tpu_custom_call.1} parent=55 // pred_check_branch
          %1348 = sbr.rel (%p1346) target = $region104
        $region103: #{tpu_custom_call.1} parent=55 // pred_region
          %s1350 = ssub.s32 128, 128
          %1351 = vsyncadd %s1328, %s1350
          %s1352 = sadd.s32 %s40, %s39
          %s1353 = smul.addr %s1352, 128
          %s1354 = scalar_lea.hbm %s10, %s1353
          %s1356 = sshll.u32 %s1331, 4
          %s1357 = int_to_ptr.vmem [resolvable:$true] %s1356
          %1359 = dma.vmem_to_hbm [thread:$0]  %s1357, 128, %s1354, %s1328
        $region104: #{tpu_custom_call.1} parent=55 // pred_fallthru
          _
      $region56: #{tpu_custom_call.1} parent=5 // pred_fallthru
        _
      %p1360 = scmp.le.s32.totalorder 2, %s30
      // Predicated region
      $region105: #{tpu_custom_call.1} parent=5 // pred_check
        %p1361 = pneg %p1360
      $region106: #{tpu_custom_call.1} parent=5 // pred_check_branch
        %1363 = sbr.rel (%p1361) target = $region108
      $region107: #{tpu_custom_call.1} parent=5 // pred_region
        %s1364 = ssub.s32 %s30, 2
        // Predicated region
        $region109: #{tpu_custom_call.1} parent=107 // pred_check
          %p1365 = pneg %p267
        $region110: #{tpu_custom_call.1} parent=107 // pred_check_branch
          %1367 = sbr.rel (%p1365) target = $region112
        $region111: #{tpu_custom_call.1} parent=107 // pred_region
          %s1368 = sand.u32 %s252, 1
          %s1369 = scalar_lea.sflag [#allocation7], %s1368
          %s1370 = sand.u32 %s252, 1
          %s1371 = smul.addr %s1370, 8
          %s1372 = scalar_lea.vmem [#allocation20], %s1371
          %1373 = dma.done %s1369, 128
        $region112: #{tpu_custom_call.1} parent=107 // pred_fallthru
          _
        // Predicated region
        $region113: #{tpu_custom_call.1} parent=107 // pred_check
          %p1374 = pneg %p295
        $region114: #{tpu_custom_call.1} parent=107 // pred_check_branch
          %1376 = sbr.rel (%p1374) target = $region116
        $region115: #{tpu_custom_call.1} parent=107 // pred_region
          %s1377 = sand.u32 %s280, 1
          %s1378 = scalar_lea.sflag [#allocation22], %s1377
          %s1379 = sand.u32 %s280, 1
          %s1380 = smul.addr %s1379, 8
          %s1381 = scalar_lea.vmem [#allocation21], %s1380
          %1382 = dma.done %s1378, 128
        $region116: #{tpu_custom_call.1} parent=107 // pred_fallthru
          _
      $region108: #{tpu_custom_call.1} parent=5 // pred_fallthru
        _
    $region6: #{tpu_custom_call.1} parent=1 // loop_footer
      %s34 = sadd.s32 1, %s30
    $region7: #{tpu_custom_call.1} parent=1 // loop_footer_branch
      %29 = sbr.rel target = $region3
    $region8: #{tpu_custom_call.1} parent=1 // loop_exit
      _
    %1383 = vsyncpa [#allocation6], 1
    %s1384 = scalar_lea.sflag [#allocation6], 1
    %1385 = vsyncpa %s1384, 1
    %1386 = vsyncpa [#allocation9], 1
    %1387 = vsyncpa [#allocation12], 1
    %1388 = vsyncpa [#allocation15], 1
    %1389 = vsyncpa [#allocation18], 1
    %1390 = vsyncpa [#allocation7], 1
    %s1391 = scalar_lea.sflag [#allocation7], 1
    %1392 = vsyncpa %s1391, 1
    %1393 = vsyncpa [#allocation22], 1
    %s1394 = scalar_lea.sflag [#allocation22], 1
    %1395 = vsyncpa %s1394, 1

// kernel: tpu_custom_call.1
$region0: #{tpu_custom_call.1}
  #allocation0 [shape = 'u32[]', space=smem, size = 0x4, offset = 0x4, fixed_abs, tag = 'smem constant byte address 0x4 - core index']
  #allocation1 [shape = 'u32[144,128]{1,0:T(1,128)}', space=vmem, size = 0x12000, scoped, tag = 'internal scratch']
  #allocation2 [shape = 'bf16[4,8,8]{2,1,0:T(8,128)(2,1)}', space=vmem, size = 0x2000, scoped, tag = 'scratch operand']
  #allocation3 [shape = 'bf16[4,8,8]{2,1,0:T(8,128)(2,1)}', space=vmem, size = 0x2000, scoped, tag = 'scratch operand']
  #allocation4 [shape = 'f32[8,32]{1,0:T(8,128)}', space=vmem, size = 0x1000, scoped, tag = 'scratch operand']
  %s0 = inlined_call_operand.hbm [shape: bf16[2,8,32], index: 0, kind: input, shape index: {}]
  %s1 = inlined_call_operand.hbm [shape: bf16[32,32], index: 1, kind: input, shape index: {}]
  %s2 = inlined_call_operand.hbm [shape: f32[1,32], index: 2, kind: input, shape index: {}]
  %s3 = inlined_call_operand.hbm [shape: bf16[32,32], index: 3, kind: input, shape index: {}]
  %s4 = inlined_call_operand.hbm [shape: f32[1,32], index: 4, kind: input, shape index: {}]
  %s5 = inlined_call_operand.hbm [shape: bf16[32,32], index: 5, kind: input, shape index: {}]
  %s6 = inlined_call_operand.hbm [shape: f32[1,32], index: 6, kind: input, shape index: {}]
  %s7 = inlined_call_operand.hbm [shape: bf16[32,32], index: 7, kind: input, shape index: {}]
  %s8 = inlined_call_operand.hbm [shape: f32[1,32], index: 8, kind: input, shape index: {}]
  %s9 = inlined_call_operand.hbm [shape: f32[2,8,32], index: 9, kind: output, shape index: {0}]
  %s10 = inlined_call_operand.hbm [shape: f32[2,8,32], index: 10, kind: output, shape index: {1}]
  %11 = xla_tuple %s9, %s10
  %s12 = sld [smem:[#allocation0]]
  $region117: #{tpu_custom_call.1} parent=0
    _
  %s14 = ssub.s32 1, %s12
  %s15 = scalar_select 0, %s14, %s12
  $region1: #{tpu_custom_call.1} parent=0
    #allocation5 [shape = 'u8[4096]{0}', space=vmem, size = 0x1000, scoped, tag = 'input window, operand 0']
    #allocation6 [shape = 's32[2]{0}', space=sflag, size = 0x8, scoped, tag = 'scoped memory for tpu_custom_call.1']
    #allocation7 [shape = 's32[2]{0}', space=sflag, size = 0x8, scoped, tag = 'scoped memory for tpu_custom_call.1']
    #allocation8 [shape = 'u8[8192]{0}', space=vmem, size = 0x2000, scoped, tag = 'input window, operand 1, single buffered']
    #allocation9 [shape = 's32[1]{0}', space=sflag, size = 0x4, scoped, tag = 'scoped memory for tpu_custom_call.1']
    #allocation10 [shape = 'u8[512]{0}', space=vmem, size = 0x400, scoped, tag = 'input window, operand 2, single buffered']
    #allocation11 [shape = 'u8[8192]{0}', space=vmem, size = 0x2000, scoped, tag = 'input window, operand 3, single buffered']
    #allocation12 [shape = 's32[1]{0}', space=sflag, size = 0x4, scoped, tag = 'scoped memory for tpu_custom_call.1']
    #allocation13 [shape = 'u8[512]{0}', space=vmem, size = 0x400, scoped, tag = 'input window, operand 4, single buffered']
    #allocation14 [shape = 'u8[8192]{0}', space=vmem, size = 0x2000, scoped, tag = 'input window, operand 5, single buffered']
    #allocation15 [shape = 's32[1]{0}', space=sflag, size = 0x4, scoped, tag = 'scoped memory for tpu_custom_call.1']
    #allocation16 [shape = 'u8[512]{0}', space=vmem, size = 0x400, scoped, tag = 'input window, operand 6, single buffered']
    #allocation17 [shape = 'u8[8192]{0}', space=vmem, size = 0x2000, scoped, tag = 'input window, operand 7, single buffered']
    #allocation18 [shape = 's32[1]{0}', space=sflag, size = 0x4, scoped, tag = 'scoped memory for tpu_custom_call.1']
    #allocation19 [shape = 'u8[512]{0}', space=vmem, size = 0x400, scoped, tag = 'input window, operand 8, single buffered']
    #allocation20 [shape = 'u8[8192]{0}', space=vmem, size = 0x2000, scoped, tag = 'output window, operand 0']
    #allocation21 [shape = 'u8[8192]{0}', space=vmem, size = 0x2000, scoped, tag = 'output window, operand 1']
    #allocation22 [shape = 's32[2]{0}', space=sflag, size = 0x8, scoped, tag = 'scoped memory for tpu_custom_call.1']
    %16 = vsyncpa [#allocation6], 0
    %s17 = scalar_lea.sflag [#allocation6], 1
    %18 = vsyncpa %s17, 0
    %19 = vsyncpa [#allocation9], 0
    %20 = vsyncpa [#allocation12], 0
    %21 = vsyncpa [#allocation15], 0
    %22 = vsyncpa [#allocation18], 0
    %23 = vsyncpa [#allocation7], 0
    %s24 = scalar_lea.sflag [#allocation7], 1
    %25 = vsyncpa %s24, 0
    %26 = vsyncpa [#allocation22], 0
    %s27 = scalar_lea.sflag [#allocation22], 1
    %28 = vsyncpa %s27, 0
    loop: start=0, step=1, limit=4
    $region2: #{tpu_custom_call.1} parent=1 // loop_pre_header
      _
    $region3: #{tpu_custom_call.1} parent=1 // loop_header
      %s30 = sphi 0, %s34
      %p31 = scmp.ge.s32.totalorder %s30, 4
      %s37 = sphi 0, %s49
      %s38 = sphi 0, %s45
      %s39 = sphi 0, %s37
      %s40 = sphi 0, %s38
      %s41 = sphi 0, %s39
      %s42 = sphi 0, %s40
      %s52 = sphi 0, %s54
      %s55 = sphi 0, %s52
      %s56 = sphi 0, %s55
      %s72 = sphi 0, %s56
      %s76 = sphi 0, %s76
      %s78 = sphi 0, %s76
      %s79 = sphi 0, %s78
      %s93 = sphi 0, %s79
      %s97 = sphi 0, %s97
      %s99 = sphi 0, %s97
      %s100 = sphi 0, %s99
      %s114 = sphi 0, %s100
      %s118 = sphi 0, %s118
      %s120 = sphi 0, %s118
      %s121 = sphi 0, %s120
      %s135 = sphi 0, %s121
      %s139 = sphi 0, %s139
      %s141 = sphi 0, %s139
      %s142 = sphi 0, %s141
      %s156 = sphi 0, %s142
      %s160 = sphi 0, %s160
      %s162 = sphi 0, %s160
      %s163 = sphi 0, %s162
      %s177 = sphi 0, %s163
      %s181 = sphi 0, %s181
      %s183 = sphi 0, %s181
      %s184 = sphi 0, %s183
      %s198 = sphi 0, %s184
      %s202 = sphi 0, %s202
      %s204 = sphi 0, %s202
      %s205 = sphi 0, %s204
      %s219 = sphi 0, %s205
      %s223 = sphi 0, %s223
      %s225 = sphi 0, %s223
      %s226 = sphi 0, %s225
      %s240 = sphi 0, %s226
      %s248 = sphi 0, %s250
      %s251 = sphi 0, %s248
      %s252 = sphi 0, %s251
      %s268 = sphi 0, %s252
      %s276 = sphi 0, %s278
      %s279 = sphi 0, %s276
      %s280 = sphi 0, %s279
      %s296 = sphi 0, %s280
    $region4: #{tpu_custom_call.1} parent=1 // loop_header_branch
      %33 = sbr.rel (%p31) target = $region8
    $region5: #{tpu_custom_call.1} parent=1 // loop_body
      %s35 = ssub.s32 %s30, 1
      %s36 = ssub.s32 %s30, 2
      %s43 = sadd.s32 1, %s38
      %p44 = scmp.ge.s32.totalorder %s43, 1
      %s45 = scalar_select %p44, 0, %s43
      %s46 = sadd.s32 1, %s37
      %s47 = scalar_select %p44, %s46, %s37
      %p48 = scmp.ge.s32.totalorder %s47, 2
      %s49 = scalar_select %p48, 0, %s47
      %s50 = ssub.s32 %s37, %s49
      %p51 = scmp.eq.s32.totalorder %s50, 0
      %s53 = sadd.s32 %s52, 1
      %s54 = scalar_select %p51, %s52, %s53
      %p57 = pneg %p51
      %p58 = scmp.eq.s32.totalorder %s30, 1
      %p59 = por %p57, %p58
      %p60 = scmp.ne.s32.totalorder %s52, %s55
      %p61 = scmp.eq.s32.totalorder %s30, 0
      %p62 = por %p60, %p61
      %p63 = scmp.ne.s32.totalorder %s52, %s55
      %p64 = scmp.eq.s32.totalorder %s35, 1
      %p65 = por %p63, %p64
      %p66 = scmp.ne.s32.totalorder %s55, %s56
      %p67 = scmp.eq.s32.totalorder %s35, 0
      %p68 = por %p66, %p67
      %p69 = scmp.ne.s32.totalorder %s55, %s56
      %p70 = scmp.eq.s32.totalorder %s36, 1
      %p71 = por %p69, %p70
      %p73 = scmp.ne.s32.totalorder %s56, %s72
      %p74 = scmp.eq.s32.totalorder %s36, 0
      %p75 = por %p73, %p74
      %s77 = sadd.s32 %s76, 1
      %p80 = scmp.eq.s32.totalorder %s30, 1
      %p81 = scmp.ne.s32.totalorder %s76, %s78
      %p82 = scmp.eq.s32.totalorder %s30, 0
      %p83 = por %p81, %p82
      %p84 = scmp.ne.s32.totalorder %s76, %s78
      %p85 = scmp.eq.s32.totalorder %s35, 1
      %p86 = por %p84, %p85
      %p87 = scmp.ne.s32.totalorder %s78, %s79
      %p88 = scmp.eq.s32.totalorder %s35, 0
      %p89 = por %p87, %p88
      %p90 = scmp.ne.s32.totalorder %s78, %s79
      %p91 = scmp.eq.s32.totalorder %s36, 1
      %p92 = por %p90, %p91
      %p94 = scmp.ne.s32.totalorder %s79, %s93
      %p95 = scmp.eq.s32.totalorder %s36, 0
      %p96 = por %p94, %p95
      %s98 = sadd.s32 %s97, 1
      %p101 = scmp.eq.s32.totalorder %s30, 1
      %p102 = scmp.ne.s32.totalorder %s97, %s99
      %p103 = scmp.eq.s32.totalorder %s30, 0
      %p104 = por %p102, %p103
      %p105 = scmp.ne.s32.totalorder %s97, %s99
      %p106 = scmp.eq.s32.totalorder %s35, 1
      %p107 = por %p105, %p106
      %p108 = scmp.ne.s32.totalorder %s99, %s100
      %p109 = scmp.eq.s32.totalorder %s35, 0
      %p110 = por %p108, %p109
      %p111 = scmp.ne.s32.totalorder %s99, %s100
      %p112 = scmp.eq.s32.totalorder %s36, 1
      %p113 = por %p111, %p112
      %p115 = scmp.ne.s32.totalorder %s100, %s114
      %p116 = scmp.eq.s32.totalorder %s36, 0
      %p117 = por %p115, %p116
      %s119 = sadd.s32 %s118, 1
      %p122 = scmp.eq.s32.totalorder %s30, 1
      %p123 = scmp.ne.s32.totalorder %s118, %s120
      %p124 = scmp.eq.s32.totalorder %s30, 0
      %p125 = por %p123, %p124
      %p126 = scmp.ne.s32.totalorder %s118, %s120
      %p127 = scmp.eq.s32.totalorder %s35, 1
      %p128 = por %p126, %p127
      %p129 = scmp.ne.s32.totalorder %s120, %s121
      %p130 = scmp.eq.s32.totalorder %s35, 0
      %p131 = por %p129, %p130
      %p132 = scmp.ne.s32.totalorder %s120, %s121
      %p133 = scmp.eq.s32.totalorder %s36, 1
      %p134 = por %p132, %p133
      %p136 = scmp.ne.s32.totalorder %s121, %s135
      %p137 = scmp.eq.s32.totalorder %s36, 0
      %p138 = por %p136, %p137
      %s140 = sadd.s32 %s139, 1
      %p143 = scmp.eq.s32.totalorder %s30, 1
      %p144 = scmp.ne.s32.totalorder %s139, %s141
      %p145 = scmp.eq.s32.totalorder %s30, 0
      %p146 = por %p144, %p145
      %p147 = scmp.ne.s32.totalorder %s139, %s141
      %p148 = scmp.eq.s32.totalorder %s35, 1
      %p149 = por %p147, %p148
      %p150 = scmp.ne.s32.totalorder %s141, %s142
      %p151 = scmp.eq.s32.totalorder %s35, 0
      %p152 = por %p150, %p151
      %p153 = scmp.ne.s32.totalorder %s141, %s142
      %p154 = scmp.eq.s32.totalorder %s36, 1
      %p155 = por %p153, %p154
      %p157 = scmp.ne.s32.totalorder %s142, %s156
      %p158 = scmp.eq.s32.totalorder %s36, 0
      %p159 = por %p157, %p158
      %s161 = sadd.s32 %s160, 1
      %p164 = scmp.eq.s32.totalorder %s30, 1
      %p165 = scmp.ne.s32.totalorder %s160, %s162
      %p166 = scmp.eq.s32.totalorder %s30, 0
      %p167 = por %p165, %p166
      %p168 = scmp.ne.s32.totalorder %s160, %s162
      %p169 = scmp.eq.s32.totalorder %s35, 1
      %p170 = por %p168, %p169
      %p171 = scmp.ne.s32.totalorder %s162, %s163
      %p172 = scmp.eq.s32.totalorder %s35, 0
      %p173 = por %p171, %p172
      %p174 = scmp.ne.s32.totalorder %s162, %s163
      %p175 = scmp.eq.s32.totalorder %s36, 1
      %p176 = por %p174, %p175
      %p178 = scmp.ne.s32.totalorder %s163, %s177
      %p179 = scmp.eq.s32.totalorder %s36, 0
      %p180 = por %p178, %p179
      %s182 = sadd.s32 %s181, 1
      %p185 = scmp.eq.s32.totalorder %s30, 1
      %p186 = scmp.ne.s32.totalorder %s181, %s183
      %p187 = scmp.eq.s32.totalorder %s30, 0
      %p188 = por %p186, %p187
      %p189 = scmp.ne.s32.totalorder %s181, %s183
      %p190 = scmp.eq.s32.totalorder %s35, 1
      %p191 = por %p189, %p190
      %p192 = scmp.ne.s32.totalorder %s183, %s184
      %p193 = scmp.eq.s32.totalorder %s35, 0
      %p194 = por %p192, %p193
      %p195 = scmp.ne.s32.totalorder %s183, %s184
      %p196 = scmp.eq.s32.totalorder %s36, 1
      %p197 = por %p195, %p196
      %p199 = scmp.ne.s32.totalorder %s184, %s198
      %p200 = scmp.eq.s32.totalorder %s36, 0
      %p201 = por %p199, %p200
      %s203 = sadd.s32 %s202, 1
      %p206 = scmp.eq.s32.totalorder %s30, 1
      %p207 = scmp.ne.s32.totalorder %s202, %s204
      %p208 = scmp.eq.s32.totalorder %s30, 0
      %p209 = por %p207, %p208
      %p210 = scmp.ne.s32.totalorder %s202, %s204
      %p211 = scmp.eq.s32.totalorder %s35, 1
      %p212 = por %p210, %p211
      %p213 = scmp.ne.s32.totalorder %s204, %s205
      %p214 = scmp.eq.s32.totalorder %s35, 0
      %p215 = por %p213, %p214
      %p216 = scmp.ne.s32.totalorder %s204, %s205
      %p217 = scmp.eq.s32.totalorder %s36, 1
      %p218 = por %p216, %p217
      %p220 = scmp.ne.s32.totalorder %s205, %s219
      %p221 = scmp.eq.s32.totalorder %s36, 0
      %p222 = por %p220, %p221
      %s224 = sadd.s32 %s223, 1
      %p227 = scmp.eq.s32.totalorder %s30, 1
      %p228 = scmp.ne.s32.totalorder %s223, %s225
      %p229 = scmp.eq.s32.totalorder %s30, 0
      %p230 = por %p228, %p229
      %p231 = scmp.ne.s32.totalorder %s223, %s225
      %p232 = scmp.eq.s32.totalorder %s35, 1
      %p233 = por %p231, %p232
      %p234 = scmp.ne.s32.totalorder %s225, %s226
      %p235 = scmp.eq.s32.totalorder %s35, 0
      %p236 = por %p234, %p235
      %p237 = scmp.ne.s32.totalorder %s225, %s226
      %p238 = scmp.eq.s32.totalorder %s36, 1
      %p239 = por %p237, %p238
      %p241 = scmp.ne.s32.totalorder %s226, %s240
      %p242 = scmp.eq.s32.totalorder %s36, 0
      %p243 = por %p241, %p242
      %s244 = ssub.s32 %s37, %s49
      %s245 = ssub.s32 %s38, %s45
      %s246 = sor.u32 %s244, %s245
      %p247 = scmp.eq.s32.totalorder %s246, 0
      %s249 = sadd.s32 %s248, 1
      %s250 = scalar_select %p247, %s248, %s249
      %p253 = pneg %p247
      %p254 = scmp.eq.s32.totalorder %s30, 1
      %p255 = por %p253, %p254
      %p256 = scmp.ne.s32.totalorder %s248, %s251
      %p257 = scmp.eq.s32.totalorder %s30, 0
      %p258 = por %p256, %p257
      %p259 = scmp.ne.s32.totalorder %s248, %s251
      %p260 = scmp.eq.s32.totalorder %s35, 1
      %p261 = por %p259, %p260
      %p262 = scmp.ne.s32.totalorder %s251, %s252
      %p263 = scmp.eq.s32.totalorder %s35, 0
      %p264 = por %p262, %p263
      %p265 = scmp.ne.s32.totalorder %s251, %s252
      %p266 = scmp.eq.s32.totalorder %s36, 1
      %p267 = por %p265, %p266
      %p269 = scmp.ne.s32.totalorder %s252, %s268
      %p270 = scmp.eq.s32.totalorder %s36, 0
      %p271 = por %p269, %p270
      %s272 = ssub.s32 %s37, %s49
      %s273 = ssub.s32 %s38, %s45
      %s274 = sor.u32 %s272, %s273
      %p275 = scmp.eq.s32.totalorder %s274, 0
      %s277 = sadd.s32 %s276, 1
      %s278 = scalar_select %p275, %s276, %s277
      %p281 = pneg %p275
      %p282 = scmp.eq.s32.totalorder %s30, 1
      %p283 = por %p281, %p282
      %p284 = scmp.ne.s32.totalorder %s276, %s279
      %p285 = scmp.eq.s32.totalorder %s30, 0
      %p286 = por %p284, %p285
      %p287 = scmp.ne.s32.totalorder %s276, %s279
      %p288 = scmp.eq.s32.totalorder %s35, 1
      %p289 = por %p287, %p288
      %p290 = scmp.ne.s32.totalorder %s279, %s280
      %p291 = scmp.eq.s32.totalorder %s35, 0
      %p292 = por %p290, %p291
      %p293 = scmp.ne.s32.totalorder %s279, %s280
      %p294 = scmp.eq.s32.totalorder %s36, 1
      %p295 = por %p293, %p294
      %p297 = scmp.ne.s32.totalorder %s280, %s296
      %p298 = scmp.eq.s32.totalorder %s36, 0
      %p299 = por %p297, %p298
      %p300 = scmp.le.s32.totalorder 1, %s30
      %p301 = scmp.lt.s32.totalorder %s30, 3
      %p302 = pnand %p300, %p301
      %p303 = pneg %p302
      // Predicated region
      $region9: #{tpu_custom_call.1} parent=5 // pred_check
        _
      $region10: #{tpu_custom_call.1} parent=5 // pred_check_branch
        %305 = sbr.rel (%p302) target = $region12
      $region11: #{tpu_custom_call.1} parent=5 // pred_region
        %s306 = ssub.s32 %s30, 1
        // Predicated region
        $region13: #{tpu_custom_call.1} parent=11 // pred_check
          %p307 = pneg %p89
        $region14: #{tpu_custom_call.1} parent=11 // pred_check_branch
          %309 = sbr.rel (%p307) target = $region16
        $region15: #{tpu_custom_call.1} parent=11 // pred_region
          %s311 = ssub.s32 256, 256
          %312 = vsyncadd [#allocation9], %s311
          %s313 = sshll.u32 [#allocation8], 4
          %s314 = int_to_ptr.vmem [resolvable:$true] %s313
          %319 = dma.hbm_to_vmem [thread:$0]  %s1, 256, %s314, [#allocation9], 64, 64, 4
        $region16: #{tpu_custom_call.1} parent=11 // pred_fallthru
          _
        // Predicated region
        $region17: #{tpu_custom_call.1} parent=11 // pred_check
          %p320 = pneg %p110
        $region18: #{tpu_custom_call.1} parent=11 // pred_check_branch
          %322 = sbr.rel (%p320) target = $region20
        $region19: #{tpu_custom_call.1} parent=11 // pred_region
          %s324 = ssub.s32 16, 16
          %325 = vsyncadd [#allocation9], %s324
          %s327 = sshll.u32 [#allocation10], 4
          %s328 = int_to_ptr.vmem [resolvable:$true] %s327
          %330 = dma.hbm_to_vmem [thread:$0]  %s2, 16, %s328, [#allocation9]
        $region20: #{tpu_custom_call.1} parent=11 // pred_fallthru
          _
        // Predicated region
        $region21: #{tpu_custom_call.1} parent=11 // pred_check
          %p331 = pneg %p131
        $region22: #{tpu_custom_call.1} parent=11 // pred_check_branch
          %333 = sbr.rel (%p331) target = $region24
        $region23: #{tpu_custom_call.1} parent=11 // pred_region
          %s335 = ssub.s32 256, 256
          %336 = vsyncadd [#allocation12], %s335
          %s337 = sshll.u32 [#allocation11], 4
          %s338 = int_to_ptr.vmem [resolvable:$true] %s337
          %343 = dma.hbm_to_vmem [thread:$0]  %s3, 256, %s338, [#allocation12], 64, 64, 4
        $region24: #{tpu_custom_call.1} parent=11 // pred_fallthru
          _
        // Predicated region
        $region25: #{tpu_custom_call.1} parent=11 // pred_check
          %p344 = pneg %p152
        $region26: #{tpu_custom_call.1} parent=11 // pred_check_branch
          %346 = sbr.rel (%p344) target = $region28
        $region27: #{tpu_custom_call.1} parent=11 // pred_region
          %s348 = ssub.s32 16, 16
          %349 = vsyncadd [#allocation12], %s348
          %s351 = sshll.u32 [#allocation13], 4
          %s352 = int_to_ptr.vmem [resolvable:$true] %s351
          %354 = dma.hbm_to_vmem [thread:$0]  %s4, 16, %s352, [#allocation12]
        $region28: #{tpu_custom_call.1} parent=11 // pred_fallthru
          _
        // Predicated region
        $region29: #{tpu_custom_call.1} parent=11 // pred_check
          %p355 = pneg %p173
        $region30: #{tpu_custom_call.1} parent=11 // pred_check_branch
          %357 = sbr.rel (%p355) target = $region32
        $region31: #{tpu_custom_call.1} parent=11 // pred_region
          %s359 = ssub.s32 256, 256
          %360 = vsyncadd [#allocation15], %s359
          %s361 = sshll.u32 [#allocation14], 4
          %s362 = int_to_ptr.vmem [resolvable:$true] %s361
          %367 = dma.hbm_to_vmem [thread:$0]  %s5, 256, %s362, [#allocation15], 64, 64, 4
        $region32: #{tpu_custom_call.1} parent=11 // pred_fallthru
          _
        // Predicated region
        $region33: #{tpu_custom_call.1} parent=11 // pred_check
          %p368 = pneg %p194
        $region34: #{tpu_custom_call.1} parent=11 // pred_check_branch
          %370 = sbr.rel (%p368) target = $region36
        $region35: #{tpu_custom_call.1} parent=11 // pred_region
          %s372 = ssub.s32 16, 16
          %373 = vsyncadd [#allocation15], %s372
          %s375 = sshll.u32 [#allocation16], 4
          %s376 = int_to_ptr.vmem [resolvable:$true] %s375
          %378 = dma.hbm_to_vmem [thread:$0]  %s6, 16, %s376, [#allocation15]
        $region36: #{tpu_custom_call.1} parent=11 // pred_fallthru
          _
        // Predicated region
        $region37: #{tpu_custom_call.1} parent=11 // pred_check
          %p379 = pneg %p215
        $region38: #{tpu_custom_call.1} parent=11 // pred_check_branch
          %381 = sbr.rel (%p379) target = $region40
        $region39: #{tpu_custom_call.1} parent=11 // pred_region
          %s383 = ssub.s32 256, 256
          %384 = vsyncadd [#allocation18], %s383
          %s385 = sshll.u32 [#allocation17], 4
          %s386 = int_to_ptr.vmem [resolvable:$true] %s385
          %391 = dma.hbm_to_vmem [thread:$0]  %s7, 256, %s386, [#allocation18], 64, 64, 4
        $region40: #{tpu_custom_call.1} parent=11 // pred_fallthru
          _
        // Predicated region
        $region41: #{tpu_custom_call.1} parent=11 // pred_check
          %p392 = pneg %p236
        $region42: #{tpu_custom_call.1} parent=11 // pred_check_branch
          %394 = sbr.rel (%p392) target = $region44
        $region43: #{tpu_custom_call.1} parent=11 // pred_region
          %s396 = ssub.s32 16, 16
          %397 = vsyncadd [#allocation18], %s396
          %s399 = sshll.u32 [#allocation19], 4
          %s400 = int_to_ptr.vmem [resolvable:$true] %s399
          %402 = dma.hbm_to_vmem [thread:$0]  %s8, 16, %s400, [#allocation18]
        $region44: #{tpu_custom_call.1} parent=11 // pred_fallthru
          _
      $region12: #{tpu_custom_call.1} parent=5 // pred_fallthru
        _
      %p403 = scmp.lt.s32.totalorder %s30, 2
      // Predicated region
      $region45: #{tpu_custom_call.1} parent=5 // pred_check
        %p404 = pneg %p403
      $region46: #{tpu_custom_call.1} parent=5 // pred_check_branch
        %406 = sbr.rel (%p404) target = $region48
      $region47: #{tpu_custom_call.1} parent=5 // pred_region
        // Predicated region
        $region49: #{tpu_custom_call.1} parent=47 // pred_check
          %p407 = pneg %p62
        $region50: #{tpu_custom_call.1} parent=47 // pred_check_branch
          %409 = sbr.rel (%p407) target = $region52
        $region51: #{tpu_custom_call.1} parent=47 // pred_region
          %s410 = sand.u32 %s52, 1
          %s411 = scalar_lea.sflag [#allocation6], %s410
          %s412 = sand.u32 %s52, 1
          %s413 = smul.addr %s412, 4
          %s414 = scalar_lea.vmem [#allocation5], %s413
          %s416 = ssub.s32 64, 64
          %417 = vsyncadd %s411, %s416
          %s418 = smul.addr %s37, 64
          %s419 = scalar_lea.hbm %s0, %s418
          %s421 = sshll.u32 %s414, 4
          %s422 = int_to_ptr.vmem [resolvable:$true] %s421
          %424 = dma.hbm_to_vmem [thread:$0]  %s419, 64, %s422, %s411
        $region52: #{tpu_custom_call.1} parent=47 // pred_fallthru
          _
      $region48: #{tpu_custom_call.1} parent=5 // pred_fallthru
        _
      %p425 = scmp.le.s32.totalorder 1, %s30
      %p426 = scmp.lt.s32.totalorder %s30, 3
      %p427 = pnand %p425, %p426
      %p428 = pneg %p427
      // Predicated region
      $region53: #{tpu_custom_call.1} parent=5 // pred_check
        _
      $region54: #{tpu_custom_call.1} parent=5 // pred_check_branch
        %430 = sbr.rel (%p427) target = $region56
      $region55: #{tpu_custom_call.1} parent=5 // pred_region
        %s431 = ssub.s32 %s30, 1
        %s432 = sand.u32 %s55, 1
        %s433 = scalar_lea.sflag [#allocation6], %s432
        %s434 = sand.u32 %s55, 1
        %s435 = smul.addr %s434, 4
        %s436 = scalar_lea.vmem [#allocation5], %s435
        // Predicated region
        $region57: #{tpu_custom_call.1} parent=55 // pred_check
          %p437 = pneg %p68
        $region58: #{tpu_custom_call.1} parent=55 // pred_check_branch
          %439 = sbr.rel (%p437) target = $region60
        $region59: #{tpu_custom_call.1} parent=55 // pred_region
          %440 = dma.done %s433, 64
        $region60: #{tpu_custom_call.1} parent=55 // pred_fallthru
          _
        // Predicated region
        $region61: #{tpu_custom_call.1} parent=55 // pred_check
          %p441 = pneg %p89
        $region62: #{tpu_custom_call.1} parent=55 // pred_check_branch
          %443 = sbr.rel (%p441) target = $region64
        $region63: #{tpu_custom_call.1} parent=55 // pred_region
          %444 = dma.done [#allocation9], 256
        $region64: #{tpu_custom_call.1} parent=55 // pred_fallthru
          _
        // Predicated region
        $region65: #{tpu_custom_call.1} parent=55 // pred_check
          %p445 = pneg %p110
        $region66: #{tpu_custom_call.1} parent=55 // pred_check_branch
          %447 = sbr.rel (%p445) target = $region68
        $region67: #{tpu_custom_call.1} parent=55 // pred_region
          %448 = dma.done [#allocation9], 16
        $region68: #{tpu_custom_call.1} parent=55 // pred_fallthru
          _
        // Predicated region
        $region69: #{tpu_custom_call.1} parent=55 // pred_check
          %p449 = pneg %p131
        $region70: #{tpu_custom_call.1} parent=55 // pred_check_branch
          %451 = sbr.rel (%p449) target = $region72
        $region71: #{tpu_custom_call.1} parent=55 // pred_region
          %452 = dma.done [#allocation12], 256
        $region72: #{tpu_custom_call.1} parent=55 // pred_fallthru
          _
        // Predicated region
        $region73: #{tpu_custom_call.1} parent=55 // pred_check
          %p453 = pneg %p152
        $region74: #{tpu_custom_call.1} parent=55 // pred_check_branch
          %455 = sbr.rel (%p453) target = $region76
        $region75: #{tpu_custom_call.1} parent=55 // pred_region
          %456 = dma.done [#allocation12], 16
        $region76: #{tpu_custom_call.1} parent=55 // pred_fallthru
          _
        // Predicated region
        $region77: #{tpu_custom_call.1} parent=55 // pred_check
          %p457 = pneg %p173
        $region78: #{tpu_custom_call.1} parent=55 // pred_check_branch
          %459 = sbr.rel (%p457) target = $region80
        $region79: #{tpu_custom_call.1} parent=55 // pred_region
          %460 = dma.done [#allocation15], 256
        $region80: #{tpu_custom_call.1} parent=55 // pred_fallthru
          _
        // Predicated region
        $region81: #{tpu_custom_call.1} parent=55 // pred_check
          %p461 = pneg %p194
        $region82: #{tpu_custom_call.1} parent=55 // pred_check_branch
          %463 = sbr.rel (%p461) target = $region84
        $region83: #{tpu_custom_call.1} parent=55 // pred_region
          %464 = dma.done [#allocation15], 16
        $region84: #{tpu_custom_call.1} parent=55 // pred_fallthru
          _
        // Predicated region
        $region85: #{tpu_custom_call.1} parent=55 // pred_check
          %p465 = pneg %p215
        $region86: #{tpu_custom_call.1} parent=55 // pred_check_branch
          %467 = sbr.rel (%p465) target = $region88
        $region87: #{tpu_custom_call.1} parent=55 // pred_region
          %468 = dma.done [#allocation18], 256
        $region88: #{tpu_custom_call.1} parent=55 // pred_fallthru
          _
        // Predicated region
        $region89: #{tpu_custom_call.1} parent=55 // pred_check
          %p469 = pneg %p236
        $region90: #{tpu_custom_call.1} parent=55 // pred_check_branch
          %471 = sbr.rel (%p469) target = $region92
        $region91: #{tpu_custom_call.1} parent=55 // pred_region
          %472 = dma.done [#allocation18], 16
        $region92: #{tpu_custom_call.1} parent=55 // pred_fallthru
          _
        %s473 = sand.u32 %s55, 1
        %s474 = scalar_lea.sflag [#allocation6], %s473
        %s475 = sand.u32 %s55, 1
        %s476 = smul.addr %s475, 4
        %s477 = scalar_lea.vmem [#allocation5], %s476
        %p478 = pneg %p68
        %p479 = pneg %p65
        %p480 = pneg %p89
        %p481 = pneg %p86
        %p482 = pneg %p110
        %p483 = pneg %p107
        %p484 = pneg %p131
        %p485 = pneg %p128
        %p486 = pneg %p152
        %p487 = pneg %p149
        %p488 = pneg %p173
        %p489 = pneg %p170
        %p490 = pneg %p194
        %p491 = pneg %p191
        %p492 = pneg %p215
        %p493 = pneg %p212
        %p494 = pneg %p236
        %p495 = pneg %p233
        %p496 = pneg %p264
        %p497 = pneg %p261
        %s498 = sand.u32 %s251, 1
        %s499 = scalar_lea.sflag [#allocation7], %s498
        %s500 = sand.u32 %s251, 1
        %s501 = smul.addr %s500, 8
        %s502 = scalar_lea.vmem [#allocation20], %s501
        %p503 = pneg %p292
        %p504 = pneg %p289
        %s505 = sand.u32 %s279, 1
        %s506 = scalar_lea.sflag [#allocation22], %s505
        %s507 = sand.u32 %s279, 1
        %s508 = smul.addr %s507, 8
        %s509 = scalar_lea.vmem [#allocation21], %s508
        %p511 = scmp.eq.s32.totalorder %s40, 0
        // Predicated region
        $region93: #{tpu_custom_call.1} parent=55 // pred_check
          %p512 = pneg %p511
        $region94: #{tpu_custom_call.1} parent=55 // pred_check_branch
          %514 = sbr.rel (%p512) target = $region96
        $region95: #{tpu_custom_call.1} parent=55 // pred_region
          %v515 = vld [vmem:[%s436] sm:$0xf]
          %v516 = vld [vmem:[#allocation11] sm:$0xf]
          %v517 = vld [vmem:[#allocation11 + $0x4] sm:$0xf]
          %v518 = vld [vmem:[#allocation11 + $0x8] sm:$0xf]
          %v519 = vld [vmem:[#allocation11 + $0xc] sm:$0xf]
          %v520 = vld [vmem:[#allocation13] sm:$0x1]
          %v522 = vlaneseq
          %v523 = vshrl.u32 %v522, 7
          %v524 = vsub.s32 0, %v523
          %v525 = vrot.slane %v520, %v524
          %v531 = vunpack.c.l.b16 %v516
          %v532 = vunpack.c.l.b16 %v517
          %v533 = vunpack.c.l.b16 %v518
          %v534 = vunpack.c.l.b16 %v519
          %v535 = vpack.c.b16 %v532, %v531
          %v536 = vpack.c.b16 %v534, %v533
          %vm539 = vcmask 261120
          %v541 = vsel %vm539, %v515, 0
          %543 = vmatprep.subr.bf16.mxu0 0
          %544 = vmatpush1.bf16.msra.mxu0 %v535
          %545 = vmatprep.subr.bf16.mxu0 0
          %546 = vmatpush1.bf16.msra.mxu0 %v536
          %547 = vmatprep.subr.bf16.mxu0 0
          %548 = vmatpush1.bf16.msra.mxu0 0
          %549 = vmatprep.subr.bf16.mxu0 0
          %550 = vmatpush1.bf16.msra.mxu0 0
          %551 = vmatprep.subr.bf16.mxu0 0
          %552 = vmatpush1.bf16.msra.mxu0 0
          %553 = vmatprep.subr.bf16.mxu0 0
          %554 = vmatpush1.bf16.msra.mxu0 0
          %555 = vmatprep.subr.bf16.mxu0 0
          %556 = vmatpush1.bf16.msra.mxu0 0
          %557 = vmatprep.subr.bf16.mxu0 0
          %558 = vmatpush1.bf16.msra.mxu0 0
          %559 = vmatprep.subr.bf16.mxu0 0
          %560 = vmatpush1.bf16.msra.mxu0 0
          %561 = vmatprep.subr.bf16.mxu0 0
          %562 = vmatpush1.bf16.msra.mxu0 0
          %563 = vmatprep.subr.bf16.mxu0 0
          %564 = vmatpush1.bf16.msra.mxu0 0
          %565 = vmatprep.subr.bf16.mxu0 0
          %566 = vmatpush1.bf16.msra.mxu0 0
          %567 = vmatprep.subr.bf16.mxu0 0
          %568 = vmatpush1.bf16.msra.mxu0 0
          %569 = vmatprep.subr.bf16.mxu0 0
          %570 = vmatpush1.bf16.msra.mxu0 0
          %571 = vmatprep.subr.bf16.mxu0 0
          %572 = vmatpush1.bf16.msra.mxu0 0
          %573 = vmatprep.subr.bf16.mxu0 0
          %574 = vmatpush1.bf16.msra.mxu0 0
          %575 = vmatprep.mubr.bf16.mxu0 0
          %576 = vmatmul.mubr.bf16.gmra.mrb[0].mxu0 %v541
          %v577 = vpop.f32.mrb[0].mxu0
          %v578 = vadd.f32 %v525, %v577
          %v579 = vpop.f32.mrb[0].mxu0
          %v580 = vpop.f32.mrb[0].mxu0
          %v581 = vpop.f32.mrb[0].mxu0
          %582 = vdwg.mxu0
          %v583 = vld [vmem:[#allocation14] sm:$0xf]
          %v584 = vld [vmem:[#allocation14 + $0x4] sm:$0xf]
          %v585 = vld [vmem:[#allocation14 + $0x8] sm:$0xf]
          %v586 = vld [vmem:[#allocation14 + $0xc] sm:$0xf]
          %v587 = vld [vmem:[#allocation16] sm:$0x1]
          %v589 = vlaneseq
          %v590 = vshrl.u32 %v589, 7
          %v591 = vsub.s32 0, %v590
          %v592 = vrot.slane %v587, %v591
          %v598 = vunpack.c.l.b16 %v583
          %v599 = vunpack.c.l.b16 %v584
          %v600 = vunpack.c.l.b16 %v585
          %v601 = vunpack.c.l.b16 %v586
          %v602 = vpack.c.b16 %v599, %v598
          %v603 = vpack.c.b16 %v601, %v600
          %606 = vmatprep.subr.bf16.mxu0 0
          %607 = vmatpush1.bf16.msra.mxu0 %v602
          %608 = vmatprep.subr.bf16.mxu0 0
          %609 = vmatpush1.bf16.msra.mxu0 %v603
          %610 = vmatprep.subr.bf16.mxu0 0
          %611 = vmatpush1.bf16.msra.mxu0 0
          %612 = vmatprep.subr.bf16.mxu0 0
          %613 = vmatpush1.bf16.msra.mxu0 0
          %614 = vmatprep.subr.bf16.mxu0 0
          %615 = vmatpush1.bf16.msra.mxu0 0
          %616 = vmatprep.subr.bf16.mxu0 0
          %617 = vmatpush1.bf16.msra.mxu0 0
          %618 = vmatprep.subr.bf16.mxu0 0
          %619 = vmatpush1.bf16.msra.mxu0 0
          %620 = vmatprep.subr.bf16.mxu0 0
          %621 = vmatpush1.bf16.msra.mxu0 0
          %622 = vmatprep.subr.bf16.mxu0 0
          %623 = vmatpush1.bf16.msra.mxu0 0
          %624 = vmatprep.subr.bf16.mxu0 0
          %625 = vmatpush1.bf16.msra.mxu0 0
          %626 = vmatprep.subr.bf16.mxu0 0
          %627 = vmatpush1.bf16.msra.mxu0 0
          %628 = vmatprep.subr.bf16.mxu0 0
          %629 = vmatpush1.bf16.msra.mxu0 0
          %630 = vmatprep.subr.bf16.mxu0 0
          %631 = vmatpush1.bf16.msra.mxu0 0
          %632 = vmatprep.subr.bf16.mxu0 0
          %633 = vmatpush1.bf16.msra.mxu0 0
          %634 = vmatprep.subr.bf16.mxu0 0
          %635 = vmatpush1.bf16.msra.mxu0 0
          %636 = vmatprep.subr.bf16.mxu0 0
          %637 = vmatpush1.bf16.msra.mxu0 0
          %638 = vmatprep.mubr.bf16.mxu0 0
          %639 = vmatmul.mubr.bf16.gmra.mrb[0].mxu0 %v541
          %v640 = vpop.f32.mrb[0].mxu0
          %v641 = vadd.f32 %v592, %v640
          %v642 = vpop.f32.mrb[0].mxu0
          %v643 = vpop.f32.mrb[0].mxu0
          %v644 = vpop.f32.mrb[0].mxu0
          %645 = vdwg.mxu0
          %646 = vxpose.xlu0.b32.start [1/16] %v578, 128
          %647 = vxpose.xlu0.b32.cont [2/16] 0.0, 128
          %648 = vxpose.xlu0.b32.cont [3/16] 0.0, 128
          %649 = vxpose.xlu0.b32.cont [4/16] 0.0, 128
          %650 = vxpose.xlu0.b32.cont [5/16] 0.0, 128
          %651 = vxpose.xlu0.b32.cont [6/16] 0.0, 128
          %652 = vxpose.xlu0.b32.cont [7/16] 0.0, 128
          %653 = vxpose.xlu0.b32.cont [8/16] 0.0, 128
          %654 = vxpose.xlu0.b32.cont [9/16] 0.0, 128
          %655 = vxpose.xlu0.b32.cont [10/16] 0.0, 128
          %656 = vxpose.xlu0.b32.cont [11/16] 0.0, 128
          %657 = vxpose.xlu0.b32.cont [12/16] 0.0, 128
          %658 = vxpose.xlu0.b32.cont [13/16] 0.0, 128
          %659 = vxpose.xlu0.b32.cont [14/16] 0.0, 128
          %660 = vxpose.xlu0.b32.cont [15/16] 0.0, 128
          %661 = vxpose.xlu0.b32.end [16/16] 0.0, 128
          %v662 = vpop.trf.xlu0
          %v663 = vpop.trf.xlu0
          %v664 = vpop.trf.xlu0
          %v665 = vpop.trf.xlu0
          %v666 = vpop.trf.xlu0
          %v667 = vpop.trf.xlu0
          %v668 = vpop.trf.xlu0
          %v669 = vpop.trf.xlu0
          %v670 = vpop.trf.xlu0
          %v671 = vpop.trf.xlu0
          %v672 = vpop.trf.xlu0
          %v673 = vpop.trf.xlu0
          %v674 = vpop.trf.xlu0
          %v675 = vpop.trf.xlu0
          %v676 = vpop.trf.xlu0
          %v677 = vpop.trf.xlu0
          %v678 = vpack.c.bf16 %v663, %v662
          %v679 = vpack.c.bf16 %v665, %v664
          %v680 = vpack.c.bf16 %v641, %v641
          %vm681 = vcmask 60416
          %682 = vst.msk [vmem:[#allocation2] sm:$0xf] %vm681, %v678
          %683 = vst.msk [vmem:[#allocation3] sm:$0xf] %vm681, %v680
          %v685 = vunpack.c.h.b16 %v678
          %v686 = vpack.c.b16 %v685, %v685
          %s688 = scalar_lea.vmem [#allocation2], 4
          %689 = vst.msk [vmem:[%s688] sm:$0xf] %vm681, %v686
          %v691 = vunpack.c.l.b16 %v680
          %v692 = vpack.c.b16 %v691, %v691
          %693 = vrot.lane.b32.xlu0 %v692, 120
          %v694 = vpop.permute.xlu0 %693
          %s696 = scalar_lea.vmem [#allocation3], 4
          %697 = vst.msk [vmem:[%s696] sm:$0xf] %vm681, %v694
          %s698 = scalar_lea.vmem [#allocation2], 8
          %699 = vst.msk [vmem:[%s698] sm:$0xf] %vm681, %v679
          %700 = vrot.lane.b32.xlu0 %v692, 112
          %v701 = vpop.permute.xlu0 %700
          %s703 = scalar_lea.vmem [#allocation3], 8
          %704 = vst.msk [vmem:[%s703] sm:$0xf] %vm681, %v701
          %v706 = vunpack.c.h.b16 %v679
          %v707 = vpack.c.b16 %v706, %v706
          %s709 = scalar_lea.vmem [#allocation2], 12
          %710 = vst.msk [vmem:[%s709] sm:$0xf] %vm681, %v707
          %711 = vrot.lane.b32.xlu0 %v692, 104
          %v712 = vpop.permute.xlu0 %711
          %s714 = scalar_lea.vmem [#allocation3], 12
          %715 = vst.msk [vmem:[%s714] sm:$0xf] %vm681, %v712
        $region96: #{tpu_custom_call.1} parent=55 // pred_fallthru
          _
        %s716 = smul.u32 %s40, 8
        %s717 = sshra.s32 %s716, 3
        %s718 = sand.u32 %s716, 7
        %s719 = smul.addr %s717, 4
        %s720 = scalar_lea.vmem %s436, %s719 [#allocation5]
        %v721 = vld [vmem:[%s720] sm:$0xf]
        %v722 = vld [vmem:[#allocation8] sm:$0xf]
        %v723 = vld [vmem:[#allocation8 + $0x4] sm:$0xf]
        %v724 = vld [vmem:[#allocation8 + $0x8] sm:$0xf]
        %v725 = vld [vmem:[#allocation8 + $0xc] sm:$0xf]
        %v726 = vld [vmem:[#allocation10] sm:$0x1]
        %v728 = vlaneseq
        %v729 = vshrl.u32 %v728, 7
        %v730 = vsub.s32 0, %v729
        %v731 = vrot.slane %v726, %v730
        %v737 = vunpack.c.l.b16 %v722
        %v738 = vunpack.c.l.b16 %v723
        %v739 = vunpack.c.l.b16 %v724
        %v740 = vunpack.c.l.b16 %v725
        %v741 = vpack.c.b16 %v738, %v737
        %v742 = vpack.c.b16 %v740, %v739
        %vm745 = vcmask 261120
        %v747 = vsel %vm745, %v721, 0
        %749 = vmatprep.subr.bf16.mxu0 0
        %750 = vmatpush1.bf16.msra.mxu0 %v741
        %751 = vmatprep.subr.bf16.mxu0 0
        %752 = vmatpush1.bf16.msra.mxu0 %v742
        %753 = vmatprep.subr.bf16.mxu0 0
        %754 = vmatpush1.bf16.msra.mxu0 0
        %755 = vmatprep.subr.bf16.mxu0 0
        %756 = vmatpush1.bf16.msra.mxu0 0
        %757 = vmatprep.subr.bf16.mxu0 0
        %758 = vmatpush1.bf16.msra.mxu0 0
        %759 = vmatprep.subr.bf16.mxu0 0
        %760 = vmatpush1.bf16.msra.mxu0 0
        %761 = vmatprep.subr.bf16.mxu0 0
        %762 = vmatpush1.bf16.msra.mxu0 0
        %763 = vmatprep.subr.bf16.mxu0 0
        %764 = vmatpush1.bf16.msra.mxu0 0
        %765 = vmatprep.subr.bf16.mxu0 0
        %766 = vmatpush1.bf16.msra.mxu0 0
        %767 = vmatprep.subr.bf16.mxu0 0
        %768 = vmatpush1.bf16.msra.mxu0 0
        %769 = vmatprep.subr.bf16.mxu0 0
        %770 = vmatpush1.bf16.msra.mxu0 0
        %771 = vmatprep.subr.bf16.mxu0 0
        %772 = vmatpush1.bf16.msra.mxu0 0
        %773 = vmatprep.subr.bf16.mxu0 0
        %774 = vmatpush1.bf16.msra.mxu0 0
        %775 = vmatprep.subr.bf16.mxu0 0
        %776 = vmatpush1.bf16.msra.mxu0 0
        %777 = vmatprep.subr.bf16.mxu0 0
        %778 = vmatpush1.bf16.msra.mxu0 0
        %779 = vmatprep.subr.bf16.mxu0 0
        %780 = vmatpush1.bf16.msra.mxu0 0
        %781 = vmatprep.mubr.bf16.mxu0 0
        %782 = vmatmul.mubr.bf16.gmra.mrb[0].mxu0 %v747
        %v783 = vpop.f32.mrb[0].mxu0
        %v784 = vadd.f32 %v731, %v783
        %v785 = vpop.f32.mrb[0].mxu0
        %v786 = vpop.f32.mrb[0].mxu0
        %v787 = vpop.f32.mrb[0].mxu0
        %788 = vdwg.mxu0
        %v789 = vpack.c.bf16 %v784, %v784
        %v790 = vld [vmem:[#allocation2] sm:$0xf]
        %vm791 = vcmask 64512
        %v793 = vsel %vm791, %v789, 0
        %vm795 = vcmask 1043456
        %v797 = vsel %vm795, %v790, 0
        %799 = vmatprep.subr.bf16.mxu0 0
        %800 = vmatpush1.bf16.msra.mxu0 %v797
        %801 = vmatprep.subr.bf16.mxu0 0
        %802 = vmatpush1.bf16.msra.mxu0 0
        %803 = vmatprep.subr.bf16.mxu0 0
        %804 = vmatpush1.bf16.msra.mxu0 0
        %805 = vmatprep.subr.bf16.mxu0 0
        %806 = vmatpush1.bf16.msra.mxu0 0
        %807 = vmatprep.subr.bf16.mxu0 0
        %808 = vmatpush1.bf16.msra.mxu0 0
        %809 = vmatprep.subr.bf16.mxu0 0
        %810 = vmatpush1.bf16.msra.mxu0 0
        %811 = vmatprep.subr.bf16.mxu0 0
        %812 = vmatpush1.bf16.msra.mxu0 0
        %813 = vmatprep.subr.bf16.mxu0 0
        %814 = vmatpush1.bf16.msra.mxu0 0
        %815 = vmatprep.subr.bf16.mxu0 0
        %816 = vmatpush1.bf16.msra.mxu0 0
        %817 = vmatprep.subr.bf16.mxu0 0
        %818 = vmatpush1.bf16.msra.mxu0 0
        %819 = vmatprep.subr.bf16.mxu0 0
        %820 = vmatpush1.bf16.msra.mxu0 0
        %821 = vmatprep.subr.bf16.mxu0 0
        %822 = vmatpush1.bf16.msra.mxu0 0
        %823 = vmatprep.subr.bf16.mxu0 0
        %824 = vmatpush1.bf16.msra.mxu0 0
        %825 = vmatprep.subr.bf16.mxu0 0
        %826 = vmatpush1.bf16.msra.mxu0 0
        %827 = vmatprep.subr.bf16.mxu0 0
        %828 = vmatpush1.bf16.msra.mxu0 0
        %829 = vmatprep.subr.bf16.mxu0 0
        %830 = vmatpush1.bf16.msra.mxu0 0
        %831 = vmatprep.mubr.bf16.mxu0 0
        %832 = vmatmul.mubr.bf16.gmra.mrb[0].mxu0 %v793
        %v833 = vpop.f32.mrb[0].mxu0
        %v834 = vadd.f32 0.0, %v833
        %v835 = vpop.f32.mrb[0].mxu0
        %v836 = vpop.f32.mrb[0].mxu0
        %v837 = vpop.f32.mrb[0].mxu0
        %838 = vdwg.mxu0
        %v839 = vmul.f32 %v834, 0.35355338
        %v840 = vsel %vm791, %v839, -inf
        %841 = vmax.xlane.f32.xlu0 %v840
        %v842 = vpop.xlane.xlu0 %841
        %v843 = vsub.f32 %v839, %v842
        %v844 = vmul.f32 %v843, 1.442695
        %v845 = vpow.pop %v844
        %v846 = vsel %vm791, %v845, 0.0
        %847 = vadd.xlane.f32.xlu0 %v846
        %v848 = vpop.xlane.xlu0 %847
        %v849 = vrcp.pop %v848
        %v850 = vmul.f32 %v845, %v849
        %v851 = vpack.c.bf16 %v850, %v850
        %v852 = vld [vmem:[#allocation3] sm:$0xf]
        %v854 = vsel %vm791, %v851, 0
        %v857 = vsel %vm795, %v852, 0
        %859 = vmatprep.subr.bf16.mxu0 0
        %860 = vmatpush1.bf16.msra.mxu0 %v857
        %861 = vmatprep.subr.bf16.mxu0 0
        %862 = vmatpush1.bf16.msra.mxu0 0
        %863 = vmatprep.subr.bf16.mxu0 0
        %864 = vmatpush1.bf16.msra.mxu0 0
        %865 = vmatprep.subr.bf16.mxu0 0
        %866 = vmatpush1.bf16.msra.mxu0 0
        %867 = vmatprep.subr.bf16.mxu0 0
        %868 = vmatpush1.bf16.msra.mxu0 0
        %869 = vmatprep.subr.bf16.mxu0 0
        %870 = vmatpush1.bf16.msra.mxu0 0
        %871 = vmatprep.subr.bf16.mxu0 0
        %872 = vmatpush1.bf16.msra.mxu0 0
        %873 = vmatprep.subr.bf16.mxu0 0
        %874 = vmatpush1.bf16.msra.mxu0 0
        %875 = vmatprep.subr.bf16.mxu0 0
        %876 = vmatpush1.bf16.msra.mxu0 0
        %877 = vmatprep.subr.bf16.mxu0 0
        %878 = vmatpush1.bf16.msra.mxu0 0
        %879 = vmatprep.subr.bf16.mxu0 0
        %880 = vmatpush1.bf16.msra.mxu0 0
        %881 = vmatprep.subr.bf16.mxu0 0
        %882 = vmatpush1.bf16.msra.mxu0 0
        %883 = vmatprep.subr.bf16.mxu0 0
        %884 = vmatpush1.bf16.msra.mxu0 0
        %885 = vmatprep.subr.bf16.mxu0 0
        %886 = vmatpush1.bf16.msra.mxu0 0
        %887 = vmatprep.subr.bf16.mxu0 0
        %888 = vmatpush1.bf16.msra.mxu0 0
        %889 = vmatprep.subr.bf16.mxu0 0
        %890 = vmatpush1.bf16.msra.mxu0 0
        %891 = vmatprep.mubr.bf16.mxu0 0
        %892 = vmatmul.mubr.bf16.gmra.mrb[0].mxu0 %v854
        %v893 = vpop.f32.mrb[0].mxu0
        %v894 = vadd.f32 0.0, %v893
        %v895 = vpop.f32.mrb[0].mxu0
        %v896 = vpop.f32.mrb[0].mxu0
        %v897 = vpop.f32.mrb[0].mxu0
        %898 = vdwg.mxu0
        %899 = vst.msk [vmem:[#allocation4] sm:$0xff] %vm791, %v894
        %s900 = scalar_lea.vmem [#allocation2], 4
        %v901 = vld [vmem:[%s900] sm:$0xf]
        %903 = vrot.lane.b32.xlu0 %v789, 120
        %v904 = vpop.permute.xlu0 %903
        %v906 = vsel %vm791, %v904, 0
        %v909 = vsel %vm795, %v901, 0
        %911 = vmatprep.subr.bf16.mxu0 0
        %912 = vmatpush1.bf16.msra.mxu0 %v909
        %913 = vmatprep.subr.bf16.mxu0 0
        %914 = vmatpush1.bf16.msra.mxu0 0
        %915 = vmatprep.subr.bf16.mxu0 0
        %916 = vmatpush1.bf16.msra.mxu0 0
        %917 = vmatprep.subr.bf16.mxu0 0
        %918 = vmatpush1.bf16.msra.mxu0 0
        %919 = vmatprep.subr.bf16.mxu0 0
        %920 = vmatpush1.bf16.msra.mxu0 0
        %921 = vmatprep.subr.bf16.mxu0 0
        %922 = vmatpush1.bf16.msra.mxu0 0
        %923 = vmatprep.subr.bf16.mxu0 0
        %924 = vmatpush1.bf16.msra.mxu0 0
        %925 = vmatprep.subr.bf16.mxu0 0
        %926 = vmatpush1.bf16.msra.mxu0 0
        %927 = vmatprep.subr.bf16.mxu0 0
        %928 = vmatpush1.bf16.msra.mxu0 0
        %929 = vmatprep.subr.bf16.mxu0 0
        %930 = vmatpush1.bf16.msra.mxu0 0
        %931 = vmatprep.subr.bf16.mxu0 0
        %932 = vmatpush1.bf16.msra.mxu0 0
        %933 = vmatprep.subr.bf16.mxu0 0
        %934 = vmatpush1.bf16.msra.mxu0 0
        %935 = vmatprep.subr.bf16.mxu0 0
        %936 = vmatpush1.bf16.msra.mxu0 0
        %937 = vmatprep.subr.bf16.mxu0 0
        %938 = vmatpush1.bf16.msra.mxu0 0
        %939 = vmatprep.subr.bf16.mxu0 0
        %940 = vmatpush1.bf16.msra.mxu0 0
        %941 = vmatprep.subr.bf16.mxu0 0
        %942 = vmatpush1.bf16.msra.mxu0 0
        %943 = vmatprep.mubr.bf16.mxu0 0
        %944 = vmatmul.mubr.bf16.gmra.mrb[0].mxu0 %v906
        %v945 = vpop.f32.mrb[0].mxu0
        %v946 = vadd.f32 0.0, %v945
        %v947 = vpop.f32.mrb[0].mxu0
        %v948 = vpop.f32.mrb[0].mxu0
        %v949 = vpop.f32.mrb[0].mxu0
        %950 = vdwg.mxu0
        %v951 = vmul.f32 %v946, 0.35355338
        %v952 = vsel %vm791, %v951, -inf
        %953 = vmax.xlane.f32.xlu0 %v952
        %v954 = vpop.xlane.xlu0 %953
        %v955 = vsub.f32 %v951, %v954
        %v956 = vmul.f32 %v955, 1.442695
        %v957 = vpow.pop %v956
        %v958 = vsel %vm791, %v957, 0.0
        %959 = vadd.xlane.f32.xlu0 %v958
        %v960 = vpop.xlane.xlu0 %959
        %v961 = vrcp.pop %v960
        %v962 = vmul.f32 %v957, %v961
        %v963 = vpack.c.bf16 %v962, %v962
        %s964 = scalar_lea.vmem [#allocation3], 4
        %v965 = vld [vmem:[%s964] sm:$0xf]
        %v967 = vsel %vm791, %v963, 0
        %v970 = vsel %vm795, %v965, 0
        %972 = vmatprep.subr.bf16.mxu0 0
        %973 = vmatpush1.bf16.msra.mxu0 %v970
        %974 = vmatprep.subr.bf16.mxu0 0
        %975 = vmatpush1.bf16.msra.mxu0 0
        %976 = vmatprep.subr.bf16.mxu0 0
        %977 = vmatpush1.bf16.msra.mxu0 0
        %978 = vmatprep.subr.bf16.mxu0 0
        %979 = vmatpush1.bf16.msra.mxu0 0
        %980 = vmatprep.subr.bf16.mxu0 0
        %981 = vmatpush1.bf16.msra.mxu0 0
        %982 = vmatprep.subr.bf16.mxu0 0
        %983 = vmatpush1.bf16.msra.mxu0 0
        %984 = vmatprep.subr.bf16.mxu0 0
        %985 = vmatpush1.bf16.msra.mxu0 0
        %986 = vmatprep.subr.bf16.mxu0 0
        %987 = vmatpush1.bf16.msra.mxu0 0
        %988 = vmatprep.subr.bf16.mxu0 0
        %989 = vmatpush1.bf16.msra.mxu0 0
        %990 = vmatprep.subr.bf16.mxu0 0
        %991 = vmatpush1.bf16.msra.mxu0 0
        %992 = vmatprep.subr.bf16.mxu0 0
        %993 = vmatpush1.bf16.msra.mxu0 0
        %994 = vmatprep.subr.bf16.mxu0 0
        %995 = vmatpush1.bf16.msra.mxu0 0
        %996 = vmatprep.subr.bf16.mxu0 0
        %997 = vmatpush1.bf16.msra.mxu0 0
        %998 = vmatprep.subr.bf16.mxu0 0
        %999 = vmatpush1.bf16.msra.mxu0 0
        %1000 = vmatprep.subr.bf16.mxu0 0
        %1001 = vmatpush1.bf16.msra.mxu0 0
        %1002 = vmatprep.subr.bf16.mxu0 0
        %1003 = vmatpush1.bf16.msra.mxu0 0
        %1004 = vmatprep.mubr.bf16.mxu0 0
        %1005 = vmatmul.mubr.bf16.gmra.mrb[0].mxu0 %v967
        %v1006 = vpop.f32.mrb[0].mxu0
        %v1007 = vadd.f32 0.0, %v1006
        %v1008 = vpop.f32.mrb[0].mxu0
        %v1009 = vpop.f32.mrb[0].mxu0
        %v1010 = vpop.f32.mrb[0].mxu0
        %1011 = vdwg.mxu0
        %1013 = vrot.lane.b32.xlu0 %v1007, 8
        %v1014 = vpop.permute.xlu0 %1013
        %vm1016 = vcmask 130112
        %1017 = vst.msk [vmem:[#allocation4] sm:$0xff] %vm1016, %v1014
        %s1018 = scalar_lea.vmem [#allocation2], 8
        %v1019 = vld [vmem:[%s1018] sm:$0xf]
        %1020 = vrot.lane.b32.xlu0 %v789, 112
        %v1021 = vpop.permute.xlu0 %1020
        %v1023 = vsel %vm791, %v1021, 0
        %v1026 = vsel %vm795, %v1019, 0
        %1028 = vmatprep.subr.bf16.mxu0 0
        %1029 = vmatpush1.bf16.msra.mxu0 %v1026
        %1030 = vmatprep.subr.bf16.mxu0 0
        %1031 = vmatpush1.bf16.msra.mxu0 0
        %1032 = vmatprep.subr.bf16.mxu0 0
        %1033 = vmatpush1.bf16.msra.mxu0 0
        %1034 = vmatprep.subr.bf16.mxu0 0
        %1035 = vmatpush1.bf16.msra.mxu0 0
        %1036 = vmatprep.subr.bf16.mxu0 0
        %1037 = vmatpush1.bf16.msra.mxu0 0
        %1038 = vmatprep.subr.bf16.mxu0 0
        %1039 = vmatpush1.bf16.msra.mxu0 0
        %1040 = vmatprep.subr.bf16.mxu0 0
        %1041 = vmatpush1.bf16.msra.mxu0 0
        %1042 = vmatprep.subr.bf16.mxu0 0
        %1043 = vmatpush1.bf16.msra.mxu0 0
        %1044 = vmatprep.subr.bf16.mxu0 0
        %1045 = vmatpush1.bf16.msra.mxu0 0
        %1046 = vmatprep.subr.bf16.mxu0 0
        %1047 = vmatpush1.bf16.msra.mxu0 0
        %1048 = vmatprep.subr.bf16.mxu0 0
        %1049 = vmatpush1.bf16.msra.mxu0 0
        %1050 = vmatprep.subr.bf16.mxu0 0
        %1051 = vmatpush1.bf16.msra.mxu0 0
        %1052 = vmatprep.subr.bf16.mxu0 0
        %1053 = vmatpush1.bf16.msra.mxu0 0
        %1054 = vmatprep.subr.bf16.mxu0 0
        %1055 = vmatpush1.bf16.msra.mxu0 0
        %1056 = vmatprep.subr.bf16.mxu0 0
        %1057 = vmatpush1.bf16.msra.mxu0 0
        %1058 = vmatprep.subr.bf16.mxu0 0
        %1059 = vmatpush1.bf16.msra.mxu0 0
        %1060 = vmatprep.mubr.bf16.mxu0 0
        %1061 = vmatmul.mubr.bf16.gmra.mrb[0].mxu0 %v1023
        %v1062 = vpop.f32.mrb[0].mxu0
        %v1063 = vadd.f32 0.0, %v1062
        %v1064 = vpop.f32.mrb[0].mxu0
        %v1065 = vpop.f32.mrb[0].mxu0
        %v1066 = vpop.f32.mrb[0].mxu0
        %1067 = vdwg.mxu0
        %v1068 = vmul.f32 %v1063, 0.35355338
        %v1069 = vsel %vm791, %v1068, -inf
        %1070 = vmax.xlane.f32.xlu0 %v1069
        %v1071 = vpop.xlane.xlu0 %1070
        %v1072 = vsub.f32 %v1068, %v1071
        %v1073 = vmul.f32 %v1072, 1.442695
        %v1074 = vpow.pop %v1073
        %v1075 = vsel %vm791, %v1074, 0.0
        %1076 = vadd.xlane.f32.xlu0 %v1075
        %v1077 = vpop.xlane.xlu0 %1076
        %v1078 = vrcp.pop %v1077
        %v1079 = vmul.f32 %v1074, %v1078
        %v1080 = vpack.c.bf16 %v1079, %v1079
        %s1081 = scalar_lea.vmem [#allocation3], 8
        %v1082 = vld [vmem:[%s1081] sm:$0xf]
        %v1084 = vsel %vm791, %v1080, 0
        %v1087 = vsel %vm795, %v1082, 0
        %1089 = vmatprep.subr.bf16.mxu0 0
        %1090 = vmatpush1.bf16.msra.mxu0 %v1087
        %1091 = vmatprep.subr.bf16.mxu0 0
        %1092 = vmatpush1.bf16.msra.mxu0 0
        %1093 = vmatprep.subr.bf16.mxu0 0
        %1094 = vmatpush1.bf16.msra.mxu0 0
        %1095 = vmatprep.subr.bf16.mxu0 0
        %1096 = vmatpush1.bf16.msra.mxu0 0
        %1097 = vmatprep.subr.bf16.mxu0 0
        %1098 = vmatpush1.bf16.msra.mxu0 0
        %1099 = vmatprep.subr.bf16.mxu0 0
        %1100 = vmatpush1.bf16.msra.mxu0 0
        %1101 = vmatprep.subr.bf16.mxu0 0
        %1102 = vmatpush1.bf16.msra.mxu0 0
        %1103 = vmatprep.subr.bf16.mxu0 0
        %1104 = vmatpush1.bf16.msra.mxu0 0
        %1105 = vmatprep.subr.bf16.mxu0 0
        %1106 = vmatpush1.bf16.msra.mxu0 0
        %1107 = vmatprep.subr.bf16.mxu0 0
        %1108 = vmatpush1.bf16.msra.mxu0 0
        %1109 = vmatprep.subr.bf16.mxu0 0
        %1110 = vmatpush1.bf16.msra.mxu0 0
        %1111 = vmatprep.subr.bf16.mxu0 0
        %1112 = vmatpush1.bf16.msra.mxu0 0
        %1113 = vmatprep.subr.bf16.mxu0 0
        %1114 = vmatpush1.bf16.msra.mxu0 0
        %1115 = vmatprep.subr.bf16.mxu0 0
        %1116 = vmatpush1.bf16.msra.mxu0 0
        %1117 = vmatprep.subr.bf16.mxu0 0
        %1118 = vmatpush1.bf16.msra.mxu0 0
        %1119 = vmatprep.subr.bf16.mxu0 0
        %1120 = vmatpush1.bf16.msra.mxu0 0
        %1121 = vmatprep.mubr.bf16.mxu0 0
        %1122 = vmatmul.mubr.bf16.gmra.mrb[0].mxu0 %v1084
        %v1123 = vpop.f32.mrb[0].mxu0
        %v1124 = vadd.f32 0.0, %v1123
        %v1125 = vpop.f32.mrb[0].mxu0
        %v1126 = vpop.f32.mrb[0].mxu0
        %v1127 = vpop.f32.mrb[0].mxu0
        %1128 = vdwg.mxu0
        %1130 = vrot.lane.b32.xlu0 %v1124, 16
        %v1131 = vpop.permute.xlu0 %1130
        %vm1133 = vcmask 195712
        %1134 = vst.msk [vmem:[#allocation4] sm:$0xff] %vm1133, %v1131
        %s1135 = scalar_lea.vmem [#allocation2], 12
        %v1136 = vld [vmem:[%s1135] sm:$0xf]
        %1137 = vrot.lane.b32.xlu0 %v789, 104
        %v1138 = vpop.permute.xlu0 %1137
        %v1140 = vsel %vm791, %v1138, 0
        %v1143 = vsel %vm795, %v1136, 0
        %1145 = vmatprep.subr.bf16.mxu0 0
        %1146 = vmatpush1.bf16.msra.mxu0 %v1143
        %1147 = vmatprep.subr.bf16.mxu0 0
        %1148 = vmatpush1.bf16.msra.mxu0 0
        %1149 = vmatprep.subr.bf16.mxu0 0
        %1150 = vmatpush1.bf16.msra.mxu0 0
        %1151 = vmatprep.subr.bf16.mxu0 0
        %1152 = vmatpush1.bf16.msra.mxu0 0
        %1153 = vmatprep.subr.bf16.mxu0 0
        %1154 = vmatpush1.bf16.msra.mxu0 0
        %1155 = vmatprep.subr.bf16.mxu0 0
        %1156 = vmatpush1.bf16.msra.mxu0 0
        %1157 = vmatprep.subr.bf16.mxu0 0
        %1158 = vmatpush1.bf16.msra.mxu0 0
        %1159 = vmatprep.subr.bf16.mxu0 0
        %1160 = vmatpush1.bf16.msra.mxu0 0
        %1161 = vmatprep.subr.bf16.mxu0 0
        %1162 = vmatpush1.bf16.msra.mxu0 0
        %1163 = vmatprep.subr.bf16.mxu0 0
        %1164 = vmatpush1.bf16.msra.mxu0 0
        %1165 = vmatprep.subr.bf16.mxu0 0
        %1166 = vmatpush1.bf16.msra.mxu0 0
        %1167 = vmatprep.subr.bf16.mxu0 0
        %1168 = vmatpush1.bf16.msra.mxu0 0
        %1169 = vmatprep.subr.bf16.mxu0 0
        %1170 = vmatpush1.bf16.msra.mxu0 0
        %1171 = vmatprep.subr.bf16.mxu0 0
        %1172 = vmatpush1.bf16.msra.mxu0 0
        %1173 = vmatprep.subr.bf16.mxu0 0
        %1174 = vmatpush1.bf16.msra.mxu0 0
        %1175 = vmatprep.subr.bf16.mxu0 0
        %1176 = vmatpush1.bf16.msra.mxu0 0
        %1177 = vmatprep.mubr.bf16.mxu0 0
        %1178 = vmatmul.mubr.bf16.gmra.mrb[0].mxu0 %v1140
        %v1179 = vpop.f32.mrb[0].mxu0
        %v1180 = vadd.f32 0.0, %v1179
        %v1181 = vpop.f32.mrb[0].mxu0
        %v1182 = vpop.f32.mrb[0].mxu0
        %v1183 = vpop.f32.mrb[0].mxu0
        %1184 = vdwg.mxu0
        %v1185 = vmul.f32 %v1180, 0.35355338
        %v1186 = vsel %vm791, %v1185, -inf
        %1187 = vmax.xlane.f32.xlu0 %v1186
        %v1188 = vpop.xlane.xlu0 %1187
        %v1189 = vsub.f32 %v1185, %v1188
        %v1190 = vmul.f32 %v1189, 1.442695
        %v1191 = vpow.pop %v1190
        %v1192 = vsel %vm791, %v1191, 0.0
        %1193 = vadd.xlane.f32.xlu0 %v1192
        %v1194 = vpop.xlane.xlu0 %1193
        %v1195 = vrcp.pop %v1194
        %v1196 = vmul.f32 %v1191, %v1195
        %v1197 = vpack.c.bf16 %v1196, %v1196
        %s1198 = scalar_lea.vmem [#allocation3], 12
        %v1199 = vld [vmem:[%s1198] sm:$0xf]
        %v1201 = vsel %vm791, %v1197, 0
        %v1204 = vsel %vm795, %v1199, 0
        %1206 = vmatprep.subr.bf16.mxu0 0
        %1207 = vmatpush1.bf16.msra.mxu0 %v1204
        %1208 = vmatprep.subr.bf16.mxu0 0
        %1209 = vmatpush1.bf16.msra.mxu0 0
        %1210 = vmatprep.subr.bf16.mxu0 0
        %1211 = vmatpush1.bf16.msra.mxu0 0
        %1212 = vmatprep.subr.bf16.mxu0 0
        %1213 = vmatpush1.bf16.msra.mxu0 0
        %1214 = vmatprep.subr.bf16.mxu0 0
        %1215 = vmatpush1.bf16.msra.mxu0 0
        %1216 = vmatprep.subr.bf16.mxu0 0
        %1217 = vmatpush1.bf16.msra.mxu0 0
        %1218 = vmatprep.subr.bf16.mxu0 0
        %1219 = vmatpush1.bf16.msra.mxu0 0
        %1220 = vmatprep.subr.bf16.mxu0 0
        %1221 = vmatpush1.bf16.msra.mxu0 0
        %1222 = vmatprep.subr.bf16.mxu0 0
        %1223 = vmatpush1.bf16.msra.mxu0 0
        %1224 = vmatprep.subr.bf16.mxu0 0
        %1225 = vmatpush1.bf16.msra.mxu0 0
        %1226 = vmatprep.subr.bf16.mxu0 0
        %1227 = vmatpush1.bf16.msra.mxu0 0
        %1228 = vmatprep.subr.bf16.mxu0 0
        %1229 = vmatpush1.bf16.msra.mxu0 0
        %1230 = vmatprep.subr.bf16.mxu0 0
        %1231 = vmatpush1.bf16.msra.mxu0 0
        %1232 = vmatprep.subr.bf16.mxu0 0
        %1233 = vmatpush1.bf16.msra.mxu0 0
        %1234 = vmatprep.subr.bf16.mxu0 0
        %1235 = vmatpush1.bf16.msra.mxu0 0
        %1236 = vmatprep.subr.bf16.mxu0 0
        %1237 = vmatpush1.bf16.msra.mxu0 0
        %1238 = vmatprep.mubr.bf16.mxu0 0
        %1239 = vmatmul.mubr.bf16.gmra.mrb[0].mxu0 %v1201
        %v1240 = vpop.f32.mrb[0].mxu0
        %v1241 = vadd.f32 0.0, %v1240
        %v1242 = vpop.f32.mrb[0].mxu0
        %v1243 = vpop.f32.mrb[0].mxu0
        %v1244 = vpop.f32.mrb[0].mxu0
        %1245 = vdwg.mxu0
        %1247 = vrot.lane.b32.xlu0 %v1241, 24
        %v1248 = vpop.permute.xlu0 %1247
        %vm1250 = vcmask 261312
        %1251 = vst.msk [vmem:[#allocation4] sm:$0xff] %vm1250, %v1248
        %v1252 = vld [vmem:[#allocation4] sm:$0xff]
        %1253 = vst.msk [vmem:[%s502] sm:$0xff] %vm745, %v1252
        %v1254 = vpack.c.bf16 %v1252, %v1252
        %v1255 = vld [vmem:[#allocation17] sm:$0xf]
        %v1256 = vld [vmem:[#allocation17 + $0x4] sm:$0xf]
        %v1257 = vld [vmem:[#allocation17 + $0x8] sm:$0xf]
        %v1258 = vld [vmem:[#allocation17 + $0xc] sm:$0xf]
        %v1259 = vld [vmem:[#allocation19] sm:$0x1]
        %v1261 = vlaneseq
        %v1262 = vshrl.u32 %v1261, 7
        %v1263 = vsub.s32 0, %v1262
        %v1264 = vrot.slane %v1259, %v1263
        %v1270 = vunpack.c.l.b16 %v1255
        %v1271 = vunpack.c.l.b16 %v1256
        %v1272 = vunpack.c.l.b16 %v1257
        %v1273 = vunpack.c.l.b16 %v1258
        %v1274 = vpack.c.b16 %v1271, %v1270
        %v1275 = vpack.c.b16 %v1273, %v1272
        %v1279 = vsel %vm745, %v1254, 0
        %1281 = vmatprep.subr.bf16.mxu0 0
        %1282 = vmatpush1.bf16.msra.mxu0 %v1274
        %1283 = vmatprep.subr.bf16.mxu0 0
        %1284 = vmatpush1.bf16.msra.mxu0 %v1275
        %1285 = vmatprep.subr.bf16.mxu0 0
        %1286 = vmatpush1.bf16.msra.mxu0 0
        %1287 = vmatprep.subr.bf16.mxu0 0
        %1288 = vmatpush1.bf16.msra.mxu0 0
        %1289 = vmatprep.subr.bf16.mxu0 0
        %1290 = vmatpush1.bf16.msra.mxu0 0
        %1291 = vmatprep.subr.bf16.mxu0 0
        %1292 = vmatpush1.bf16.msra.mxu0 0
        %1293 = vmatprep.subr.bf16.mxu0 0
        %1294 = vmatpush1.bf16.msra.mxu0 0
        %1295 = vmatprep.subr.bf16.mxu0 0
        %1296 = vmatpush1.bf16.msra.mxu0 0
        %1297 = vmatprep.subr.bf16.mxu0 0
        %1298 = vmatpush1.bf16.msra.mxu0 0
        %1299 = vmatprep.subr.bf16.mxu0 0
        %1300 = vmatpush1.bf16.msra.mxu0 0
        %1301 = vmatprep.subr.bf16.mxu0 0
        %1302 = vmatpush1.bf16.msra.mxu0 0
        %1303 = vmatprep.subr.bf16.mxu0 0
        %1304 = vmatpush1.bf16.msra.mxu0 0
        %1305 = vmatprep.subr.bf16.mxu0 0
        %1306 = vmatpush1.bf16.msra.mxu0 0
        %1307 = vmatprep.subr.bf16.mxu0 0
        %1308 = vmatpush1.bf16.msra.mxu0 0
        %1309 = vmatprep.subr.bf16.mxu0 0
        %1310 = vmatpush1.bf16.msra.mxu0 0
        %1311 = vmatprep.subr.bf16.mxu0 0
        %1312 = vmatpush1.bf16.msra.mxu0 0
        %1313 = vmatprep.mubr.bf16.mxu0 0
        %1314 = vmatmul.mubr.bf16.gmra.mrb[0].mxu0 %v1279
        %v1315 = vpop.f32.mrb[0].mxu0
        %v1316 = vadd.f32 %v1264, %v1315
        %v1317 = vpop.f32.mrb[0].mxu0
        %v1318 = vpop.f32.mrb[0].mxu0
        %v1319 = vpop.f32.mrb[0].mxu0
        %1320 = vdwg.mxu0
        %1321 = vst.msk [vmem:[%s509] sm:$0xff] %vm745, %v1316
        %s1322 = sand.u32 %s251, 1
        %s1323 = scalar_lea.sflag [#allocation7], %s1322
        %s1324 = sand.u32 %s251, 1
        %s1325 = smul.addr %s1324, 8
        %s1326 = scalar_lea.vmem [#allocation20], %s1325
        %s1327 = sand.u32 %s279, 1
        %s1328 = scalar_lea.sflag [#allocation22], %s1327
        %s1329 = sand.u32 %s279, 1
        %s1330 = smul.addr %s1329, 8
        %s1331 = scalar_lea.vmem [#allocation21], %s1330
        // Predicated region
        $region97: #{tpu_custom_call.1} parent=55 // pred_check
          %p1332 = pneg %p261
        $region98: #{tpu_custom_call.1} parent=55 // pred_check_branch
          %1334 = sbr.rel (%p1332) target = $region100
        $region99: #{tpu_custom_call.1} parent=55 // pred_region
          %s1336 = ssub.s32 128, 128
          %1337 = vsyncadd %s1323, %s1336
          %s1338 = sadd.s32 %s40, %s39
          %s1339 = smul.addr %s1338, 128
          %s1340 = scalar_lea.hbm %s9, %s1339
          %s1342 = sshll.u32 %s1326, 4
          %s1343 = int_to_ptr.vmem [resolvable:$true] %s1342
          %1345 = dma.vmem_to_hbm [thread:$0]  %s1343, 128, %s1340, %s1323
        $region100: #{tpu_custom_call.1} parent=55 // pred_fallthru
          _
        // Predicated region
        $region101: #{tpu_custom_call.1} parent=55 // pred_check
          %p1346 = pneg %p289
        $region102: #{tpu_custom_call.1} parent=55 // pred_check_branch
          %1348 = sbr.rel (%p1346) target = $region104
        $region103: #{tpu_custom_call.1} parent=55 // pred_region
          %s1350 = ssub.s32 128, 128
          %1351 = vsyncadd %s1328, %s1350
          %s1352 = sadd.s32 %s40, %s39
          %s1353 = smul.addr %s1352, 128
          %s1354 = scalar_lea.hbm %s10, %s1353
          %s1356 = sshll.u32 %s1331, 4
          %s1357 = int_to_ptr.vmem [resolvable:$true] %s1356
          %1359 = dma.vmem_to_hbm [thread:$0]  %s1357, 128, %s1354, %s1328
        $region104: #{tpu_custom_call.1} parent=55 // pred_fallthru
          _
      $region56: #{tpu_custom_call.1} parent=5 // pred_fallthru
        _
      %p1360 = scmp.le.s32.totalorder 2, %s30
      // Predicated region
      $region105: #{tpu_custom_call.1} parent=5 // pred_check
        %p1361 = pneg %p1360
      $region106: #{tpu_custom_call.1} parent=5 // pred_check_branch
        %1363 = sbr.rel (%p1361) target = $region108
      $region107: #{tpu_custom_call.1} parent=5 // pred_region
        %s1364 = ssub.s32 %s30, 2
        // Predicated region
        $region109: #{tpu_custom_call.1} parent=107 // pred_check
          %p1365 = pneg %p267
        $region110: #{tpu_custom_call.1} parent=107 // pred_check_branch
          %1367 = sbr.rel (%p1365) target = $region112
        $region111: #{tpu_custom_call.1} parent=107 // pred_region
          %s1368 = sand.u32 %s252, 1
          %s1369 = scalar_lea.sflag [#allocation7], %s1368
          %s1370 = sand.u32 %s252, 1
          %s1371 = smul.addr %s1370, 8
          %s1372 = scalar_lea.vmem [#allocation20], %s1371
          %1373 = dma.done %s1369, 128
        $region112: #{tpu_custom_call.1} parent=107 // pred_fallthru
          _
        // Predicated region
        $region113: #{tpu_custom_call.1} parent=107 // pred_check
          %p1374 = pneg %p295
        $region114: #{tpu_custom_call.1} parent=107 // pred_check_branch
          %1376 = sbr.rel (%p1374) target = $region116
        $region115: #{tpu_custom_call.1} parent=107 // pred_region
          %s1377 = sand.u32 %s280, 1
          %s1378 = scalar_lea.sflag [#allocation22], %s1377
          %s1379 = sand.u32 %s280, 1
          %s1380 = smul.addr %s1379, 8
          %s1381 = scalar_lea.vmem [#allocation21], %s1380
          %1382 = dma.done %s1378, 128
        $region116: #{tpu_custom_call.1} parent=107 // pred_fallthru
          _
      $region108: #{tpu_custom_call.1} parent=5 // pred_fallthru
        _
    $region6: #{tpu_custom_call.1} parent=1 // loop_footer
      %s34 = sadd.s32 1, %s30
    $region7: #{tpu_custom_call.1} parent=1 // loop_footer_branch
      %29 = sbr.rel target = $region3
    $region8: #{tpu_custom_call.1} parent=1 // loop_exit
      _
    %1383 = vsyncpa [#allocation6], 1
    %s1384 = scalar_lea.sflag [#allocation6], 1
    %1385 = vsyncpa %s1384, 1
    %1386 = vsyncpa [#allocation9], 1
    %1387 = vsyncpa [#allocation12], 1
    %1388 = vsyncpa [#allocation15], 1
    %1389 = vsyncpa [#allocation18], 1
    %1390 = vsyncpa [#allocation7], 1
    %s1391 = scalar_lea.sflag [#allocation7], 1
    %1392 = vsyncpa %s1391, 1
    %1393 = vsyncpa [#allocation22], 1
    %s1394 = scalar_lea.sflag [#allocation22], 1
    %1395 = vsyncpa %s1394, 1

</llo_original>
